<compile_context>
chip_gen: v5e
topology: v5e:2x2
jax: 0.10.0
libtpu: 0.0.40
codegen_flags: <defaults>
</compile_context>

<pallas_src>
import functools

import jax
import jax.numpy as jnp
from jax.experimental import pallas as pl
from jax.experimental.pallas import tpu as pltpu


def _round_up(x, m):
    return ((x + m - 1) // m) * m


def _cdiv(a, b):
    return -(-a // b)


# ---------------------------------------------------------------------------
# Per-generation tiling / VMEM configuration
# ---------------------------------------------------------------------------
def device_config():
    try:
        kind = jax.devices()[0].device_kind.lower()
    except Exception:
        kind = ""
    if ("v5 lite" in kind) or ("v5e" in kind) or ("v5litepod" in kind):
        # v5e: 4x128^2 MXU, 16 MiB scoped-VMEM default -> narrow tiles, explicit limit.
        return {"name": "v5e", "tm_cap": 256, "tn_cap": 128, "tk_cap": 512,
                "vmem": 32 * 1024 * 1024, "split_cores": False}
    if "v7" in kind:
        # v7x: 2 TensorCores / 64 MiB VMEM -> ensure >=2 parallel tiles, cap VMEM.
        return {"name": "v7x", "tm_cap": 512, "tn_cap": 256, "tk_cap": 1536,
                "vmem": 48 * 1024 * 1024, "split_cores": True}
    # v6e-like default (also fine for v4 / v5p).
    return {"name": "v6e", "tm_cap": 512, "tn_cap": 256, "tk_cap": 1536,
            "vmem": 64 * 1024 * 1024, "split_cores": False}


def _pick_tiles(M, K, Np, cfg, single_n_tile):
    """Tile sizes with no K padding waste (tk divides round_up(K,128))."""
    Kp = _round_up(K, 128)
    tk = 128
    for cand in range(128, min(Kp, cfg["tk_cap"]) + 1, 128):
        if Kp % cand == 0:
            tk = cand
    if single_n_tile:
        tn = Np
    else:
        tn = min(cfg["tn_cap"], Np)
        if Np % tn:
            tn = 128
    tm = min(cfg["tm_cap"], _round_up(M, 8))
    Mp = _round_up(M, tm)
    # v7x: split M so both TensorCores get a parallel tile when the grid is (1,1).
    if cfg["split_cores"] and not single_n_tile and (Mp // tm) * (Np // tn) < 2:
        if M >= 16:
            tm = _round_up(max(tm // 2, 8), 8)
            Mp = _round_up(M, tm)
        elif tn > 128:
            tn = 128
    return tm, tn, tk, Mp, Kp


# ---------------------------------------------------------------------------
# Pallas kernel 1: tiled matmul + bias + activation (bf16 MXU, f32 accumulate)
#                  optionally fusing per-column BN statistics in the epilogue.
# ---------------------------------------------------------------------------
def _matmul_kernel(a_ref, w_ref, b_ref, *refs, act, with_stats):
    if with_stats:
        o_ref, sum_ref, sq_ref, acc_ref = refs
    else:
        o_ref, acc_ref = refs
        sum_ref = sq_ref = None

    i = pl.program_id(0)
    k = pl.program_id(2)

    @pl.when(k == 0)
    def _():
        acc_ref[...] = jnp.zeros_like(acc_ref)

    if with_stats:
        @pl.when((k == 0) & (i == 0))
        def _():
            sum_ref[...] = jnp.zeros_like(sum_ref)
            sq_ref[...] = jnp.zeros_like(sq_ref)

    acc_ref[...] += jnp.dot(a_ref[...], w_ref[...],
                            preferred_element_type=jnp.float32)

    @pl.when(k == pl.num_programs(2) - 1)
    def _():
        out = acc_ref[...] + b_ref[...]          # (1, tn) broadcast, f32 epilogue
        if act == "leaky_relu":
            out = jnp.where(out >= 0, out, 0.2 * out)
        elif act == "relu":
            out = jnp.maximum(out, 0.0)
        elif act == "tanh":
            out = jnp.tanh(out)
        elif act != "none":
            raise ValueError(f"unknown activation {act}")
        o_ref[...] = out.astype(o_ref.dtype)
        if with_stats:
            # Resident (1, tn) accumulators: per-channel sum / sum-of-squares.
            # (Padded rows are exactly zero because the bias is zero here.)
            sum_ref[...] += jnp.sum(out, axis=0, keepdims=True)
            sq_ref[...] += jnp.sum(out * out, axis=0, keepdims=True)


def matmul_bias_act(a, w_p, b_p, n_valid, act, cfg, compute_stats=False,
                    out_dtype=jnp.bfloat16):
    """act(a @ W + b) with pre-packed bf16 W (Kp, Np) and f32 bias (1, Np).

    Returns (M, n_valid) in out_dtype.  With compute_stats=True (requires
    act='none' and an all-zero packed bias) also returns per-column
    (sum, sum_of_squares) over the M rows, accumulated inside the kernel.
    """
    M, K = a.shape
    Kp_w, Np = w_p.shape
    assert Kp_w == _round_up(K, 128)
    tm, tn, tk, Mp, Kp = _pick_tiles(M, K, Np, cfg, single_n_tile=compute_stats)
    if compute_stats:
        assert act == "none" and tn == Np

    a_p = jnp.pad(a.astype(jnp.bfloat16), ((0, Mp - M), (0, Kp - K)))
    grid = (Mp // tm, Np // tn, Kp // tk)

    in_specs = [
        pl.BlockSpec((tm, tk), lambda i, j, k: (i, k)),
        pl.BlockSpec((tk, tn), lambda i, j, k: (k, j)),
        pl.BlockSpec((1, tn), lambda i, j, k: (0, j)),
    ]
    if compute_stats:
        out_shape = (jax.ShapeDtypeStruct((Mp, Np), out_dtype),
                     jax.ShapeDtypeStruct((1, Np), jnp.float32),
                     jax.ShapeDtypeStruct((1, Np), jnp.float32))
        out_specs = (pl.BlockSpec((tm, tn), lambda i, j, k: (i, j)),
                     pl.BlockSpec((1, tn), lambda i, j, k: (0, 0)),
                     pl.BlockSpec((1, tn), lambda i, j, k: (0, 0)))
        dims = ("arbitrary", "arbitrary", "arbitrary")   # stats accumulate over i
    else:
        out_shape = jax.ShapeDtypeStruct((Mp, Np), out_dtype)
        out_specs = pl.BlockSpec((tm, tn), lambda i, j, k: (i, j))
        dims = ("parallel", "parallel", "arbitrary")

    res = pl.pallas_call(
        functools.partial(_matmul_kernel, act=act, with_stats=compute_stats),
        out_shape=out_shape,
        grid=grid,
        in_specs=in_specs,
        out_specs=out_specs,
        scratch_shapes=[pltpu.VMEM((tm, tn), jnp.float32)],
        compiler_params=pltpu.CompilerParams(
            dimension_semantics=dims, vmem_limit_bytes=cfg["vmem"]),
    )(a_p, w_p, b_p)

    if compute_stats:
        out, s, ss = res
        return out[:M, :n_valid], (s[:, :n_valid], ss[:, :n_valid])
    return res[:M, :n_valid]


# ---------------------------------------------------------------------------
# Pallas kernel 2: BatchNorm apply (x*scale + shift) + LeakyReLU(0.2)
#   scale/shift are pre-computed once per channel (no per-tile rsqrt).
# ---------------------------------------------------------------------------
def _bn_apply_kernel(x_ref, sc_ref, sh_ref, o_ref):
    y = x_ref[...].astype(jnp.float32) * sc_ref[...] + sh_ref[...]
    o_ref[...] = jnp.where(y >= 0, y, 0.2 * y).astype(o_ref.dtype)


def batchnorm_apply_leakyrelu(x, scale, shift, cfg):
    M, C = x.shape
    Cp = _round_up(C, 128)
    tm = min(cfg["tm_cap"], _round_up(M, 8))
    Mp = _round_up(M, tm)

    x_p = jnp.pad(x.astype(jnp.bfloat16), ((0, Mp - M), (0, Cp - C)))
    sc = jnp.pad(scale.reshape(1, C).astype(jnp.float32), ((0, 0), (0, Cp - C)))
    sh = jnp.pad(shift.reshape(1, C).astype(jnp.float32), ((0, 0), (0, Cp - C)))

    out = pl.pallas_call(
        _bn_apply_kernel,
        out_shape=jax.ShapeDtypeStruct((Mp, Cp), jnp.bfloat16),
        grid=(Mp // tm,),
        in_specs=[
            pl.BlockSpec((tm, Cp), lambda i: (i, 0)),
            pl.BlockSpec((1, Cp), lambda i: (0, 0)),
            pl.BlockSpec((1, Cp), lambda i: (0, 0)),
        ],
        out_specs=pl.BlockSpec((tm, Cp), lambda i: (i, 0)),
        compiler_params=pltpu.CompilerParams(
            dimension_semantics=("parallel",), vmem_limit_bytes=cfg["vmem"]),
    )(x_p, sc, sh)
    return out[:M, :C]


# ---------------------------------------------------------------------------
# Pallas kernel 3: fused ConvTranspose2d(k=4, stride=2, pad=1)
#   Sub-pixel decomposition: 3x3 stride-1 taps read as row shifts of the
#   flattened padded image (im2col fused, no (M, 9C) HBM materialization).
# ---------------------------------------------------------------------------
def _deconv_kernel(x_ref, w_ref, b_ref, o_ref, *, c_in, wpad, mq, act):
    np_out = o_ref.shape[-1]
    acc = jnp.zeros((mq, np_out), jnp.float32)
    for dh in range(3):
        for dw in range(3):
            t = dh * 3 + dw
            a = x_ref[pl.ds(dh * wpad + dw, mq), :]          # (mq, c_in) bf16
            wt = w_ref[pl.ds(t * c_in, c_in), :]              # (c_in, np_out) bf16
            acc = acc + jnp.dot(a, wt, preferred_element_type=jnp.float32)
    acc = acc + b_ref[...]
    if act == "relu":
        acc = jnp.maximum(acc, 0.0)
    elif act == "tanh":
        acc = jnp.tanh(acc)
    elif act != "none":
        raise ValueError(f"unknown activation {act}")
    o_ref[...] = acc.astype(o_ref.dtype)


def conv_transpose2d(x_nhwc, w_p, b_p, c_out, act, cfg):
    """PyTorch-equivalent ConvTranspose2d(4, stride=2, padding=1), NHWC, bf16 out."""
    n, h, w, c = x_nhwc.shape
    wpad = w + 2
    mq = _round_up(h * wpad, 8)
    hpad = max(h + 2, _cdiv(mq + 2 * wpad + 2, wpad))         # shift slack stays in-batch
    K9, Np = w_p.shape
    assert K9 == 9 * c

    xp = jnp.pad(x_nhwc.astype(jnp.bfloat16),
                 ((0, 0), (1, hpad - h - 1), (1, 1), (0, 0)))
    xf = xp.reshape(n, hpad * wpad, c)

    out = pl.pallas_call(
        functools.partial(_deconv_kernel, c_in=c, wpad=wpad, mq=mq, act=act),
        out_shape=jax.ShapeDtypeStruct((n, mq, Np), jnp.bfloat16),
        grid=(n,),
        in_specs=[
            pl.BlockSpec((None, hpad * wpad, c), lambda b: (b, 0, 0)),
            pl.BlockSpec((K9, Np), lambda b: (0, 0)),
            pl.BlockSpec((1, Np), lambda b: (0, 0)),
        ],
        out_specs=pl.BlockSpec((None, mq, Np), lambda b: (b, 0, 0)),
        compiler_params=pltpu.CompilerParams(
            dimension_semantics=("parallel",), vmem_limit_bytes=cfg["vmem"]),
    )(xf, w_p, b_p)

    # 2x2 sub-pixel interleave of the 4 phase column groups, all in bf16.
    p = out[:, :h * wpad, :4 * c_out].reshape(n, h, wpad, 2, 2, c_out)[:, :, :w]
    p = jnp.transpose(p, (0, 1, 3, 2, 4, 5)).reshape(n, 2 * h, 2 * w, c_out)
    return p


# ---------------------------------------------------------------------------
# XLA glue: im2col for the stride-2 encoder convs (bf16)
# ---------------------------------------------------------------------------
def _im2col(x_nhwc, k, stride, pad):
    """x: (N,H,W,C) -> A: (N*Ho*Wo, k*k*C), patch order (kh, kw, C). bf16."""
    n, h, w, c = x_nhwc.shape
    xp = jnp.pad(x_nhwc.astype(jnp.bfloat16),
                 ((0, 0), (pad, pad), (pad, pad), (0, 0)))
    ho = (h + 2 * pad - k) // stride + 1
    wo = (w + 2 * pad - k) // stride + 1
    cols = []
    for kh in range(k):
        for kw in range(k):
            cols.append(xp[:, kh:kh + stride * ho:stride, kw:kw + stride * wo:stride, :])
    patches = jnp.concatenate(cols, axis=-1)                  # (N, Ho, Wo, k*k*C)
    return patches.reshape(n * ho * wo, k * k * c), (n, ho, wo)


# ---------------------------------------------------------------------------
# One-time weight packing (transpose/reshape/phase-scatter/cast/pad)
# ---------------------------------------------------------------------------
def _deconv_phase_weight(w_iohw):
    """(C_in, C_out, 4, 4) ConvTranspose weight (stride=2, pad=1) ->
    (9*C_in, 4*C_out) matrix for a 3x3 stride-1 im2col of the un-dilated input;
    output column index = (rh*2 + rw)*C_out + co."""
    c_in, c_out, k, _ = w_iohw.shape
    assert k == 4
    wp = jnp.zeros((3, 3, c_in, 2, 2, c_out), w_iohw.dtype)
    # output sub-pixel phase r, patch offset d (input row y-1+dh) -> kernel tap:
    #   r=0: dh=0 -> k=3, dh=1 -> k=1    r=1: dh=1 -> k=2, dh=2 -> k=0
    taps = {0: {0: 3, 1: 1}, 1: {1: 2, 2: 0}}
    for rh, rows in taps.items():
        for dh, kh in rows.items():
            for rw, cols in taps.items():
                for dw, kw in cols.items():
                    wp = wp.at[dh, dw, :, rh, rw, :].set(w_iohw[:, :, kh, kw])
    return wp.reshape(9 * c_in, 4 * c_out)


def pack_params(params):
    def pack_conv(w_oihw, bias):
        c_out, c_in, k, _ = w_oihw.shape
        wm = jnp.transpose(w_oihw, (2, 3, 1, 0)).reshape(k * k * c_in, c_out)
        K, N = wm.shape
        Kp, Np = _round_up(K, 128), _round_up(N, 128)
        w_p = jnp.pad(wm.astype(jnp.bfloat16), ((0, Kp - K), (0, Np - N)))
        if bias is None:
            b_p = jnp.zeros((1, Np), jnp.float32)
        else:
            b_p = jnp.pad(bias.reshape(1, N).astype(jnp.float32),
                          ((0, 0), (0, Np - N)))
        return w_p, b_p

    def pack_deconv(w_iohw, bias):
        c_out = w_iohw.shape[1]
        wm = _deconv_phase_weight(w_iohw)                     # (9*c_in, 4*c_out)
        K, N = wm.shape
        Np = _round_up(N, 128)
        w_p = jnp.pad(wm.astype(jnp.bfloat16), ((0, 0), (0, Np - N)))
        b_p = jnp.pad(jnp.tile(bias, 4).reshape(1, N).astype(jnp.float32),
                      ((0, 0), (0, Np - N)))
        return w_p, b_p

    packed = {}
    packed["enc1_w"], packed["enc1_b"] = pack_conv(params["enc1_w"], params["enc1_b"])
    # enc2 bias is exactly cancelled by the training-mode BatchNorm that follows
    # (batch-mean subtraction removes any per-channel constant), so it is dropped.
    packed["enc2_w"], packed["enc2_b"] = pack_conv(params["enc2_w"], None)
    packed["dec1_w"], packed["dec1_b"] = pack_deconv(params["dec1_w"], params["dec1_b"])
    packed["dec2_w"], packed["dec2_b"] = pack_deconv(params["dec2_w"], params["dec2_b"])
    packed["bn_gamma"] = params["bn_gamma"].astype(jnp.float32)
    packed["bn_beta"] = params["bn_beta"].astype(jnp.float32)
    return packed


# ---------------------------------------------------------------------------
# Parameter init (PyTorch-like uniform(-1/sqrt(fan_in), 1/sqrt(fan_in)))
# ---------------------------------------------------------------------------
def init_params(key, in_channels=3, out_channels=3):
    k1, k2, k3, k4 = jax.random.split(key, 4)
    p = {}
    b1 = 1.0 / jnp.sqrt(in_channels * 16.0)
    p["enc1_w"] = jax.random.uniform(k1, (64, in_channels, 4, 4), jnp.float32, -b1, b1)
    p["enc1_b"] = jax.random.uniform(jax.random.fold_in(k1, 1), (64,), jnp.float32, -b1, b1)
    b2 = 1.0 / jnp.sqrt(64 * 16.0)
    p["enc2_w"] = jax.random.uniform(k2, (128, 64, 4, 4), jnp.float32, -b2, b2)
    p["enc2_b"] = jax.random.uniform(jax.random.fold_in(k2, 1), (128,), jnp.float32, -b2, b2)
    p["bn_gamma"] = jnp.ones((128,), jnp.float32)
    p["bn_beta"] = jnp.zeros((128,), jnp.float32)
    b3 = 1.0 / jnp.sqrt(128 * 16.0)
    p["dec1_w"] = jax.random.uniform(k3, (128, 64, 4, 4), jnp.float32, -b3, b3)
    p["dec1_b"] = jax.random.uniform(jax.random.fold_in(k3, 1), (64,), jnp.float32, -b3, b3)
    b4 = 1.0 / jnp.sqrt(64 * 16.0)
    p["dec2_w"] = jax.random.uniform(k4, (64, out_channels, 4, 4), jnp.float32, -b4, b4)
    p["dec2_b"] = jax.random.uniform(jax.random.fold_in(k4, 1), (out_channels,), jnp.float32, -b4, b4)
    return p


# ---------------------------------------------------------------------------
# Full forward pass (Pallas)
# ---------------------------------------------------------------------------
def unet_generator_forward(packed, x_nchw, cfg, out_channels=3):
    x = jnp.transpose(x_nchw, (0, 2, 3, 1))                    # NCHW -> NHWC

    # --- encoder ---
    # enc1: Conv2d(in,64,4,2,1) + LeakyReLU(0.2), fused in the matmul epilogue.
    a1, (n1, h1, w1) = _im2col(x, 4, 2, 1)
    h = matmul_bias_act(a1, packed["enc1_w"], packed["enc1_b"], 64,
                        "leaky_relu", cfg)
    h = h.reshape(n1, h1, w1, 64)

    # enc2: Conv2d(64,128,4,2,1); BN statistics fused into the same kernel.
    a2, (n2, h2, w2) = _im2col(h, 4, 2, 1)
    y, (s, ss) = matmul_bias_act(a2, packed["enc2_w"], packed["enc2_b"], 128,
                                 "none", cfg, compute_stats=True)

    # BatchNorm2d(128), training mode (biased variance) + LeakyReLU(0.2).
    # Per-channel scale/shift computed once on a 128-vector (hoisted out of the
    # per-tile apply).  E[x^2]-E[x]^2 in f32 is fine at these scales.
    count = float(n2 * h2 * w2)
    mean = s[0] / count
    var = ss[0] / count - mean * mean
    scale = packed["bn_gamma"] * jax.lax.rsqrt(var + 1e-5)
    shift = packed["bn_beta"] - mean * scale
    h = batchnorm_apply_leakyrelu(y, scale, shift, cfg)
    h = h.reshape(n2, h2, w2, 128)

    # --- decoder ---
    h = conv_transpose2d(h, packed["dec1_w"], packed["dec1_b"], 64, "relu", cfg)
    h = conv_transpose2d(h, packed["dec2_w"], packed["dec2_b"], out_channels,
                         "tanh", cfg)

    return jnp.transpose(h, (0, 3, 1, 2)).astype(jnp.float32)  # NHWC -> NCHW


# ---------------------------------------------------------------------------
# Pure-JAX reference (f32, lax convs) for a numerical sanity check
# ---------------------------------------------------------------------------
def reference_forward(params, x_nchw):
    dn = ("NHWC", "HWIO", "NHWC")
    x = jnp.transpose(x_nchw, (0, 2, 3, 1)).astype(jnp.float32)

    def conv(x, w_oihw, b, stride, pad):
        w = jnp.transpose(w_oihw, (2, 3, 1, 0))
        y = jax.lax.conv_general_dilated(x, w, (stride, stride),
                                         ((pad, pad), (pad, pad)),
                                         dimension_numbers=dn)
        return y + b.reshape(1, 1, 1, -1)

    def deconv(x, w_iohw, b, stride, pad):
        k = w_iohw.shape[2]
        w = jnp.transpose(w_iohw[:, :, ::-1, ::-1], (2, 3, 0, 1))
        q = k - 1 - pad
        y = jax.lax.conv_general_dilated(x, w, (1, 1), ((q, q), (q, q)),
                                         lhs_dilation=(stride, stride),
                                         dimension_numbers=dn)
        return y + b.reshape(1, 1, 1, -1)

    h = conv(x, params["enc1_w"], params["enc1_b"], 2, 1)
    h = jnp.where(h >= 0, h, 0.2 * h)
    h = conv(h, params["enc2_w"], params["enc2_b"], 2, 1)
    mean = jnp.mean(h, axis=(0, 1, 2), keepdims=True)
    var = jnp.mean((h - mean) ** 2, axis=(0, 1, 2), keepdims=True)
    h = (h - mean) * jax.lax.rsqrt(var + 1e-5)
    h = h * params["bn_gamma"].reshape(1, 1, 1, -1) + params["bn_beta"].reshape(1, 1, 1, -1)
    h = jnp.where(h >= 0, h, 0.2 * h)
    h = jnp.maximum(deconv(h, params["dec1_w"], params["dec1_b"], 2, 1), 0.0)
    h = jnp.tanh(deconv(h, params["dec2_w"], params["dec2_b"], 2, 1))
    return jnp.transpose(h, (0, 3, 1, 2))


if __name__ == "__main__":
    cfg = device_config()
    key = jax.random.PRNGKey(0)
    k_params, k_x = jax.random.split(key)

    params = init_params(k_params, in_channels=3, out_channels=3)
    packed = pack_params(params)          # one-time weight packing
    x = jax.random.normal(k_x, (2, 3, 16, 16), jnp.float32)   # NCHW like PyTorch

    fwd = jax.jit(functools.partial(unet_generator_forward, cfg=cfg, out_channels=3))
    y = fwd(packed, x)
    jax.block_until_ready(y)

    assert y.shape == (2, 3, 16, 16), y.shape
    assert y.dtype == jnp.float32
    assert bool(jnp.all(jnp.isfinite(y)))
    assert bool(jnp.all(jnp.abs(y) <= 1.0 + 1e-6))            # tanh output range

    # Numerical check vs. f32 XLA reference (bf16 MXU operands + bf16
    # intermediates -> loose tolerance).
    y_ref = jax.jit(reference_forward)(params, x)
    jax.block_until_ready(y_ref)
    max_diff = float(jnp.max(jnp.abs(y - y_ref)))
    assert max_diff < 0.1, max_diff

    print("KERNEL_OK")
</pallas_src>

<mosaic_0001>
module attributes {stable_mosaic.version = 11 : i64} {
  func.func @_matmul_kernel(%arg0: i32, %arg1: i32, %arg2: i32, %arg3: memref<128x128xbf16, #tpu.memory_space<vmem>>, %arg4: memref<128x128xbf16, #tpu.memory_space<vmem>>, %arg5: memref<1x128xf32, #tpu.memory_space<vmem>>, %arg6: memref<128x128xbf16, #tpu.memory_space<vmem>>, %arg7: memref<128x128xf32, #tpu.memory_space<vmem>>) attributes {dimension_semantics = [#tpu.dimension_semantics<parallel>, #tpu.dimension_semantics<parallel>, #tpu.dimension_semantics<arbitrary>], iteration_bounds = array<i64: 1, 1, 1>, scalar_prefetch = 0 : i64, scratch_operands = 1 : i64, tpu.core_type = #tpu.core_type<tc>, window_params = [{transform_indices = @transform_0, window_bounds = array<i64: 128, 128>}, {transform_indices = @transform_1, window_bounds = array<i64: 128, 128>}, {transform_indices = @transform_2, window_bounds = array<i64: 1, 128>}, {transform_indices = @transform_3, window_bounds = array<i64: 128, 128>}]} {
    %c0_i32 = arith.constant 0 : i32
    %0 = arith.cmpi eq, %arg2, %c0_i32 : i32
    %1 = arith.extui %0 : i1 to i32
    %c0_i32_0 = arith.constant 0 : i32
    %2 = arith.cmpi ne, %1, %c0_i32_0 : i32
    scf.if %2 {
      %cst_10 = arith.constant 0.000000e+00 : f32
      %12 = vector.broadcast %cst_10 : f32 to vector<128x128xf32>
      %c0_11 = arith.constant 0 : index
      %c0_12 = arith.constant 0 : index
      %13 = vector.load %arg7[%c0_11, %c0_12] : memref<128x128xf32, #tpu.memory_space<vmem>>, vector<128x128xf32>
      tpu.vector_store %arg7[%c0_11, %c0_12], %12 {strides = array<i32>} : memref<128x128xf32, #tpu.memory_space<vmem>>, vector<128x128xf32>,
    } else {
    }
    %c0 = arith.constant 0 : index
    %c0_1 = arith.constant 0 : index
    %3 = vector.load %arg7[%c0, %c0_1] : memref<128x128xf32, #tpu.memory_space<vmem>>, vector<128x128xf32>
    %c0_2 = arith.constant 0 : index
    %c0_3 = arith.constant 0 : index
    %4 = vector.load %arg3[%c0_2, %c0_3] : memref<128x128xbf16, #tpu.memory_space<vmem>>, vector<128x128xbf16>
    %c0_4 = arith.constant 0 : index
    %c0_5 = arith.constant 0 : index
    %5 = vector.load %arg4[%c0_4, %c0_5] : memref<128x128xbf16, #tpu.memory_space<vmem>>, vector<128x128xbf16>
    %cst = arith.constant dense<0.000000e+00> : vector<128x128xf32>
    %6 = tpu.matmul %4, %5, %cst {dimension_numbers = #tpu.dot_dimension_numbers<[1], [0], [0], [1], [0, 0, 1, 1], [], []>} : vector<128x128xbf16>, vector<128x128xbf16>, vector<128x128xf32> -> vector<128x128xf32>
    %7 = arith.addf %3, %6 : vector<128x128xf32>
    %c0_6 = arith.constant 0 : index
    %c0_7 = arith.constant 0 : index
    %8 = vector.load %arg7[%c0_6, %c0_7] : memref<128x128xf32, #tpu.memory_space<vmem>>, vector<128x128xf32>
    tpu.vector_store %arg7[%c0_6, %c0_7], %7 {strides = array<i32>} : memref<128x128xf32, #tpu.memory_space<vmem>>, vector<128x128xf32>,
    %c0_i32_8 = arith.constant 0 : i32
    %9 = arith.cmpi eq, %arg2, %c0_i32_8 : i32
    %10 = arith.extui %9 : i1 to i32
    %c0_i32_9 = arith.constant 0 : i32
    %11 = arith.cmpi ne, %10, %c0_i32_9 : i32
    scf.if %11 {
      %c0_10 = arith.constant 0 : index
      %c0_11 = arith.constant 0 : index
      %12 = vector.load %arg7[%c0_10, %c0_11] : memref<128x128xf32, #tpu.memory_space<vmem>>, vector<128x128xf32>
      %c0_12 = arith.constant 0 : index
      %c0_13 = arith.constant 0 : index
      %13 = vector.load %arg5[%c0_12, %c0_13] : memref<1x128xf32, #tpu.memory_space<vmem>>, vector<1x128xf32>
      %14 = vector.broadcast %13 : vector<1x128xf32> to vector<128x128xf32>
      %15 = arith.addf %12, %14 : vector<128x128xf32>
      %cst_14 = arith.constant 0.000000e+00 : f32
      %16 = vector.broadcast %cst_14 : f32 to vector<128x128xf32>
      %17 = arith.cmpf oge, %15, %16 : vector<128x128xf32>
      %cst_15 = arith.constant 2.000000e-01 : f32
      %18 = vector.broadcast %cst_15 : f32 to vector<128x128xf32>
      %19 = arith.mulf %18, %15 : vector<128x128xf32>
      %20 = arith.select %17, %15, %19 : vector<128x128xi1>, vector<128x128xf32>
      %21 = arith.truncf %20 : vector<128x128xf32> to vector<128x128xbf16>
      %c0_16 = arith.constant 0 : index
      %c0_17 = arith.constant 0 : index
      %22 = vector.load %arg6[%c0_16, %c0_17] : memref<128x128xbf16, #tpu.memory_space<vmem>>, vector<128x128xbf16>
      tpu.vector_store %arg6[%c0_16, %c0_17], %21 {strides = array<i32>} : memref<128x128xbf16, #tpu.memory_space<vmem>>, vector<128x128xbf16>,
    } else {
    }
    return
  }
  func.func @transform_0(%arg0: i32, %arg1: i32, %arg2: i32) -> (i32, i32) {
    %c0_i32 = arith.constant 0 : i32
    return %arg0, %arg2 : i32, i32
  }
  func.func @transform_1(%arg0: i32, %arg1: i32, %arg2: i32) -> (i32, i32) {
    %c0_i32 = arith.constant 0 : i32
    return %arg2, %arg1 : i32, i32
  }
  func.func @transform_2(%arg0: i32, %arg1: i32, %arg2: i32) -> (i32, i32) {
    %c0_i32 = arith.constant 0 : i32
    %c0_i32_0 = arith.constant 0 : i32
    return %c0_i32, %arg1 : i32, i32
  }
  func.func @transform_3(%arg0: i32, %arg1: i32, %arg2: i32) -> (i32, i32) {
    %c0_i32 = arith.constant 0 : i32
    return %arg0, %arg1 : i32, i32
  }
}

module attributes {stable_mosaic.version = 11 : i64} {
  func.func @_bn_apply_kernel(%arg0: i32, %arg1: memref<32x128xbf16, #tpu.memory_space<vmem>>, %arg2: memref<1x128xf32, #tpu.memory_space<vmem>>, %arg3: memref<1x128xf32, #tpu.memory_space<vmem>>, %arg4: memref<32x128xbf16, #tpu.memory_space<vmem>>) attributes {dimension_semantics = [#tpu.dimension_semantics<parallel>], iteration_bounds = array<i64: 1>, scalar_prefetch = 0 : i64, scratch_operands = 0 : i64, tpu.core_type = #tpu.core_type<tc>, window_params = [{transform_indices = @transform_0, window_bounds = array<i64: 32, 128>}, {pipeline_mode = #tpu.pipeline_mode<synchronous>, transform_indices = @transform_1, window_bounds = array<i64: 1, 128>}, {pipeline_mode = #tpu.pipeline_mode<synchronous>, transform_indices = @transform_2, window_bounds = array<i64: 1, 128>}, {transform_indices = @transform_3, window_bounds = array<i64: 32, 128>}]} {
    %c0 = arith.constant 0 : index
    %c0_0 = arith.constant 0 : index
    %0 = vector.load %arg1[%c0, %c0_0] : memref<32x128xbf16, #tpu.memory_space<vmem>>, vector<32x128xbf16>
    %1 = arith.extf %0 : vector<32x128xbf16> to vector<32x128xf32>
    %c0_1 = arith.constant 0 : index
    %c0_2 = arith.constant 0 : index
    %2 = vector.load %arg2[%c0_1, %c0_2] : memref<1x128xf32, #tpu.memory_space<vmem>>, vector<1x128xf32>
    %3 = vector.broadcast %2 : vector<1x128xf32> to vector<32x128xf32>
    %4 = arith.mulf %1, %3 : vector<32x128xf32>
    %c0_3 = arith.constant 0 : index
    %c0_4 = arith.constant 0 : index
    %5 = vector.load %arg3[%c0_3, %c0_4] : memref<1x128xf32, #tpu.memory_space<vmem>>, vector<1x128xf32>
    %6 = vector.broadcast %5 : vector<1x128xf32> to vector<32x128xf32>
    %7 = arith.addf %4, %6 : vector<32x128xf32>
    %cst = arith.constant 0.000000e+00 : f32
    %8 = vector.broadcast %cst : f32 to vector<32x128xf32>
    %9 = arith.cmpf oge, %7, %8 : vector<32x128xf32>
    %cst_5 = arith.constant 2.000000e-01 : f32
    %10 = vector.broadcast %cst_5 : f32 to vector<32x128xf32>
    %11 = arith.mulf %10, %7 : vector<32x128xf32>
    %12 = arith.select %9, %7, %11 : vector<32x128xi1>, vector<32x128xf32>
    %13 = arith.truncf %12 : vector<32x128xf32> to vector<32x128xbf16>
    %c0_6 = arith.constant 0 : index
    %c0_7 = arith.constant 0 : index
    %14 = vector.load %arg4[%c0_6, %c0_7] : memref<32x128xbf16, #tpu.memory_space<vmem>>, vector<32x128xbf16>
    tpu.vector_store %arg4[%c0_6, %c0_7], %13 {strides = array<i32>} : memref<32x128xbf16, #tpu.memory_space<vmem>>, vector<32x128xbf16>,
    return
  }
  func.func @transform_0(%arg0: i32) -> (i32, i32) {
    %c0_i32 = arith.constant 0 : i32
    %c0_i32_0 = arith.constant 0 : i32
    return %arg0, %c0_i32 : i32, i32
  }
  func.func @transform_1(%arg0: i32) -> (i32, i32) {
    %c0_i32 = arith.constant 0 : i32
    %c0_i32_0 = arith.constant 0 : i32
    %c0_i32_1 = arith.constant 0 : i32
    return %c0_i32, %c0_i32_0 : i32, i32
  }
  func.func @transform_2(%arg0: i32) -> (i32, i32) {
    %c0_i32 = arith.constant 0 : i32
    %c0_i32_0 = arith.constant 0 : i32
    %c0_i32_1 = arith.constant 0 : i32
    return %c0_i32, %c0_i32_0 : i32, i32
  }
  func.func @transform_3(%arg0: i32) -> (i32, i32) {
    %c0_i32 = arith.constant 0 : i32
    %c0_i32_0 = arith.constant 0 : i32
    return %arg0, %c0_i32 : i32, i32
  }
}

module attributes {stable_mosaic.version = 11 : i64} {
  func.func @_matmul_kernel(%arg0: i32, %arg1: i32, %arg2: i32, %arg3: memref<32x1024xbf16, #tpu.memory_space<vmem>>, %arg4: memref<1024x128xbf16, #tpu.memory_space<vmem>>, %arg5: memref<1x128xf32, #tpu.memory_space<vmem>>, %arg6: memref<32x128xbf16, #tpu.memory_space<vmem>>, %arg7: memref<1x128xf32, #tpu.memory_space<vmem>>, %arg8: memref<1x128xf32, #tpu.memory_space<vmem>>, %arg9: memref<32x128xf32, #tpu.memory_space<vmem>>) attributes {dimension_semantics = [#tpu.dimension_semantics<arbitrary>, #tpu.dimension_semantics<arbitrary>, #tpu.dimension_semantics<arbitrary>], iteration_bounds = array<i64: 1, 1, 1>, scalar_prefetch = 0 : i64, scratch_operands = 1 : i64, tpu.core_type = #tpu.core_type<tc>, window_params = [{transform_indices = @transform_0, window_bounds = array<i64: 32, 1024>}, {transform_indices = @transform_1, window_bounds = array<i64: 1024, 128>}, {transform_indices = @transform_2, window_bounds = array<i64: 1, 128>}, {transform_indices = @transform_3, window_bounds = array<i64: 32, 128>}, {pipeline_mode = #tpu.pipeline_mode<synchronous>, transform_indices = @transform_4, window_bounds = array<i64: 1, 128>}, {pipeline_mode = #tpu.pipeline_mode<synchronous>, transform_indices = @transform_5, window_bounds = array<i64: 1, 128>}]} {
    %c0_i32 = arith.constant 0 : i32
    %0 = arith.cmpi eq, %arg2, %c0_i32 : i32
    %1 = arith.extui %0 : i1 to i32
    %c0_i32_0 = arith.constant 0 : i32
    %2 = arith.cmpi ne, %1, %c0_i32_0 : i32
    scf.if %2 {
      %cst_13 = arith.constant 0.000000e+00 : f32
      %17 = vector.broadcast %cst_13 : f32 to vector<32x128xf32>
      %c0_14 = arith.constant 0 : index
      %c0_15 = arith.constant 0 : index
      %18 = vector.load %arg9[%c0_14, %c0_15] : memref<32x128xf32, #tpu.memory_space<vmem>>, vector<32x128xf32>
      tpu.vector_store %arg9[%c0_14, %c0_15], %17 {strides = array<i32>} : memref<32x128xf32, #tpu.memory_space<vmem>>, vector<32x128xf32>,
    } else {
    }
    %c0_i32_1 = arith.constant 0 : i32
    %3 = arith.cmpi eq, %arg2, %c0_i32_1 : i32
    %c0_i32_2 = arith.constant 0 : i32
    %4 = arith.cmpi eq, %arg0, %c0_i32_2 : i32
    %5 = arith.andi %3, %4 : i1
    %6 = arith.extui %5 : i1 to i32
    %c0_i32_3 = arith.constant 0 : i32
    %7 = arith.cmpi ne, %6, %c0_i32_3 : i32
    scf.if %7 {
      %cst_13 = arith.constant 0.000000e+00 : f32
      %17 = vector.broadcast %cst_13 : f32 to vector<1x128xf32>
      %c0_14 = arith.constant 0 : index
      %c0_15 = arith.constant 0 : index
      %18 = vector.load %arg7[%c0_14, %c0_15] : memref<1x128xf32, #tpu.memory_space<vmem>>, vector<1x128xf32>
      tpu.vector_store %arg7[%c0_14, %c0_15], %17 {strides = array<i32>} : memref<1x128xf32, #tpu.memory_space<vmem>>, vector<1x128xf32>,
      %cst_16 = arith.constant 0.000000e+00 : f32
      %19 = vector.broadcast %cst_16 : f32 to vector<1x128xf32>
      %c0_17 = arith.constant 0 : index
      %c0_18 = arith.constant 0 : index
      %20 = vector.load %arg8[%c0_17, %c0_18] : memref<1x128xf32, #tpu.memory_space<vmem>>, vector<1x128xf32>
      tpu.vector_store %arg8[%c0_17, %c0_18], %19 {strides = array<i32>} : memref<1x128xf32, #tpu.memory_space<vmem>>, vector<1x128xf32>,
    } else {
    }
    %c0 = arith.constant 0 : index
    %c0_4 = arith.constant 0 : index
    %8 = vector.load %arg9[%c0, %c0_4] : memref<32x128xf32, #tpu.memory_space<vmem>>, vector<32x128xf32>
    %c0_5 = arith.constant 0 : index
    %c0_6 = arith.constant 0 : index
    %9 = vector.load %arg3[%c0_5, %c0_6] : memref<32x1024xbf16, #tpu.memory_space<vmem>>, vector<32x1024xbf16>
    %c0_7 = arith.constant 0 : index
    %c0_8 = arith.constant 0 : index
    %10 = vector.load %arg4[%c0_7, %c0_8] : memref<1024x128xbf16, #tpu.memory_space<vmem>>, vector<1024x128xbf16>
    %cst = arith.constant dense<0.000000e+00> : vector<32x128xf32>
    %11 = tpu.matmul %9, %10, %cst {dimension_numbers = #tpu.dot_dimension_numbers<[1], [0], [0], [1], [0, 0, 1, 1], [], []>} : vector<32x1024xbf16>, vector<1024x128xbf16>, vector<32x128xf32> -> vector<32x128xf32>
    %12 = arith.addf %8, %11 : vector<32x128xf32>
    %c0_9 = arith.constant 0 : index
    %c0_10 = arith.constant 0 : index
    %13 = vector.load %arg9[%c0_9, %c0_10] : memref<32x128xf32, #tpu.memory_space<vmem>>, vector<32x128xf32>
    tpu.vector_store %arg9[%c0_9, %c0_10], %12 {strides = array<i32>} : memref<32x128xf32, #tpu.memory_space<vmem>>, vector<32x128xf32>,
    %c0_i32_11 = arith.constant 0 : i32
    %14 = arith.cmpi eq, %arg2, %c0_i32_11 : i32
    %15 = arith.extui %14 : i1 to i32
    %c0_i32_12 = arith.constant 0 : i32
    %16 = arith.cmpi ne, %15, %c0_i32_12 : i32
    scf.if %16 {
      %c0_13 = arith.constant 0 : index
      %c0_14 = arith.constant 0 : index
      %17 = vector.load %arg9[%c0_13, %c0_14] : memref<32x128xf32, #tpu.memory_space<vmem>>, vector<32x128xf32>
      %c0_15 = arith.constant 0 : index
      %c0_16 = arith.constant 0 : index
      %18 = vector.load %arg5[%c0_15, %c0_16] : memref<1x128xf32, #tpu.memory_space<vmem>>, vector<1x128xf32>
      %19 = vector.broadcast %18 : vector<1x128xf32> to vector<32x128xf32>
      %20 = arith.addf %17, %19 : vector<32x128xf32>
      %21 = arith.truncf %20 : vector<32x128xf32> to vector<32x128xbf16>
      %c0_17 = arith.constant 0 : index
      %c0_18 = arith.constant 0 : index
      %22 = vector.load %arg6[%c0_17, %c0_18] : memref<32x128xbf16, #tpu.memory_space<vmem>>, vector<32x128xbf16>
      tpu.vector_store %arg6[%c0_17, %c0_18], %21 {strides = array<i32>} : memref<32x128xbf16, #tpu.memory_space<vmem>>, vector<32x128xbf16>,
      %c0_19 = arith.constant 0 : index
      %c0_20 = arith.constant 0 : index
      %23 = vector.load %arg7[%c0_19, %c0_20] : memref<1x128xf32, #tpu.memory_space<vmem>>, vector<1x128xf32>
      %cst_21 = arith.constant dense<0.000000e+00> : vector<128xf32>
      %24 = vector.multi_reduction <add>, %20, %cst_21 [0] : vector<32x128xf32> to vector<128xf32>
      %25 = vector.shape_cast %24 : vector<128xf32> to vector<1x128xf32>
      %26 = arith.addf %23, %25 : vector<1x128xf32>
      %c0_22 = arith.constant 0 : index
      %c0_23 = arith.constant 0 : index
      %27 = vector.load %arg7[%c0_22, %c0_23] : memref<1x128xf32, #tpu.memory_space<vmem>>, vector<1x128xf32>
      tpu.vector_store %arg7[%c0_22, %c0_23], %26 {strides = array<i32>} : memref<1x128xf32, #tpu.memory_space<vmem>>, vector<1x128xf32>,
      %c0_24 = arith.constant 0 : index
      %c0_25 = arith.constant 0 : index
      %28 = vector.load %arg8[%c0_24, %c0_25] : memref<1x128xf32, #tpu.memory_space<vmem>>, vector<1x128xf32>
      %29 = arith.mulf %20, %20 : vector<32x128xf32>
      %cst_26 = arith.constant dense<0.000000e+00> : vector<128xf32>
      %30 = vector.multi_reduction <add>, %29, %cst_26 [0] : vector<32x128xf32> to vector<128xf32>
      %31 = vector.shape_cast %30 : vector<128xf32> to vector<1x128xf32>
      %32 = arith.addf %28, %31 : vector<1x128xf32>
      %c0_27 = arith.constant 0 : index
      %c0_28 = arith.constant 0 : index
      %33 = vector.load %arg8[%c0_27, %c0_28] : memref<1x128xf32, #tpu.memory_space<vmem>>, vector<1x128xf32>
      tpu.vector_store %arg8[%c0_27, %c0_28], %32 {strides = array<i32>} : memref<1x128xf32, #tpu.memory_space<vmem>>, vector<1x128xf32>,
    } else {
    }
    return
  }
  func.func @transform_0(%arg0: i32, %arg1: i32, %arg2: i32) -> (i32, i32) {
    %c0_i32 = arith.constant 0 : i32
    return %arg0, %arg2 : i32, i32
  }
  func.func @transform_1(%arg0: i32, %arg1: i32, %arg2: i32) -> (i32, i32) {
    %c0_i32 = arith.constant 0 : i32
    return %arg2, %arg1 : i32, i32
  }
  func.func @transform_2(%arg0: i32, %arg1: i32, %arg2: i32) -> (i32, i32) {
    %c0_i32 = arith.constant 0 : i32
    %c0_i32_0 = arith.constant 0 : i32
    return %c0_i32, %arg1 : i32, i32
  }
  func.func @transform_3(%arg0: i32, %arg1: i32, %arg2: i32) -> (i32, i32) {
    %c0_i32 = arith.constant 0 : i32
    return %arg0, %arg1 : i32, i32
  }
  func.func @transform_4(%arg0: i32, %arg1: i32, %arg2: i32) -> (i32, i32) {
    %c0_i32 = arith.constant 0 : i32
    %c0_i32_0 = arith.constant 0 : i32
    %c0_i32_1 = arith.constant 0 : i32
    return %c0_i32, %c0_i32_0 : i32, i32
  }
  func.func @transform_5(%arg0: i32, %arg1: i32, %arg2: i32) -> (i32, i32) {
    %c0_i32 = arith.constant 0 : i32
    %c0_i32_0 = arith.constant 0 : i32
    %c0_i32_1 = arith.constant 0 : i32
    return %c0_i32, %c0_i32_0 : i32, i32
  }
}

module attributes {stable_mosaic.version = 11 : i64} {
  func.func @_deconv_kernel(%arg0: i32, %arg1: memref<1x42x128xbf16, #tpu.memory_space<vmem>>, %arg2: memref<1152x256xbf16, #tpu.memory_space<vmem>>, %arg3: memref<1x256xf32, #tpu.memory_space<vmem>>, %arg4: memref<1x24x256xbf16, #tpu.memory_space<vmem>>) attributes {dimension_semantics = [#tpu.dimension_semantics<parallel>], iteration_bounds = array<i64: 2>, scalar_prefetch = 0 : i64, scratch_operands = 0 : i64, tpu.core_type = #tpu.core_type<tc>, window_params = [{transform_indices = @transform_0, window_bounds = array<i64: 1, 42, 128>}, {pipeline_mode = #tpu.pipeline_mode<synchronous>, transform_indices = @transform_1, window_bounds = array<i64: 1152, 256>}, {pipeline_mode = #tpu.pipeline_mode<synchronous>, transform_indices = @transform_2, window_bounds = array<i64: 1, 256>}, {transform_indices = @transform_3, window_bounds = array<i64: 1, 24, 256>}]} {
    %cst = arith.constant 0.000000e+00 : f32
    %0 = vector.broadcast %cst : f32 to vector<24x256xf32>
    %c0 = arith.constant 0 : index
    %c0_0 = arith.constant 0 : index
    %c0_1 = arith.constant 0 : index
    %1 = vector.load %arg1[%c0, %c0_0, %c0_1] : memref<1x42x128xbf16, #tpu.memory_space<vmem>>, vector<1x24x128xbf16>
    %2 = vector.shape_cast %1 : vector<1x24x128xbf16> to vector<24x128xbf16>
    %c0_2 = arith.constant 0 : index
    %c0_3 = arith.constant 0 : index
    %3 = vector.load %arg2[%c0_2, %c0_3] : memref<1152x256xbf16, #tpu.memory_space<vmem>>, vector<128x256xbf16>
    %cst_4 = arith.constant dense<0.000000e+00> : vector<24x256xf32>
    %4 = tpu.matmul %2, %3, %cst_4 {dimension_numbers = #tpu.dot_dimension_numbers<[1], [0], [0], [1], [0, 0, 1, 1], [], []>} : vector<24x128xbf16>, vector<128x256xbf16>, vector<24x256xf32> -> vector<24x256xf32>
    %5 = arith.addf %0, %4 : vector<24x256xf32>
    %c0_5 = arith.constant 0 : index
    %c1 = arith.constant 1 : index
    %c0_6 = arith.constant 0 : index
    %6 = vector.load %arg1[%c0_5, %c1, %c0_6] : memref<1x42x128xbf16, #tpu.memory_space<vmem>>, vector<1x24x128xbf16>
    %7 = vector.shape_cast %6 : vector<1x24x128xbf16> to vector<24x128xbf16>
    %c128 = arith.constant 128 : index
    %c0_7 = arith.constant 0 : index
    %8 = vector.load %arg2[%c128, %c0_7] : memref<1152x256xbf16, #tpu.memory_space<vmem>>, vector<128x256xbf16>
    %cst_8 = arith.constant dense<0.000000e+00> : vector<24x256xf32>
    %9 = tpu.matmul %7, %8, %cst_8 {dimension_numbers = #tpu.dot_dimension_numbers<[1], [0], [0], [1], [0, 0, 1, 1], [], []>} : vector<24x128xbf16>, vector<128x256xbf16>, vector<24x256xf32> -> vector<24x256xf32>
    %10 = arith.addf %5, %9 : vector<24x256xf32>
    %c0_9 = arith.constant 0 : index
    %c2 = arith.constant 2 : index
    %c0_10 = arith.constant 0 : index
    %11 = vector.load %arg1[%c0_9, %c2, %c0_10] : memref<1x42x128xbf16, #tpu.memory_space<vmem>>, vector<1x24x128xbf16>
    %12 = vector.shape_cast %11 : vector<1x24x128xbf16> to vector<24x128xbf16>
    %c256 = arith.constant 256 : index
    %c0_11 = arith.constant 0 : index
    %13 = vector.load %arg2[%c256, %c0_11] : memref<1152x256xbf16, #tpu.memory_space<vmem>>, vector<128x256xbf16>
    %cst_12 = arith.constant dense<0.000000e+00> : vector<24x256xf32>
    %14 = tpu.matmul %12, %13, %cst_12 {dimension_numbers = #tpu.dot_dimension_numbers<[1], [0], [0], [1], [0, 0, 1, 1], [], []>} : vector<24x128xbf16>, vector<128x256xbf16>, vector<24x256xf32> -> vector<24x256xf32>
    %15 = arith.addf %10, %14 : vector<24x256xf32>
    %c0_13 = arith.constant 0 : index
    %c6 = arith.constant 6 : index
    %c0_14 = arith.constant 0 : index
    %16 = vector.load %arg1[%c0_13, %c6, %c0_14] : memref<1x42x128xbf16, #tpu.memory_space<vmem>>, vector<1x24x128xbf16>
    %17 = vector.shape_cast %16 : vector<1x24x128xbf16> to vector<24x128xbf16>
    %c384 = arith.constant 384 : index
    %c0_15 = arith.constant 0 : index
    %18 = vector.load %arg2[%c384, %c0_15] : memref<1152x256xbf16, #tpu.memory_space<vmem>>, vector<128x256xbf16>
    %cst_16 = arith.constant dense<0.000000e+00> : vector<24x256xf32>
    %19 = tpu.matmul %17, %18, %cst_16 {dimension_numbers = #tpu.dot_dimension_numbers<[1], [0], [0], [1], [0, 0, 1, 1], [], []>} : vector<24x128xbf16>, vector<128x256xbf16>, vector<24x256xf32> -> vector<24x256xf32>
    %20 = arith.addf %15, %19 : vector<24x256xf32>
    %c0_17 = arith.constant 0 : index
    %c7 = arith.constant 7 : index
    %c0_18 = arith.constant 0 : index
    %21 = vector.load %arg1[%c0_17, %c7, %c0_18] : memref<1x42x128xbf16, #tpu.memory_space<vmem>>, vector<1x24x128xbf16>
    %22 = vector.shape_cast %21 : vector<1x24x128xbf16> to vector<24x128xbf16>
    %c512 = arith.constant 512 : index
    %c0_19 = arith.constant 0 : index
    %23 = vector.load %arg2[%c512, %c0_19] : memref<1152x256xbf16, #tpu.memory_space<vmem>>, vector<128x256xbf16>
    %cst_20 = arith.constant dense<0.000000e+00> : vector<24x256xf32>
    %24 = tpu.matmul %22, %23, %cst_20 {dimension_numbers = #tpu.dot_dimension_numbers<[1], [0], [0], [1], [0, 0, 1, 1], [], []>} : vector<24x128xbf16>, vector<128x256xbf16>, vector<24x256xf32> -> vector<24x256xf32>
    %25 = arith.addf %20, %24 : vector<24x256xf32>
    %c0_21 = arith.constant 0 : index
    %c8 = arith.constant 8 : index
    %c0_22 = arith.constant 0 : index
    %26 = vector.load %arg1[%c0_21, %c8, %c0_22] : memref<1x42x128xbf16, #tpu.memory_space<vmem>>, vector<1x24x128xbf16>
    %27 = vector.shape_cast %26 : vector<1x24x128xbf16> to vector<24x128xbf16>
    %c640 = arith.constant 640 : index
    %c0_23 = arith.constant 0 : index
    %28 = vector.load %arg2[%c640, %c0_23] : memref<1152x256xbf16, #tpu.memory_space<vmem>>, vector<128x256xbf16>
    %cst_24 = arith.constant dense<0.000000e+00> : vector<24x256xf32>
    %29 = tpu.matmul %27, %28, %cst_24 {dimension_numbers = #tpu.dot_dimension_numbers<[1], [0], [0], [1], [0, 0, 1, 1], [], []>} : vector<24x128xbf16>, vector<128x256xbf16>, vector<24x256xf32> -> vector<24x256xf32>
    %30 = arith.addf %25, %29 : vector<24x256xf32>
    %c0_25 = arith.constant 0 : index
    %c12 = arith.constant 12 : index
    %c0_26 = arith.constant 0 : index
    %31 = vector.load %arg1[%c0_25, %c12, %c0_26] : memref<1x42x128xbf16, #tpu.memory_space<vmem>>, vector<1x24x128xbf16>
    %32 = vector.shape_cast %31 : vector<1x24x128xbf16> to vector<24x128xbf16>
    %c768 = arith.constant 768 : index
    %c0_27 = arith.constant 0 : index
    %33 = vector.load %arg2[%c768, %c0_27] : memref<1152x256xbf16, #tpu.memory_space<vmem>>, vector<128x256xbf16>
    %cst_28 = arith.constant dense<0.000000e+00> : vector<24x256xf32>
    %34 = tpu.matmul %32, %33, %cst_28 {dimension_numbers = #tpu.dot_dimension_numbers<[1], [0], [0], [1], [0, 0, 1, 1], [], []>} : vector<24x128xbf16>, vector<128x256xbf16>, vector<24x256xf32> -> vector<24x256xf32>
    %35 = arith.addf %30, %34 : vector<24x256xf32>
    %c0_29 = arith.constant 0 : index
    %c13 = arith.constant 13 : index
    %c0_30 = arith.constant 0 : index
    %36 = vector.load %arg1[%c0_29, %c13, %c0_30] : memref<1x42x128xbf16, #tpu.memory_space<vmem>>, vector<1x24x128xbf16>
    %37 = vector.shape_cast %36 : vector<1x24x128xbf16> to vector<24x128xbf16>
    %c896 = arith.constant 896 : index
    %c0_31 = arith.constant 0 : index
    %38 = vector.load %arg2[%c896, %c0_31] : memref<1152x256xbf16, #tpu.memory_space<vmem>>, vector<128x256xbf16>
    %cst_32 = arith.constant dense<0.000000e+00> : vector<24x256xf32>
    %39 = tpu.matmul %37, %38, %cst_32 {dimension_numbers = #tpu.dot_dimension_numbers<[1], [0], [0], [1], [0, 0, 1, 1], [], []>} : vector<24x128xbf16>, vector<128x256xbf16>, vector<24x256xf32> -> vector<24x256xf32>
    %40 = arith.addf %35, %39 : vector<24x256xf32>
    %c0_33 = arith.constant 0 : index
    %c14 = arith.constant 14 : index
    %c0_34 = arith.constant 0 : index
    %41 = vector.load %arg1[%c0_33, %c14, %c0_34] : memref<1x42x128xbf16, #tpu.memory_space<vmem>>, vector<1x24x128xbf16>
    %42 = vector.shape_cast %41 : vector<1x24x128xbf16> to vector<24x128xbf16>
    %c1024 = arith.constant 1024 : index
    %c0_35 = arith.constant 0 : index
    %43 = vector.load %arg2[%c1024, %c0_35] : memref<1152x256xbf16, #tpu.memory_space<vmem>>, vector<128x256xbf16>
    %cst_36 = arith.constant dense<0.000000e+00> : vector<24x256xf32>
    %44 = tpu.matmul %42, %43, %cst_36 {dimension_numbers = #tpu.dot_dimension_numbers<[1], [0], [0], [1], [0, 0, 1, 1], [], []>} : vector<24x128xbf16>, vector<128x256xbf16>, vector<24x256xf32> -> vector<24x256xf32>
    %45 = arith.addf %40, %44 : vector<24x256xf32>
    %c0_37 = arith.constant 0 : index
    %c0_38 = arith.constant 0 : index
    %46 = vector.load %arg3[%c0_37, %c0_38] : memref<1x256xf32, #tpu.memory_space<vmem>>, vector<1x256xf32>
    %47 = vector.broadcast %46 : vector<1x256xf32> to vector<24x256xf32>
    %48 = arith.addf %45, %47 : vector<24x256xf32>
    %cst_39 = arith.constant 0.000000e+00 : f32
    %49 = vector.broadcast %cst_39 : f32 to vector<24x256xf32>
    %50 = arith.maximumf %48, %49 : vector<24x256xf32>
    %51 = arith.truncf %50 : vector<24x256xf32> to vector<24x256xbf16>
    %c0_40 = arith.constant 0 : index
    %c0_41 = arith.constant 0 : index
    %c0_42 = arith.constant 0 : index
    %52 = vector.load %arg4[%c0_40, %c0_41, %c0_42] : memref<1x24x256xbf16, #tpu.memory_space<vmem>>, vector<1x24x256xbf16>
    %53 = vector.shape_cast %52 : vector<1x24x256xbf16> to vector<24x256xbf16>
    %54 = vector.shape_cast %51 : vector<24x256xbf16> to vector<1x24x256xbf16>
    tpu.vector_store %arg4[%c0_40, %c0_41, %c0_42], %54 {strides = array<i32>} : memref<1x24x256xbf16, #tpu.memory_space<vmem>>, vector<1x24x256xbf16>,
    return
  }
  func.func @transform_0(%arg0: i32) -> (i32, i32, i32) {
    %c0_i32 = arith.constant 0 : i32
    %c0_i32_0 = arith.constant 0 : i32
    %c0_i32_1 = arith.constant 0 : i32
    return %arg0, %c0_i32, %c0_i32_0 : i32, i32, i32
  }
  func.func @transform_1(%arg0: i32) -> (i32, i32) {
    %c0_i32 = arith.constant 0 : i32
    %c0_i32_0 = arith.constant 0 : i32
    %c0_i32_1 = arith.constant 0 : i32
    return %c0_i32, %c0_i32_0 : i32, i32
  }
  func.func @transform_2(%arg0: i32) -> (i32, i32) {
    %c0_i32 = arith.constant 0 : i32
    %c0_i32_0 = arith.constant 0 : i32
    %c0_i32_1 = arith.constant 0 : i32
    return %c0_i32, %c0_i32_0 : i32, i32
  }
  func.func @transform_3(%arg0: i32) -> (i32, i32, i32) {
    %c0_i32 = arith.constant 0 : i32
    %c0_i32_0 = arith.constant 0 : i32
    %c0_i32_1 = arith.constant 0 : i32
    return %arg0, %c0_i32, %c0_i32_0 : i32, i32, i32
  }
}

module attributes {stable_mosaic.version = 11 : i64} {
  func.func @_deconv_kernel(%arg0: i32, %arg1: memref<1x110x64xbf16, #tpu.memory_space<vmem>>, %arg2: memref<576x128xbf16, #tpu.memory_space<vmem>>, %arg3: memref<1x128xf32, #tpu.memory_space<vmem>>, %arg4: memref<1x80x128xbf16, #tpu.memory_space<vmem>>) attributes {dimension_semantics = [#tpu.dimension_semantics<parallel>], iteration_bounds = array<i64: 2>, scalar_prefetch = 0 : i64, scratch_operands = 0 : i64, tpu.core_type = #tpu.core_type<tc>, window_params = [{transform_indices = @transform_0, window_bounds = array<i64: 1, 110, 64>}, {pipeline_mode = #tpu.pipeline_mode<synchronous>, transform_indices = @transform_1, window_bounds = array<i64: 576, 128>}, {pipeline_mode = #tpu.pipeline_mode<synchronous>, transform_indices = @transform_2, window_bounds = array<i64: 1, 128>}, {transform_indices = @transform_3, window_bounds = array<i64: 1, 80, 128>}]} {
    %cst = arith.constant 0.000000e+00 : f32
    %0 = vector.broadcast %cst : f32 to vector<80x128xf32>
    %c0 = arith.constant 0 : index
    %c0_0 = arith.constant 0 : index
    %c0_1 = arith.constant 0 : index
    %1 = vector.load %arg1[%c0, %c0_0, %c0_1] : memref<1x110x64xbf16, #tpu.memory_space<vmem>>, vector<1x80x64xbf16>
    %2 = vector.shape_cast %1 : vector<1x80x64xbf16> to vector<80x64xbf16>
    %c0_2 = arith.constant 0 : index
    %c0_3 = arith.constant 0 : index
    %3 = vector.load %arg2[%c0_2, %c0_3] : memref<576x128xbf16, #tpu.memory_space<vmem>>, vector<64x128xbf16>
    %cst_4 = arith.constant dense<0.000000e+00> : vector<80x128xf32>
    %4 = tpu.matmul %2, %3, %cst_4 {dimension_numbers = #tpu.dot_dimension_numbers<[1], [0], [0], [1], [0, 0, 1, 1], [], []>} : vector<80x64xbf16>, vector<64x128xbf16>, vector<80x128xf32> -> vector<80x128xf32>
    %5 = arith.addf %0, %4 : vector<80x128xf32>
    %c0_5 = arith.constant 0 : index
    %c1 = arith.constant 1 : index
    %c0_6 = arith.constant 0 : index
    %6 = vector.load %arg1[%c0_5, %c1, %c0_6] : memref<1x110x64xbf16, #tpu.memory_space<vmem>>, vector<1x80x64xbf16>
    %7 = vector.shape_cast %6 : vector<1x80x64xbf16> to vector<80x64xbf16>
    %c64 = arith.constant 64 : index
    %c0_7 = arith.constant 0 : index
    %8 = vector.load %arg2[%c64, %c0_7] : memref<576x128xbf16, #tpu.memory_space<vmem>>, vector<64x128xbf16>
    %cst_8 = arith.constant dense<0.000000e+00> : vector<80x128xf32>
    %9 = tpu.matmul %7, %8, %cst_8 {dimension_numbers = #tpu.dot_dimension_numbers<[1], [0], [0], [1], [0, 0, 1, 1], [], []>} : vector<80x64xbf16>, vector<64x128xbf16>, vector<80x128xf32> -> vector<80x128xf32>
    %10 = arith.addf %5, %9 : vector<80x128xf32>
    %c0_9 = arith.constant 0 : index
    %c2 = arith.constant 2 : index
    %c0_10 = arith.constant 0 : index
    %11 = vector.load %arg1[%c0_9, %c2, %c0_10] : memref<1x110x64xbf16, #tpu.memory_space<vmem>>, vector<1x80x64xbf16>
    %12 = vector.shape_cast %11 : vector<1x80x64xbf16> to vector<80x64xbf16>
    %c128 = arith.constant 128 : index
    %c0_11 = arith.constant 0 : index
    %13 = vector.load %arg2[%c128, %c0_11] : memref<576x128xbf16, #tpu.memory_space<vmem>>, vector<64x128xbf16>
    %cst_12 = arith.constant dense<0.000000e+00> : vector<80x128xf32>
    %14 = tpu.matmul %12, %13, %cst_12 {dimension_numbers = #tpu.dot_dimension_numbers<[1], [0], [0], [1], [0, 0, 1, 1], [], []>} : vector<80x64xbf16>, vector<64x128xbf16>, vector<80x128xf32> -> vector<80x128xf32>
    %15 = arith.addf %10, %14 : vector<80x128xf32>
    %c0_13 = arith.constant 0 : index
    %c10 = arith.constant 10 : index
    %c0_14 = arith.constant 0 : index
    %16 = vector.load %arg1[%c0_13, %c10, %c0_14] : memref<1x110x64xbf16, #tpu.memory_space<vmem>>, vector<1x80x64xbf16>
    %17 = vector.shape_cast %16 : vector<1x80x64xbf16> to vector<80x64xbf16>
    %c192 = arith.constant 192 : index
    %c0_15 = arith.constant 0 : index
    %18 = vector.load %arg2[%c192, %c0_15] : memref<576x128xbf16, #tpu.memory_space<vmem>>, vector<64x128xbf16>
    %cst_16 = arith.constant dense<0.000000e+00> : vector<80x128xf32>
    %19 = tpu.matmul %17, %18, %cst_16 {dimension_numbers = #tpu.dot_dimension_numbers<[1], [0], [0], [1], [0, 0, 1, 1], [], []>} : vector<80x64xbf16>, vector<64x128xbf16>, vector<80x128xf32> -> vector<80x128xf32>
    %20 = arith.addf %15, %19 : vector<80x128xf32>
    %c0_17 = arith.constant 0 : index
    %c11 = arith.constant 11 : index
    %c0_18 = arith.constant 0 : index
    %21 = vector.load %arg1[%c0_17, %c11, %c0_18] : memref<1x110x64xbf16, #tpu.memory_space<vmem>>, vector<1x80x64xbf16>
    %22 = vector.shape_cast %21 : vector<1x80x64xbf16> to vector<80x64xbf16>
    %c256 = arith.constant 256 : index
    %c0_19 = arith.constant 0 : index
    %23 = vector.load %arg2[%c256, %c0_19] : memref<576x128xbf16, #tpu.memory_space<vmem>>, vector<64x128xbf16>
    %cst_20 = arith.constant dense<0.000000e+00> : vector<80x128xf32>
    %24 = tpu.matmul %22, %23, %cst_20 {dimension_numbers = #tpu.dot_dimension_numbers<[1], [0], [0], [1], [0, 0, 1, 1], [], []>} : vector<80x64xbf16>, vector<64x128xbf16>, vector<80x128xf32> -> vector<80x128xf32>
    %25 = arith.addf %20, %24 : vector<80x128xf32>
    %c0_21 = arith.constant 0 : index
    %c12 = arith.constant 12 : index
    %c0_22 = arith.constant 0 : index
    %26 = vector.load %arg1[%c0_21, %c12, %c0_22] : memref<1x110x64xbf16, #tpu.memory_space<vmem>>, vector<1x80x64xbf16>
    %27 = vector.shape_cast %26 : vector<1x80x64xbf16> to vector<80x64xbf16>
    %c320 = arith.constant 320 : index
    %c0_23 = arith.constant 0 : index
    %28 = vector.load %arg2[%c320, %c0_23] : memref<576x128xbf16, #tpu.memory_space<vmem>>, vector<64x128xbf16>
    %cst_24 = arith.constant dense<0.000000e+00> : vector<80x128xf32>
    %29 = tpu.matmul %27, %28, %cst_24 {dimension_numbers = #tpu.dot_dimension_numbers<[1], [0], [0], [1], [0, 0, 1, 1], [], []>} : vector<80x64xbf16>, vector<64x128xbf16>, vector<80x128xf32> -> vector<80x128xf32>
    %30 = arith.addf %25, %29 : vector<80x128xf32>
    %c0_25 = arith.constant 0 : index
    %c20 = arith.constant 20 : index
    %c0_26 = arith.constant 0 : index
    %31 = vector.load %arg1[%c0_25, %c20, %c0_26] : memref<1x110x64xbf16, #tpu.memory_space<vmem>>, vector<1x80x64xbf16>
    %32 = vector.shape_cast %31 : vector<1x80x64xbf16> to vector<80x64xbf16>
    %c384 = arith.constant 384 : index
    %c0_27 = arith.constant 0 : index
    %33 = vector.load %arg2[%c384, %c0_27] : memref<576x128xbf16, #tpu.memory_space<vmem>>, vector<64x128xbf16>
    %cst_28 = arith.constant dense<0.000000e+00> : vector<80x128xf32>
    %34 = tpu.matmul %32, %33, %cst_28 {dimension_numbers = #tpu.dot_dimension_numbers<[1], [0], [0], [1], [0, 0, 1, 1], [], []>} : vector<80x64xbf16>, vector<64x128xbf16>, vector<80x128xf32> -> vector<80x128xf32>
    %35 = arith.addf %30, %34 : vector<80x128xf32>
    %c0_29 = arith.constant 0 : index
    %c21 = arith.constant 21 : index
    %c0_30 = arith.constant 0 : index
    %36 = vector.load %arg1[%c0_29, %c21, %c0_30] : memref<1x110x64xbf16, #tpu.memory_space<vmem>>, vector<1x80x64xbf16>
    %37 = vector.shape_cast %36 : vector<1x80x64xbf16> to vector<80x64xbf16>
    %c448 = arith.constant 448 : index
    %c0_31 = arith.constant 0 : index
    %38 = vector.load %arg2[%c448, %c0_31] : memref<576x128xbf16, #tpu.memory_space<vmem>>, vector<64x128xbf16>
    %cst_32 = arith.constant dense<0.000000e+00> : vector<80x128xf32>
    %39 = tpu.matmul %37, %38, %cst_32 {dimension_numbers = #tpu.dot_dimension_numbers<[1], [0], [0], [1], [0, 0, 1, 1], [], []>} : vector<80x64xbf16>, vector<64x128xbf16>, vector<80x128xf32> -> vector<80x128xf32>
    %40 = arith.addf %35, %39 : vector<80x128xf32>
    %c0_33 = arith.constant 0 : index
    %c22 = arith.constant 22 : index
    %c0_34 = arith.constant 0 : index
    %41 = vector.load %arg1[%c0_33, %c22, %c0_34] : memref<1x110x64xbf16, #tpu.memory_space<vmem>>, vector<1x80x64xbf16>
    %42 = vector.shape_cast %41 : vector<1x80x64xbf16> to vector<80x64xbf16>
    %c512 = arith.constant 512 : index
    %c0_35 = arith.constant 0 : index
    %43 = vector.load %arg2[%c512, %c0_35] : memref<576x128xbf16, #tpu.memory_space<vmem>>, vector<64x128xbf16>
    %cst_36 = arith.constant dense<0.000000e+00> : vector<80x128xf32>
    %44 = tpu.matmul %42, %43, %cst_36 {dimension_numbers = #tpu.dot_dimension_numbers<[1], [0], [0], [1], [0, 0, 1, 1], [], []>} : vector<80x64xbf16>, vector<64x128xbf16>, vector<80x128xf32> -> vector<80x128xf32>
    %45 = arith.addf %40, %44 : vector<80x128xf32>
    %c0_37 = arith.constant 0 : index
    %c0_38 = arith.constant 0 : index
    %46 = vector.load %arg3[%c0_37, %c0_38] : memref<1x128xf32, #tpu.memory_space<vmem>>, vector<1x128xf32>
    %47 = vector.broadcast %46 : vector<1x128xf32> to vector<80x128xf32>
    %48 = arith.addf %45, %47 : vector<80x128xf32>
    %49 = math.tanh %48 : vector<80x128xf32>
    %50 = arith.truncf %49 : vector<80x128xf32> to vector<80x128xbf16>
    %c0_39 = arith.constant 0 : index
    %c0_40 = arith.constant 0 : index
    %c0_41 = arith.constant 0 : index
    %51 = vector.load %arg4[%c0_39, %c0_40, %c0_41] : memref<1x80x128xbf16, #tpu.memory_space<vmem>>, vector<1x80x128xbf16>
    %52 = vector.shape_cast %51 : vector<1x80x128xbf16> to vector<80x128xbf16>
    %53 = vector.shape_cast %50 : vector<80x128xbf16> to vector<1x80x128xbf16>
    tpu.vector_store %arg4[%c0_39, %c0_40, %c0_41], %53 {strides = array<i32>} : memref<1x80x128xbf16, #tpu.memory_space<vmem>>, vector<1x80x128xbf16>,
    return
  }
  func.func @transform_0(%arg0: i32) -> (i32, i32, i32) {
    %c0_i32 = arith.constant 0 : i32
    %c0_i32_0 = arith.constant 0 : i32
    %c0_i32_1 = arith.constant 0 : i32
    return %arg0, %c0_i32, %c0_i32_0 : i32, i32, i32
  }
  func.func @transform_1(%arg0: i32) -> (i32, i32) {
    %c0_i32 = arith.constant 0 : i32
    %c0_i32_0 = arith.constant 0 : i32
    %c0_i32_1 = arith.constant 0 : i32
    return %c0_i32, %c0_i32_0 : i32, i32
  }
  func.func @transform_2(%arg0: i32) -> (i32, i32) {
    %c0_i32 = arith.constant 0 : i32
    %c0_i32_0 = arith.constant 0 : i32
    %c0_i32_1 = arith.constant 0 : i32
    return %c0_i32, %c0_i32_0 : i32, i32
  }
  func.func @transform_3(%arg0: i32) -> (i32, i32, i32) {
    %c0_i32 = arith.constant 0 : i32
    %c0_i32_0 = arith.constant 0 : i32
    %c0_i32_1 = arith.constant 0 : i32
    return %arg0, %c0_i32, %c0_i32_0 : i32, i32, i32
  }
}

</mosaic_0001>

<llo_original>
// kernel: unet_generator_forward.5
$region0: #{unet_generator_forward.5}
  #allocation0 [shape = 'u32[]', space=smem, size = 0x4, offset = 0x4, fixed_abs, tag = 'smem constant byte address 0x4 - core index']
  #allocation1 [shape = 'u32[72,128]{1,0:T(1,128)}', space=vmem, size = 0x9000, scoped, tag = 'internal scratch']
  #allocation2 [shape = 'f32[128,128]{1,0:T(8,128)}', space=vmem, size = 0x10000, scoped, tag = 'scratch operand']
  %s0 = inlined_call_operand.vmem [shape: bf16[128,128], index: 0, kind: input, shape index: {}]
  %s1 = inlined_call_operand.vmem [shape: bf16[128,128], index: 1, kind: input, shape index: {}]
  %s2 = inlined_call_operand.vmem [shape: f32[1,128], index: 2, kind: input, shape index: {}]
  %s3 = inlined_call_operand.vmem [shape: bf16[128,128], index: 3, kind: output, shape index: {}]
  %s4 = sld [smem:[#allocation0]]
  $region30: #{unet_generator_forward.5} parent=0
    _
  %s6 = ssub.s32 1, %s4
  %s7 = scalar_select 0, %s6, %s4
  // Predicated region
  $region2: #{unet_generator_forward.5} parent=0 // pred_check
    _
  $region3: #{unet_generator_forward.5} parent=0 // pred_check_branch
    %9 = sbr.rel (0) target = $region5
  $region4: #{unet_generator_forward.5} parent=0 // pred_region
    _
  $region5: #{unet_generator_forward.5} parent=0 // pred_fallthru
    _
  // Predicated region
  $region6: #{unet_generator_forward.5} parent=0 // pred_check
    _
  $region7: #{unet_generator_forward.5} parent=0 // pred_check_branch
    %11 = sbr.rel (0) target = $region9
  $region8: #{unet_generator_forward.5} parent=0 // pred_region
    _
  $region9: #{unet_generator_forward.5} parent=0 // pred_fallthru
    _
  // Predicated region
  $region10: #{unet_generator_forward.5} parent=0 // pred_check
    _
  $region11: #{unet_generator_forward.5} parent=0 // pred_check_branch
    %13 = sbr.rel (0) target = $region13
  $region12: #{unet_generator_forward.5} parent=0 // pred_region
    _
  $region13: #{unet_generator_forward.5} parent=0 // pred_fallthru
    _
  %p14 = scmp.eq.s32.totalorder 0, 0
  // Predicated region
  $region14: #{unet_generator_forward.5} parent=0 // pred_check
    %p15 = pneg %p14
  $region15: #{unet_generator_forward.5} parent=0 // pred_check_branch
    %17 = sbr.rel (%p15) target = $region17
  $region16: #{unet_generator_forward.5} parent=0 // pred_region
    %18 = vst [vmem:[#allocation2] sm:$0xff] 0.0
    %19 = vst [vmem:[#allocation2 + $0x8] sm:$0xff] 0.0
    %20 = vst [vmem:[#allocation2 + $0x10] sm:$0xff] 0.0
    %21 = vst [vmem:[#allocation2 + $0x18] sm:$0xff] 0.0
    %22 = vst [vmem:[#allocation2 + $0x20] sm:$0xff] 0.0
    %23 = vst [vmem:[#allocation2 + $0x28] sm:$0xff] 0.0
    %24 = vst [vmem:[#allocation2 + $0x30] sm:$0xff] 0.0
    %25 = vst [vmem:[#allocation2 + $0x38] sm:$0xff] 0.0
    %26 = vst [vmem:[#allocation2 + $0x40] sm:$0xff] 0.0
    %27 = vst [vmem:[#allocation2 + $0x48] sm:$0xff] 0.0
    %28 = vst [vmem:[#allocation2 + $0x50] sm:$0xff] 0.0
    %29 = vst [vmem:[#allocation2 + $0x58] sm:$0xff] 0.0
    %30 = vst [vmem:[#allocation2 + $0x60] sm:$0xff] 0.0
    %31 = vst [vmem:[#allocation2 + $0x68] sm:$0xff] 0.0
    %32 = vst [vmem:[#allocation2 + $0x70] sm:$0xff] 0.0
    %33 = vst [vmem:[#allocation2 + $0x78] sm:$0xff] 0.0
  $region17: #{unet_generator_forward.5} parent=0 // pred_fallthru
    _
  %v34 = vld [vmem:[#allocation2] sm:$0xff]
  %v35 = vld [vmem:[#allocation2 + $0x8] sm:$0xff]
  %v36 = vld [vmem:[#allocation2 + $0x10] sm:$0xff]
  %v37 = vld [vmem:[#allocation2 + $0x18] sm:$0xff]
  %v38 = vld [vmem:[#allocation2 + $0x20] sm:$0xff]
  %v39 = vld [vmem:[#allocation2 + $0x28] sm:$0xff]
  %v40 = vld [vmem:[#allocation2 + $0x30] sm:$0xff]
  %v41 = vld [vmem:[#allocation2 + $0x38] sm:$0xff]
  %v42 = vld [vmem:[#allocation2 + $0x40] sm:$0xff]
  %v43 = vld [vmem:[#allocation2 + $0x48] sm:$0xff]
  %v44 = vld [vmem:[#allocation2 + $0x50] sm:$0xff]
  %v45 = vld [vmem:[#allocation2 + $0x58] sm:$0xff]
  %v46 = vld [vmem:[#allocation2 + $0x60] sm:$0xff]
  %v47 = vld [vmem:[#allocation2 + $0x68] sm:$0xff]
  %v48 = vld [vmem:[#allocation2 + $0x70] sm:$0xff]
  %v49 = vld [vmem:[#allocation2 + $0x78] sm:$0xff]
  %v50 = vld [vmem:[%s0] sm:$0xf]
  %v51 = vld [vmem:[%s0 + $0x4] sm:$0xf]
  %v52 = vld [vmem:[%s0 + $0x8] sm:$0xf]
  %v53 = vld [vmem:[%s0 + $0xc] sm:$0xf]
  %v54 = vld [vmem:[%s0 + $0x10] sm:$0xf]
  %v55 = vld [vmem:[%s0 + $0x14] sm:$0xf]
  %v56 = vld [vmem:[%s0 + $0x18] sm:$0xf]
  %v57 = vld [vmem:[%s0 + $0x1c] sm:$0xf]
  %v58 = vld [vmem:[%s0 + $0x20] sm:$0xf]
  %v59 = vld [vmem:[%s0 + $0x24] sm:$0xf]
  %v60 = vld [vmem:[%s0 + $0x28] sm:$0xf]
  %v61 = vld [vmem:[%s0 + $0x2c] sm:$0xf]
  %v62 = vld [vmem:[%s0 + $0x30] sm:$0xf]
  %v63 = vld [vmem:[%s0 + $0x34] sm:$0xf]
  %v64 = vld [vmem:[%s0 + $0x38] sm:$0xf]
  %v65 = vld [vmem:[%s0 + $0x3c] sm:$0xf]
  %v66 = vld [vmem:[%s1] sm:$0xf]
  %v67 = vld [vmem:[%s1 + $0x4] sm:$0xf]
  %v68 = vld [vmem:[%s1 + $0x8] sm:$0xf]
  %v69 = vld [vmem:[%s1 + $0xc] sm:$0xf]
  %v70 = vld [vmem:[%s1 + $0x10] sm:$0xf]
  %v71 = vld [vmem:[%s1 + $0x14] sm:$0xf]
  %v72 = vld [vmem:[%s1 + $0x18] sm:$0xf]
  %v73 = vld [vmem:[%s1 + $0x1c] sm:$0xf]
  %v74 = vld [vmem:[%s1 + $0x20] sm:$0xf]
  %v75 = vld [vmem:[%s1 + $0x24] sm:$0xf]
  %v76 = vld [vmem:[%s1 + $0x28] sm:$0xf]
  %v77 = vld [vmem:[%s1 + $0x2c] sm:$0xf]
  %v78 = vld [vmem:[%s1 + $0x30] sm:$0xf]
  %v79 = vld [vmem:[%s1 + $0x34] sm:$0xf]
  %v80 = vld [vmem:[%s1 + $0x38] sm:$0xf]
  %v81 = vld [vmem:[%s1 + $0x3c] sm:$0xf]
  %v98 = vunpack.c.l.b16 %v50
  %v99 = vunpack.c.l.b16 %v51
  %v100 = vunpack.c.l.b16 %v52
  %v101 = vunpack.c.l.b16 %v53
  %v102 = vunpack.c.l.b16 %v54
  %v103 = vunpack.c.l.b16 %v55
  %v104 = vunpack.c.l.b16 %v56
  %v105 = vunpack.c.l.b16 %v57
  %v106 = vunpack.c.l.b16 %v58
  %v107 = vunpack.c.l.b16 %v59
  %v108 = vunpack.c.l.b16 %v60
  %v109 = vunpack.c.l.b16 %v61
  %v110 = vunpack.c.l.b16 %v62
  %v111 = vunpack.c.l.b16 %v63
  %v112 = vunpack.c.l.b16 %v64
  %v113 = vunpack.c.l.b16 %v65
  %v114 = vpack.c.b16 %v99, %v98
  %v115 = vpack.c.b16 %v101, %v100
  %v116 = vpack.c.b16 %v103, %v102
  %v117 = vpack.c.b16 %v105, %v104
  %v118 = vpack.c.b16 %v107, %v106
  %v119 = vpack.c.b16 %v109, %v108
  %v120 = vpack.c.b16 %v111, %v110
  %v121 = vpack.c.b16 %v113, %v112
  %v146 = vunpack.c.l.b16 %v66
  %v147 = vunpack.c.l.b16 %v67
  %v148 = vunpack.c.l.b16 %v68
  %v149 = vunpack.c.l.b16 %v69
  %v150 = vunpack.c.l.b16 %v70
  %v151 = vunpack.c.l.b16 %v71
  %v152 = vunpack.c.l.b16 %v72
  %v153 = vunpack.c.l.b16 %v73
  %v154 = vunpack.c.l.b16 %v74
  %v155 = vunpack.c.l.b16 %v75
  %v156 = vunpack.c.l.b16 %v76
  %v157 = vunpack.c.l.b16 %v77
  %v158 = vunpack.c.l.b16 %v78
  %v159 = vunpack.c.l.b16 %v79
  %v160 = vunpack.c.l.b16 %v80
  %v161 = vunpack.c.l.b16 %v81
  %v162 = vpack.c.b16 %v147, %v146
  %v163 = vpack.c.b16 %v149, %v148
  %v164 = vpack.c.b16 %v151, %v150
  %v165 = vpack.c.b16 %v153, %v152
  %v166 = vpack.c.b16 %v155, %v154
  %v167 = vpack.c.b16 %v157, %v156
  %v168 = vpack.c.b16 %v159, %v158
  %v169 = vpack.c.b16 %v161, %v160
  %178 = vmatpush.bf16.msra.mxu0 %v169
  %179 = vmatpush.bf16.msra.mxu0 %v168
  %180 = vmatpush.bf16.msra.mxu0 %v167
  %181 = vmatpush.bf16.msra.mxu0 %v166
  %182 = vmatpush.bf16.msra.mxu0 %v165
  %183 = vmatpush.bf16.msra.mxu0 %v164
  %184 = vmatpush.bf16.msra.mxu0 %v163
  %185 = vmatpush.bf16.msra.mxu0 %v162
  %186 = vmatmul.bf16.gmra.mxu0 %v114
  %v187 = vpop.f32.mrf.mxu0
  %v188 = vadd.f32 0.0, %v187
  %v189 = vpop.f32.mrf.mxu0
  %v190 = vadd.f32 0.0, %v189
  %191 = vmatmul.bf16.gmra.mxu0 %v115
  %v192 = vpop.f32.mrf.mxu0
  %v193 = vadd.f32 0.0, %v192
  %v194 = vpop.f32.mrf.mxu0
  %v195 = vadd.f32 0.0, %v194
  %196 = vmatmul.bf16.gmra.mxu0 %v116
  %v197 = vpop.f32.mrf.mxu0
  %v198 = vadd.f32 0.0, %v197
  %v199 = vpop.f32.mrf.mxu0
  %v200 = vadd.f32 0.0, %v199
  %201 = vmatmul.bf16.gmra.mxu0 %v117
  %v202 = vpop.f32.mrf.mxu0
  %v203 = vadd.f32 0.0, %v202
  %v204 = vpop.f32.mrf.mxu0
  %v205 = vadd.f32 0.0, %v204
  %206 = vmatmul.bf16.gmra.mxu0 %v118
  %v207 = vpop.f32.mrf.mxu0
  %v208 = vadd.f32 0.0, %v207
  %v209 = vpop.f32.mrf.mxu0
  %v210 = vadd.f32 0.0, %v209
  %211 = vmatmul.bf16.gmra.mxu0 %v119
  %v212 = vpop.f32.mrf.mxu0
  %v213 = vadd.f32 0.0, %v212
  %v214 = vpop.f32.mrf.mxu0
  %v215 = vadd.f32 0.0, %v214
  %216 = vmatmul.bf16.gmra.mxu0 %v120
  %v217 = vpop.f32.mrf.mxu0
  %v218 = vadd.f32 0.0, %v217
  %v219 = vpop.f32.mrf.mxu0
  %v220 = vadd.f32 0.0, %v219
  %221 = vmatmul.bf16.gmra.mxu0 %v121
  %v222 = vpop.f32.mrf.mxu0
  %v223 = vadd.f32 0.0, %v222
  %v224 = vpop.f32.mrf.mxu0
  %v225 = vadd.f32 0.0, %v224
  %226 = vdwg.mxu0
  %v227 = vadd.f32 %v34, %v188
  %v228 = vadd.f32 %v35, %v190
  %v229 = vadd.f32 %v36, %v193
  %v230 = vadd.f32 %v37, %v195
  %v231 = vadd.f32 %v38, %v198
  %v232 = vadd.f32 %v39, %v200
  %v233 = vadd.f32 %v40, %v203
  %v234 = vadd.f32 %v41, %v205
  %v235 = vadd.f32 %v42, %v208
  %v236 = vadd.f32 %v43, %v210
  %v237 = vadd.f32 %v44, %v213
  %v238 = vadd.f32 %v45, %v215
  %v239 = vadd.f32 %v46, %v218
  %v240 = vadd.f32 %v47, %v220
  %v241 = vadd.f32 %v48, %v223
  %v242 = vadd.f32 %v49, %v225
  %243 = vst [vmem:[#allocation2] sm:$0xff] %v227
  %244 = vst [vmem:[#allocation2 + $0x8] sm:$0xff] %v228
  %245 = vst [vmem:[#allocation2 + $0x10] sm:$0xff] %v229
  %246 = vst [vmem:[#allocation2 + $0x18] sm:$0xff] %v230
  %247 = vst [vmem:[#allocation2 + $0x20] sm:$0xff] %v231
  %248 = vst [vmem:[#allocation2 + $0x28] sm:$0xff] %v232
  %249 = vst [vmem:[#allocation2 + $0x30] sm:$0xff] %v233
  %250 = vst [vmem:[#allocation2 + $0x38] sm:$0xff] %v234
  %251 = vst [vmem:[#allocation2 + $0x40] sm:$0xff] %v235
  %252 = vst [vmem:[#allocation2 + $0x48] sm:$0xff] %v236
  %253 = vst [vmem:[#allocation2 + $0x50] sm:$0xff] %v237
  %254 = vst [vmem:[#allocation2 + $0x58] sm:$0xff] %v238
  %255 = vst [vmem:[#allocation2 + $0x60] sm:$0xff] %v239
  %256 = vst [vmem:[#allocation2 + $0x68] sm:$0xff] %v240
  %257 = vst [vmem:[#allocation2 + $0x70] sm:$0xff] %v241
  %258 = vst [vmem:[#allocation2 + $0x78] sm:$0xff] %v242
  // Predicated region
  $region18: #{unet_generator_forward.5} parent=0 // pred_check
    %p259 = pneg %p14
  $region19: #{unet_generator_forward.5} parent=0 // pred_check_branch
    %261 = sbr.rel (%p259) target = $region21
  $region20: #{unet_generator_forward.5} parent=0 // pred_region
    %v262 = vld [vmem:[#allocation2] sm:$0xff]
    %v263 = vld [vmem:[#allocation2 + $0x8] sm:$0xff]
    %v264 = vld [vmem:[#allocation2 + $0x10] sm:$0xff]
    %v265 = vld [vmem:[#allocation2 + $0x18] sm:$0xff]
    %v266 = vld [vmem:[#allocation2 + $0x20] sm:$0xff]
    %v267 = vld [vmem:[#allocation2 + $0x28] sm:$0xff]
    %v268 = vld [vmem:[#allocation2 + $0x30] sm:$0xff]
    %v269 = vld [vmem:[#allocation2 + $0x38] sm:$0xff]
    %v270 = vld [vmem:[#allocation2 + $0x40] sm:$0xff]
    %v271 = vld [vmem:[#allocation2 + $0x48] sm:$0xff]
    %v272 = vld [vmem:[#allocation2 + $0x50] sm:$0xff]
    %v273 = vld [vmem:[#allocation2 + $0x58] sm:$0xff]
    %v274 = vld [vmem:[#allocation2 + $0x60] sm:$0xff]
    %v275 = vld [vmem:[#allocation2 + $0x68] sm:$0xff]
    %v276 = vld [vmem:[#allocation2 + $0x70] sm:$0xff]
    %v277 = vld [vmem:[#allocation2 + $0x78] sm:$0xff]
    %v278 = vld [vmem:[%s2] sm:$0x1]
    %v280 = vperm.slane %v278, 0
    %v282 = vadd.f32 %v262, %v280
    %v283 = vadd.f32 %v263, %v280
    %v284 = vadd.f32 %v264, %v280
    %v285 = vadd.f32 %v265, %v280
    %v286 = vadd.f32 %v266, %v280
    %v287 = vadd.f32 %v267, %v280
    %v288 = vadd.f32 %v268, %v280
    %v289 = vadd.f32 %v269, %v280
    %v290 = vadd.f32 %v270, %v280
    %v291 = vadd.f32 %v271, %v280
    %v292 = vadd.f32 %v272, %v280
    %v293 = vadd.f32 %v273, %v280
    %v294 = vadd.f32 %v274, %v280
    %v295 = vadd.f32 %v275, %v280
    %v296 = vadd.f32 %v276, %v280
    %v297 = vadd.f32 %v277, %v280
    %vm298 = vcmp.ge.f32.partialorder %v282, 0.0
    %vm299 = vcmp.ge.f32.partialorder %v283, 0.0
    %vm300 = vcmp.ge.f32.partialorder %v284, 0.0
    %vm301 = vcmp.ge.f32.partialorder %v285, 0.0
    %vm302 = vcmp.ge.f32.partialorder %v286, 0.0
    %vm303 = vcmp.ge.f32.partialorder %v287, 0.0
    %vm304 = vcmp.ge.f32.partialorder %v288, 0.0
    %vm305 = vcmp.ge.f32.partialorder %v289, 0.0
    %vm306 = vcmp.ge.f32.partialorder %v290, 0.0
    %vm307 = vcmp.ge.f32.partialorder %v291, 0.0
    %vm308 = vcmp.ge.f32.partialorder %v292, 0.0
    %vm309 = vcmp.ge.f32.partialorder %v293, 0.0
    %vm310 = vcmp.ge.f32.partialorder %v294, 0.0
    %vm311 = vcmp.ge.f32.partialorder %v295, 0.0
    %vm312 = vcmp.ge.f32.partialorder %v296, 0.0
    %vm313 = vcmp.ge.f32.partialorder %v297, 0.0
    %v314 = vmul.f32 %v282, 0.2
    %v315 = vmul.f32 %v283, 0.2
    %v316 = vmul.f32 %v284, 0.2
    %v317 = vmul.f32 %v285, 0.2
    %v318 = vmul.f32 %v286, 0.2
    %v319 = vmul.f32 %v287, 0.2
    %v320 = vmul.f32 %v288, 0.2
    %v321 = vmul.f32 %v289, 0.2
    %v322 = vmul.f32 %v290, 0.2
    %v323 = vmul.f32 %v291, 0.2
    %v324 = vmul.f32 %v292, 0.2
    %v325 = vmul.f32 %v293, 0.2
    %v326 = vmul.f32 %v294, 0.2
    %v327 = vmul.f32 %v295, 0.2
    %v328 = vmul.f32 %v296, 0.2
    %v329 = vmul.f32 %v297, 0.2
    %v330 = vsel %vm298, %v282, %v314
    %v331 = vsel %vm299, %v283, %v315
    %v332 = vsel %vm300, %v284, %v316
    %v333 = vsel %vm301, %v285, %v317
    %v334 = vsel %vm302, %v286, %v318
    %v335 = vsel %vm303, %v287, %v319
    %v336 = vsel %vm304, %v288, %v320
    %v337 = vsel %vm305, %v289, %v321
    %v338 = vsel %vm306, %v290, %v322
    %v339 = vsel %vm307, %v291, %v323
    %v340 = vsel %vm308, %v292, %v324
    %v341 = vsel %vm309, %v293, %v325
    %v342 = vsel %vm310, %v294, %v326
    %v343 = vsel %vm311, %v295, %v327
    %v344 = vsel %vm312, %v296, %v328
    %v345 = vsel %vm313, %v297, %v329
    %v346 = vpack.c.bf16 %v330, %v330
    %v347 = vpack.c.bf16 %v331, %v331
    %v348 = vpack.c.bf16 %v332, %v332
    %v349 = vpack.c.bf16 %v333, %v333
    %v350 = vpack.c.bf16 %v334, %v334
    %v351 = vpack.c.bf16 %v335, %v335
    %v352 = vpack.c.bf16 %v336, %v336
    %v353 = vpack.c.bf16 %v337, %v337
    %v354 = vpack.c.bf16 %v338, %v338
    %v355 = vpack.c.bf16 %v339, %v339
    %v356 = vpack.c.bf16 %v340, %v340
    %v357 = vpack.c.bf16 %v341, %v341
    %v358 = vpack.c.bf16 %v342, %v342
    %v359 = vpack.c.bf16 %v343, %v343
    %v360 = vpack.c.bf16 %v344, %v344
    %v361 = vpack.c.bf16 %v345, %v345
    %362 = vst [vmem:[%s3] sm:$0xf] %v346
    %363 = vst [vmem:[%s3 + $0x4] sm:$0xf] %v347
    %364 = vst [vmem:[%s3 + $0x8] sm:$0xf] %v348
    %365 = vst [vmem:[%s3 + $0xc] sm:$0xf] %v349
    %366 = vst [vmem:[%s3 + $0x10] sm:$0xf] %v350
    %367 = vst [vmem:[%s3 + $0x14] sm:$0xf] %v351
    %368 = vst [vmem:[%s3 + $0x18] sm:$0xf] %v352
    %369 = vst [vmem:[%s3 + $0x1c] sm:$0xf] %v353
    %370 = vst [vmem:[%s3 + $0x20] sm:$0xf] %v354
    %371 = vst [vmem:[%s3 + $0x24] sm:$0xf] %v355
    %372 = vst [vmem:[%s3 + $0x28] sm:$0xf] %v356
    %373 = vst [vmem:[%s3 + $0x2c] sm:$0xf] %v357
    %374 = vst [vmem:[%s3 + $0x30] sm:$0xf] %v358
    %375 = vst [vmem:[%s3 + $0x34] sm:$0xf] %v359
    %376 = vst [vmem:[%s3 + $0x38] sm:$0xf] %v360
    %377 = vst [vmem:[%s3 + $0x3c] sm:$0xf] %v361
  $region21: #{unet_generator_forward.5} parent=0 // pred_fallthru
    _
  // Predicated region
  $region22: #{unet_generator_forward.5} parent=0 // pred_check
    _
  $region23: #{unet_generator_forward.5} parent=0 // pred_check_branch
    %379 = sbr.rel (0) target = $region25
  $region24: #{unet_generator_forward.5} parent=0 // pred_region
    _
  $region25: #{unet_generator_forward.5} parent=0 // pred_fallthru
    _
  // Predicated region
  $region26: #{unet_generator_forward.5} parent=0 // pred_check
    _
  $region27: #{unet_generator_forward.5} parent=0 // pred_check_branch
    %381 = sbr.rel (0) target = $region29
  $region28: #{unet_generator_forward.5} parent=0 // pred_region
    _
  $region29: #{unet_generator_forward.5} parent=0 // pred_fallthru
    _

// kernel: unet_generator_forward.7
$region0: #{unet_generator_forward.7}
  #allocation0 [shape = 'u32[]', space=smem, size = 0x4, offset = 0x4, fixed_abs, tag = 'smem constant byte address 0x4 - core index']
  #allocation1 [shape = 'u32[72,128]{1,0:T(1,128)}', space=vmem, size = 0x9000, scoped, tag = 'internal scratch']
  %s0 = inlined_call_operand.vmem [shape: bf16[32,128], index: 0, kind: input, shape index: {}]
  %s1 = inlined_call_operand.vmem [shape: f32[1,128], index: 1, kind: input, shape index: {}]
  %s2 = inlined_call_operand.vmem [shape: f32[1,128], index: 2, kind: input, shape index: {}]
  %s3 = inlined_call_operand.vmem [shape: bf16[32,128], index: 3, kind: output, shape index: {}]
  %s4 = sld [smem:[#allocation0]]
  $region22: #{unet_generator_forward.7} parent=0
    _
  %s6 = ssub.s32 1, %s4
  %s7 = scalar_select 0, %s6, %s4
  // Predicated region
  $region2: #{unet_generator_forward.7} parent=0 // pred_check
    _
  $region3: #{unet_generator_forward.7} parent=0 // pred_check_branch
    %9 = sbr.rel (0) target = $region5
  $region4: #{unet_generator_forward.7} parent=0 // pred_region
    _
  $region5: #{unet_generator_forward.7} parent=0 // pred_fallthru
    _
  // Predicated region
  $region6: #{unet_generator_forward.7} parent=0 // pred_check
    _
  $region7: #{unet_generator_forward.7} parent=0 // pred_check_branch
    %11 = sbr.rel (0) target = $region9
  $region8: #{unet_generator_forward.7} parent=0 // pred_region
    _
  $region9: #{unet_generator_forward.7} parent=0 // pred_fallthru
    _
  // Predicated region
  $region10: #{unet_generator_forward.7} parent=0 // pred_check
    _
  $region11: #{unet_generator_forward.7} parent=0 // pred_check_branch
    %13 = sbr.rel (0) target = $region13
  $region12: #{unet_generator_forward.7} parent=0 // pred_region
    _
  $region13: #{unet_generator_forward.7} parent=0 // pred_fallthru
    _
  %v14 = vld [vmem:[%s0] sm:$0xf]
  %v15 = vld [vmem:[%s0 + $0x4] sm:$0xf]
  %v16 = vld [vmem:[%s0 + $0x8] sm:$0xf]
  %v17 = vld [vmem:[%s0 + $0xc] sm:$0xf]
  %v18 = vunpack.c.l.bf16 %v14
  %v19 = vunpack.c.l.bf16 %v15
  %v20 = vunpack.c.l.bf16 %v16
  %v21 = vunpack.c.l.bf16 %v17
  %v22 = vld [vmem:[%s1] sm:$0x1]
  %v24 = vperm.slane %v22, 0
  %v26 = vmul.f32 %v18, %v24
  %v27 = vmul.f32 %v19, %v24
  %v28 = vmul.f32 %v20, %v24
  %v29 = vmul.f32 %v21, %v24
  %v30 = vld [vmem:[%s2] sm:$0x1]
  %v32 = vperm.slane %v30, 0
  %v34 = vadd.f32 %v26, %v32
  %v35 = vadd.f32 %v27, %v32
  %v36 = vadd.f32 %v28, %v32
  %v37 = vadd.f32 %v29, %v32
  %vm38 = vcmp.ge.f32.partialorder %v34, 0.0
  %vm39 = vcmp.ge.f32.partialorder %v35, 0.0
  %vm40 = vcmp.ge.f32.partialorder %v36, 0.0
  %vm41 = vcmp.ge.f32.partialorder %v37, 0.0
  %v42 = vmul.f32 %v34, 0.2
  %v43 = vmul.f32 %v35, 0.2
  %v44 = vmul.f32 %v36, 0.2
  %v45 = vmul.f32 %v37, 0.2
  %v46 = vsel %vm38, %v34, %v42
  %v47 = vsel %vm39, %v35, %v43
  %v48 = vsel %vm40, %v36, %v44
  %v49 = vsel %vm41, %v37, %v45
  %v50 = vpack.c.bf16 %v46, %v46
  %v51 = vpack.c.bf16 %v47, %v47
  %v52 = vpack.c.bf16 %v48, %v48
  %v53 = vpack.c.bf16 %v49, %v49
  %54 = vst [vmem:[%s3] sm:$0xf] %v50
  %55 = vst [vmem:[%s3 + $0x4] sm:$0xf] %v51
  %56 = vst [vmem:[%s3 + $0x8] sm:$0xf] %v52
  %57 = vst [vmem:[%s3 + $0xc] sm:$0xf] %v53
  // Predicated region
  $region14: #{unet_generator_forward.7} parent=0 // pred_check
    _
  $region15: #{unet_generator_forward.7} parent=0 // pred_check_branch
    %59 = sbr.rel (0) target = $region17
  $region16: #{unet_generator_forward.7} parent=0 // pred_region
    _
  $region17: #{unet_generator_forward.7} parent=0 // pred_fallthru
    _
  // Predicated region
  $region18: #{unet_generator_forward.7} parent=0 // pred_check
    _
  $region19: #{unet_generator_forward.7} parent=0 // pred_check_branch
    %61 = sbr.rel (0) target = $region21
  $region20: #{unet_generator_forward.7} parent=0 // pred_region
    _
  $region21: #{unet_generator_forward.7} parent=0 // pred_fallthru
    _

// kernel: unet_generator_forward.6
$region0: #{unet_generator_forward.6}
  #allocation0 [shape = 'u32[]', space=smem, size = 0x4, offset = 0x4, fixed_abs, tag = 'smem constant byte address 0x4 - core index']
  #allocation1 [shape = 'u32[72,128]{1,0:T(1,128)}', space=vmem, size = 0x9000, scoped, tag = 'internal scratch']
  #allocation2 [shape = 'f32[32,128]{1,0:T(8,128)}', space=vmem, size = 0x4000, scoped, tag = 'scratch operand']
  %s0 = inlined_call_operand.vmem [shape: bf16[32,1024], index: 0, kind: input, shape index: {}]
  %s1 = inlined_call_operand.vmem [shape: bf16[1024,128], index: 1, kind: input, shape index: {}]
  %s2 = inlined_call_operand.vmem [shape: f32[1,128], index: 2, kind: input, shape index: {}]
  %s3 = inlined_call_operand.vmem [shape: bf16[32,128], index: 3, kind: output, shape index: {0}]
  %s4 = inlined_call_operand.vmem [shape: f32[1,128], index: 4, kind: output, shape index: {1}]
  %s5 = inlined_call_operand.vmem [shape: f32[1,128], index: 5, kind: output, shape index: {2}]
  %6 = xla_tuple %s3, %s4, %s5
  %s7 = sld [smem:[#allocation0]]
  $region50: #{unet_generator_forward.6} parent=0
    _
  %s9 = ssub.s32 1, %s7
  %s10 = scalar_select 0, %s9, %s7
  // Predicated region
  $region2: #{unet_generator_forward.6} parent=0 // pred_check
    _
  $region3: #{unet_generator_forward.6} parent=0 // pred_check_branch
    %12 = sbr.rel (0) target = $region5
  $region4: #{unet_generator_forward.6} parent=0 // pred_region
    _
  $region5: #{unet_generator_forward.6} parent=0 // pred_fallthru
    _
  // Predicated region
  $region6: #{unet_generator_forward.6} parent=0 // pred_check
    _
  $region7: #{unet_generator_forward.6} parent=0 // pred_check_branch
    %14 = sbr.rel (0) target = $region9
  $region8: #{unet_generator_forward.6} parent=0 // pred_region
    _
  $region9: #{unet_generator_forward.6} parent=0 // pred_fallthru
    _
  // Predicated region
  $region10: #{unet_generator_forward.6} parent=0 // pred_check
    _
  $region11: #{unet_generator_forward.6} parent=0 // pred_check_branch
    %16 = sbr.rel (0) target = $region13
  $region12: #{unet_generator_forward.6} parent=0 // pred_region
    _
  $region13: #{unet_generator_forward.6} parent=0 // pred_fallthru
    _
  %p17 = scmp.eq.s32.totalorder 0, 0
  // Predicated region
  $region14: #{unet_generator_forward.6} parent=0 // pred_check
    %p18 = pneg %p17
  $region15: #{unet_generator_forward.6} parent=0 // pred_check_branch
    %20 = sbr.rel (%p18) target = $region17
  $region16: #{unet_generator_forward.6} parent=0 // pred_region
    %21 = vst [vmem:[#allocation2] sm:$0xff] 0.0
    %22 = vst [vmem:[#allocation2 + $0x8] sm:$0xff] 0.0
    %23 = vst [vmem:[#allocation2 + $0x10] sm:$0xff] 0.0
    %24 = vst [vmem:[#allocation2 + $0x18] sm:$0xff] 0.0
  $region17: #{unet_generator_forward.6} parent=0 // pred_fallthru
    _
  %p25 = scmp.eq.s32.totalorder 0, 0
  %p26 = pnand %p17, %p25
  %p27 = pneg %p26
  // Predicated region
  $region18: #{unet_generator_forward.6} parent=0 // pred_check
    _
  $region19: #{unet_generator_forward.6} parent=0 // pred_check_branch
    %29 = sbr.rel (%p26) target = $region21
  $region20: #{unet_generator_forward.6} parent=0 // pred_region
    %30 = vst [vmem:[%s4] sm:$0x1] 0.0
    %31 = vst [vmem:[%s5] sm:$0x1] 0.0
  $region21: #{unet_generator_forward.6} parent=0 // pred_fallthru
    _
  %v32 = vld [vmem:[#allocation2] sm:$0xff]
  %v33 = vld [vmem:[#allocation2 + $0x8] sm:$0xff]
  %v34 = vld [vmem:[#allocation2 + $0x10] sm:$0xff]
  %v35 = vld [vmem:[#allocation2 + $0x18] sm:$0xff]
  %v36 = vld [vmem:[%s0] sm:$0xff]
  %v37 = vld [vmem:[%s0 + $0x8] sm:$0xff]
  %v38 = vld [vmem:[%s0 + $0x10] sm:$0xff]
  %v39 = vld [vmem:[%s0 + $0x18] sm:$0xff]
  %v40 = vld [vmem:[%s0 + $0x20] sm:$0xff]
  %v41 = vld [vmem:[%s0 + $0x28] sm:$0xff]
  %v42 = vld [vmem:[%s0 + $0x30] sm:$0xff]
  %v43 = vld [vmem:[%s0 + $0x38] sm:$0xff]
  %v44 = vld [vmem:[%s0 + $0x40] sm:$0xff]
  %v45 = vld [vmem:[%s0 + $0x48] sm:$0xff]
  %v46 = vld [vmem:[%s0 + $0x50] sm:$0xff]
  %v47 = vld [vmem:[%s0 + $0x58] sm:$0xff]
  %v48 = vld [vmem:[%s0 + $0x60] sm:$0xff]
  %v49 = vld [vmem:[%s0 + $0x68] sm:$0xff]
  %v50 = vld [vmem:[%s0 + $0x70] sm:$0xff]
  %v51 = vld [vmem:[%s0 + $0x78] sm:$0xff]
  %v52 = vld [vmem:[%s1] sm:$0xf]
  %v53 = vld [vmem:[%s1 + $0x4] sm:$0xf]
  %v54 = vld [vmem:[%s1 + $0x8] sm:$0xf]
  %v55 = vld [vmem:[%s1 + $0xc] sm:$0xf]
  %v56 = vld [vmem:[%s1 + $0x10] sm:$0xf]
  %v57 = vld [vmem:[%s1 + $0x14] sm:$0xf]
  %v58 = vld [vmem:[%s1 + $0x18] sm:$0xf]
  %v59 = vld [vmem:[%s1 + $0x1c] sm:$0xf]
  %v60 = vld [vmem:[%s1 + $0x20] sm:$0xf]
  %v61 = vld [vmem:[%s1 + $0x24] sm:$0xf]
  %v62 = vld [vmem:[%s1 + $0x28] sm:$0xf]
  %v63 = vld [vmem:[%s1 + $0x2c] sm:$0xf]
  %v64 = vld [vmem:[%s1 + $0x30] sm:$0xf]
  %v65 = vld [vmem:[%s1 + $0x34] sm:$0xf]
  %v66 = vld [vmem:[%s1 + $0x38] sm:$0xf]
  %v67 = vld [vmem:[%s1 + $0x3c] sm:$0xf]
  %v68 = vld [vmem:[%s1 + $0x40] sm:$0xf]
  %v69 = vld [vmem:[%s1 + $0x44] sm:$0xf]
  %v70 = vld [vmem:[%s1 + $0x48] sm:$0xf]
  %v71 = vld [vmem:[%s1 + $0x4c] sm:$0xf]
  %v72 = vld [vmem:[%s1 + $0x50] sm:$0xf]
  %v73 = vld [vmem:[%s1 + $0x54] sm:$0xf]
  %v74 = vld [vmem:[%s1 + $0x58] sm:$0xf]
  %v75 = vld [vmem:[%s1 + $0x5c] sm:$0xf]
  %v76 = vld [vmem:[%s1 + $0x60] sm:$0xf]
  %v77 = vld [vmem:[%s1 + $0x64] sm:$0xf]
  %v78 = vld [vmem:[%s1 + $0x68] sm:$0xf]
  %v79 = vld [vmem:[%s1 + $0x6c] sm:$0xf]
  %v80 = vld [vmem:[%s1 + $0x70] sm:$0xf]
  %v81 = vld [vmem:[%s1 + $0x74] sm:$0xf]
  %v82 = vld [vmem:[%s1 + $0x78] sm:$0xf]
  %v83 = vld [vmem:[%s1 + $0x7c] sm:$0xf]
  %v84 = vld [vmem:[%s1 + $0x80] sm:$0xf]
  %v85 = vld [vmem:[%s1 + $0x84] sm:$0xf]
  %v86 = vld [vmem:[%s1 + $0x88] sm:$0xf]
  %v87 = vld [vmem:[%s1 + $0x8c] sm:$0xf]
  %v88 = vld [vmem:[%s1 + $0x90] sm:$0xf]
  %v89 = vld [vmem:[%s1 + $0x94] sm:$0xf]
  %v90 = vld [vmem:[%s1 + $0x98] sm:$0xf]
  %v91 = vld [vmem:[%s1 + $0x9c] sm:$0xf]
  %v92 = vld [vmem:[%s1 + $0xa0] sm:$0xf]
  %v93 = vld [vmem:[%s1 + $0xa4] sm:$0xf]
  %v94 = vld [vmem:[%s1 + $0xa8] sm:$0xf]
  %v95 = vld [vmem:[%s1 + $0xac] sm:$0xf]
  %v96 = vld [vmem:[%s1 + $0xb0] sm:$0xf]
  %v97 = vld [vmem:[%s1 + $0xb4] sm:$0xf]
  %v98 = vld [vmem:[%s1 + $0xb8] sm:$0xf]
  %v99 = vld [vmem:[%s1 + $0xbc] sm:$0xf]
  %v100 = vld [vmem:[%s1 + $0xc0] sm:$0xf]
  %v101 = vld [vmem:[%s1 + $0xc4] sm:$0xf]
  %v102 = vld [vmem:[%s1 + $0xc8] sm:$0xf]
  %v103 = vld [vmem:[%s1 + $0xcc] sm:$0xf]
  %v104 = vld [vmem:[%s1 + $0xd0] sm:$0xf]
  %v105 = vld [vmem:[%s1 + $0xd4] sm:$0xf]
  %v106 = vld [vmem:[%s1 + $0xd8] sm:$0xf]
  %v107 = vld [vmem:[%s1 + $0xdc] sm:$0xf]
  %v108 = vld [vmem:[%s1 + $0xe0] sm:$0xf]
  %v109 = vld [vmem:[%s1 + $0xe4] sm:$0xf]
  %v110 = vld [vmem:[%s1 + $0xe8] sm:$0xf]
  %v111 = vld [vmem:[%s1 + $0xec] sm:$0xf]
  %v112 = vld [vmem:[%s1 + $0xf0] sm:$0xf]
  %v113 = vld [vmem:[%s1 + $0xf4] sm:$0xf]
  %v114 = vld [vmem:[%s1 + $0xf8] sm:$0xf]
  %v115 = vld [vmem:[%s1 + $0xfc] sm:$0xf]
  %v116 = vld [vmem:[%s1 + $0x100] sm:$0xf]
  %v117 = vld [vmem:[%s1 + $0x104] sm:$0xf]
  %v118 = vld [vmem:[%s1 + $0x108] sm:$0xf]
  %v119 = vld [vmem:[%s1 + $0x10c] sm:$0xf]
  %v120 = vld [vmem:[%s1 + $0x110] sm:$0xf]
  %v121 = vld [vmem:[%s1 + $0x114] sm:$0xf]
  %v122 = vld [vmem:[%s1 + $0x118] sm:$0xf]
  %v123 = vld [vmem:[%s1 + $0x11c] sm:$0xf]
  %v124 = vld [vmem:[%s1 + $0x120] sm:$0xf]
  %v125 = vld [vmem:[%s1 + $0x124] sm:$0xf]
  %v126 = vld [vmem:[%s1 + $0x128] sm:$0xf]
  %v127 = vld [vmem:[%s1 + $0x12c] sm:$0xf]
  %v128 = vld [vmem:[%s1 + $0x130] sm:$0xf]
  %v129 = vld [vmem:[%s1 + $0x134] sm:$0xf]
  %v130 = vld [vmem:[%s1 + $0x138] sm:$0xf]
  %v131 = vld [vmem:[%s1 + $0x13c] sm:$0xf]
  %v132 = vld [vmem:[%s1 + $0x140] sm:$0xf]
  %v133 = vld [vmem:[%s1 + $0x144] sm:$0xf]
  %v134 = vld [vmem:[%s1 + $0x148] sm:$0xf]
  %v135 = vld [vmem:[%s1 + $0x14c] sm:$0xf]
  %v136 = vld [vmem:[%s1 + $0x150] sm:$0xf]
  %v137 = vld [vmem:[%s1 + $0x154] sm:$0xf]
  %v138 = vld [vmem:[%s1 + $0x158] sm:$0xf]
  %v139 = vld [vmem:[%s1 + $0x15c] sm:$0xf]
  %v140 = vld [vmem:[%s1 + $0x160] sm:$0xf]
  %v141 = vld [vmem:[%s1 + $0x164] sm:$0xf]
  %v142 = vld [vmem:[%s1 + $0x168] sm:$0xf]
  %v143 = vld [vmem:[%s1 + $0x16c] sm:$0xf]
  %v144 = vld [vmem:[%s1 + $0x170] sm:$0xf]
  %v145 = vld [vmem:[%s1 + $0x174] sm:$0xf]
  %v146 = vld [vmem:[%s1 + $0x178] sm:$0xf]
  %v147 = vld [vmem:[%s1 + $0x17c] sm:$0xf]
  %v148 = vld [vmem:[%s1 + $0x180] sm:$0xf]
  %v149 = vld [vmem:[%s1 + $0x184] sm:$0xf]
  %v150 = vld [vmem:[%s1 + $0x188] sm:$0xf]
  %v151 = vld [vmem:[%s1 + $0x18c] sm:$0xf]
  %v152 = vld [vmem:[%s1 + $0x190] sm:$0xf]
  %v153 = vld [vmem:[%s1 + $0x194] sm:$0xf]
  %v154 = vld [vmem:[%s1 + $0x198] sm:$0xf]
  %v155 = vld [vmem:[%s1 + $0x19c] sm:$0xf]
  %v156 = vld [vmem:[%s1 + $0x1a0] sm:$0xf]
  %v157 = vld [vmem:[%s1 + $0x1a4] sm:$0xf]
  %v158 = vld [vmem:[%s1 + $0x1a8] sm:$0xf]
  %v159 = vld [vmem:[%s1 + $0x1ac] sm:$0xf]
  %v160 = vld [vmem:[%s1 + $0x1b0] sm:$0xf]
  %v161 = vld [vmem:[%s1 + $0x1b4] sm:$0xf]
  %v162 = vld [vmem:[%s1 + $0x1b8] sm:$0xf]
  %v163 = vld [vmem:[%s1 + $0x1bc] sm:$0xf]
  %v164 = vld [vmem:[%s1 + $0x1c0] sm:$0xf]
  %v165 = vld [vmem:[%s1 + $0x1c4] sm:$0xf]
  %v166 = vld [vmem:[%s1 + $0x1c8] sm:$0xf]
  %v167 = vld [vmem:[%s1 + $0x1cc] sm:$0xf]
  %v168 = vld [vmem:[%s1 + $0x1d0] sm:$0xf]
  %v169 = vld [vmem:[%s1 + $0x1d4] sm:$0xf]
  %v170 = vld [vmem:[%s1 + $0x1d8] sm:$0xf]
  %v171 = vld [vmem:[%s1 + $0x1dc] sm:$0xf]
  %v172 = vld [vmem:[%s1 + $0x1e0] sm:$0xf]
  %v173 = vld [vmem:[%s1 + $0x1e4] sm:$0xf]
  %v174 = vld [vmem:[%s1 + $0x1e8] sm:$0xf]
  %v175 = vld [vmem:[%s1 + $0x1ec] sm:$0xf]
  %v176 = vld [vmem:[%s1 + $0x1f0] sm:$0xf]
  %v177 = vld [vmem:[%s1 + $0x1f4] sm:$0xf]
  %v178 = vld [vmem:[%s1 + $0x1f8] sm:$0xf]
  %v179 = vld [vmem:[%s1 + $0x1fc] sm:$0xf]
  %v196 = vunpack.c.l.b16 %v36
  %v197 = vunpack.c.h.b16 %v36
  %v198 = vunpack.c.l.b16 %v37
  %v199 = vunpack.c.h.b16 %v37
  %v200 = vunpack.c.l.b16 %v38
  %v201 = vunpack.c.h.b16 %v38
  %v202 = vunpack.c.l.b16 %v39
  %v203 = vunpack.c.h.b16 %v39
  %v204 = vunpack.c.l.b16 %v40
  %v205 = vunpack.c.h.b16 %v40
  %v206 = vunpack.c.l.b16 %v41
  %v207 = vunpack.c.h.b16 %v41
  %v208 = vunpack.c.l.b16 %v42
  %v209 = vunpack.c.h.b16 %v42
  %v210 = vunpack.c.l.b16 %v43
  %v211 = vunpack.c.h.b16 %v43
  %v212 = vunpack.c.l.b16 %v44
  %v213 = vunpack.c.h.b16 %v44
  %v214 = vunpack.c.l.b16 %v45
  %v215 = vunpack.c.h.b16 %v45
  %v216 = vunpack.c.l.b16 %v46
  %v217 = vunpack.c.h.b16 %v46
  %v218 = vunpack.c.l.b16 %v47
  %v219 = vunpack.c.h.b16 %v47
  %v220 = vunpack.c.l.b16 %v48
  %v221 = vunpack.c.h.b16 %v48
  %v222 = vunpack.c.l.b16 %v49
  %v223 = vunpack.c.h.b16 %v49
  %v224 = vunpack.c.l.b16 %v50
  %v225 = vunpack.c.h.b16 %v50
  %v226 = vunpack.c.l.b16 %v51
  %v227 = vunpack.c.h.b16 %v51
  %v228 = vpack.c.b16 %v204, %v196
  %v229 = vpack.c.b16 %v205, %v197
  %v230 = vpack.c.b16 %v206, %v198
  %v231 = vpack.c.b16 %v207, %v199
  %v232 = vpack.c.b16 %v208, %v200
  %v233 = vpack.c.b16 %v209, %v201
  %v234 = vpack.c.b16 %v210, %v202
  %v235 = vpack.c.b16 %v211, %v203
  %v236 = vpack.c.b16 %v220, %v212
  %v237 = vpack.c.b16 %v221, %v213
  %v238 = vpack.c.b16 %v222, %v214
  %v239 = vpack.c.b16 %v223, %v215
  %v240 = vpack.c.b16 %v224, %v216
  %v241 = vpack.c.b16 %v225, %v217
  %v242 = vpack.c.b16 %v226, %v218
  %v243 = vpack.c.b16 %v227, %v219
  %v388 = vunpack.c.l.b16 %v52
  %v389 = vunpack.c.l.b16 %v53
  %v390 = vunpack.c.l.b16 %v54
  %v391 = vunpack.c.l.b16 %v55
  %v392 = vunpack.c.l.b16 %v56
  %v393 = vunpack.c.l.b16 %v57
  %v394 = vunpack.c.l.b16 %v58
  %v395 = vunpack.c.l.b16 %v59
  %v396 = vunpack.c.l.b16 %v60
  %v397 = vunpack.c.l.b16 %v61
  %v398 = vunpack.c.l.b16 %v62
  %v399 = vunpack.c.l.b16 %v63
  %v400 = vunpack.c.l.b16 %v64
  %v401 = vunpack.c.l.b16 %v65
  %v402 = vunpack.c.l.b16 %v66
  %v403 = vunpack.c.l.b16 %v67
  %v404 = vunpack.c.l.b16 %v68
  %v405 = vunpack.c.l.b16 %v69
  %v406 = vunpack.c.l.b16 %v70
  %v407 = vunpack.c.l.b16 %v71
  %v408 = vunpack.c.l.b16 %v72
  %v409 = vunpack.c.l.b16 %v73
  %v410 = vunpack.c.l.b16 %v74
  %v411 = vunpack.c.l.b16 %v75
  %v412 = vunpack.c.l.b16 %v76
  %v413 = vunpack.c.l.b16 %v77
  %v414 = vunpack.c.l.b16 %v78
  %v415 = vunpack.c.l.b16 %v79
  %v416 = vunpack.c.l.b16 %v80
  %v417 = vunpack.c.l.b16 %v81
  %v418 = vunpack.c.l.b16 %v82
  %v419 = vunpack.c.l.b16 %v83
  %v420 = vunpack.c.l.b16 %v84
  %v421 = vunpack.c.l.b16 %v85
  %v422 = vunpack.c.l.b16 %v86
  %v423 = vunpack.c.l.b16 %v87
  %v424 = vunpack.c.l.b16 %v88
  %v425 = vunpack.c.l.b16 %v89
  %v426 = vunpack.c.l.b16 %v90
  %v427 = vunpack.c.l.b16 %v91
  %v428 = vunpack.c.l.b16 %v92
  %v429 = vunpack.c.l.b16 %v93
  %v430 = vunpack.c.l.b16 %v94
  %v431 = vunpack.c.l.b16 %v95
  %v432 = vunpack.c.l.b16 %v96
  %v433 = vunpack.c.l.b16 %v97
  %v434 = vunpack.c.l.b16 %v98
  %v435 = vunpack.c.l.b16 %v99
  %v436 = vunpack.c.l.b16 %v100
  %v437 = vunpack.c.l.b16 %v101
  %v438 = vunpack.c.l.b16 %v102
  %v439 = vunpack.c.l.b16 %v103
  %v440 = vunpack.c.l.b16 %v104
  %v441 = vunpack.c.l.b16 %v105
  %v442 = vunpack.c.l.b16 %v106
  %v443 = vunpack.c.l.b16 %v107
  %v444 = vunpack.c.l.b16 %v108
  %v445 = vunpack.c.l.b16 %v109
  %v446 = vunpack.c.l.b16 %v110
  %v447 = vunpack.c.l.b16 %v111
  %v448 = vunpack.c.l.b16 %v112
  %v449 = vunpack.c.l.b16 %v113
  %v450 = vunpack.c.l.b16 %v114
  %v451 = vunpack.c.l.b16 %v115
  %v452 = vunpack.c.l.b16 %v116
  %v453 = vunpack.c.l.b16 %v117
  %v454 = vunpack.c.l.b16 %v118
  %v455 = vunpack.c.l.b16 %v119
  %v456 = vunpack.c.l.b16 %v120
  %v457 = vunpack.c.l.b16 %v121
  %v458 = vunpack.c.l.b16 %v122
  %v459 = vunpack.c.l.b16 %v123
  %v460 = vunpack.c.l.b16 %v124
  %v461 = vunpack.c.l.b16 %v125
  %v462 = vunpack.c.l.b16 %v126
  %v463 = vunpack.c.l.b16 %v127
  %v464 = vunpack.c.l.b16 %v128
  %v465 = vunpack.c.l.b16 %v129
  %v466 = vunpack.c.l.b16 %v130
  %v467 = vunpack.c.l.b16 %v131
  %v468 = vunpack.c.l.b16 %v132
  %v469 = vunpack.c.l.b16 %v133
  %v470 = vunpack.c.l.b16 %v134
  %v471 = vunpack.c.l.b16 %v135
  %v472 = vunpack.c.l.b16 %v136
  %v473 = vunpack.c.l.b16 %v137
  %v474 = vunpack.c.l.b16 %v138
  %v475 = vunpack.c.l.b16 %v139
  %v476 = vunpack.c.l.b16 %v140
  %v477 = vunpack.c.l.b16 %v141
  %v478 = vunpack.c.l.b16 %v142
  %v479 = vunpack.c.l.b16 %v143
  %v480 = vunpack.c.l.b16 %v144
  %v481 = vunpack.c.l.b16 %v145
  %v482 = vunpack.c.l.b16 %v146
  %v483 = vunpack.c.l.b16 %v147
  %v484 = vunpack.c.l.b16 %v148
  %v485 = vunpack.c.l.b16 %v149
  %v486 = vunpack.c.l.b16 %v150
  %v487 = vunpack.c.l.b16 %v151
  %v488 = vunpack.c.l.b16 %v152
  %v489 = vunpack.c.l.b16 %v153
  %v490 = vunpack.c.l.b16 %v154
  %v491 = vunpack.c.l.b16 %v155
  %v492 = vunpack.c.l.b16 %v156
  %v493 = vunpack.c.l.b16 %v157
  %v494 = vunpack.c.l.b16 %v158
  %v495 = vunpack.c.l.b16 %v159
  %v496 = vunpack.c.l.b16 %v160
  %v497 = vunpack.c.l.b16 %v161
  %v498 = vunpack.c.l.b16 %v162
  %v499 = vunpack.c.l.b16 %v163
  %v500 = vunpack.c.l.b16 %v164
  %v501 = vunpack.c.l.b16 %v165
  %v502 = vunpack.c.l.b16 %v166
  %v503 = vunpack.c.l.b16 %v167
  %v504 = vunpack.c.l.b16 %v168
  %v505 = vunpack.c.l.b16 %v169
  %v506 = vunpack.c.l.b16 %v170
  %v507 = vunpack.c.l.b16 %v171
  %v508 = vunpack.c.l.b16 %v172
  %v509 = vunpack.c.l.b16 %v173
  %v510 = vunpack.c.l.b16 %v174
  %v511 = vunpack.c.l.b16 %v175
  %v512 = vunpack.c.l.b16 %v176
  %v513 = vunpack.c.l.b16 %v177
  %v514 = vunpack.c.l.b16 %v178
  %v515 = vunpack.c.l.b16 %v179
  %v516 = vpack.c.b16 %v389, %v388
  %v517 = vpack.c.b16 %v391, %v390
  %v518 = vpack.c.b16 %v393, %v392
  %v519 = vpack.c.b16 %v395, %v394
  %v520 = vpack.c.b16 %v397, %v396
  %v521 = vpack.c.b16 %v399, %v398
  %v522 = vpack.c.b16 %v401, %v400
  %v523 = vpack.c.b16 %v403, %v402
  %v524 = vpack.c.b16 %v405, %v404
  %v525 = vpack.c.b16 %v407, %v406
  %v526 = vpack.c.b16 %v409, %v408
  %v527 = vpack.c.b16 %v411, %v410
  %v528 = vpack.c.b16 %v413, %v412
  %v529 = vpack.c.b16 %v415, %v414
  %v530 = vpack.c.b16 %v417, %v416
  %v531 = vpack.c.b16 %v419, %v418
  %v532 = vpack.c.b16 %v421, %v420
  %v533 = vpack.c.b16 %v423, %v422
  %v534 = vpack.c.b16 %v425, %v424
  %v535 = vpack.c.b16 %v427, %v426
  %v536 = vpack.c.b16 %v429, %v428
  %v537 = vpack.c.b16 %v431, %v430
  %v538 = vpack.c.b16 %v433, %v432
  %v539 = vpack.c.b16 %v435, %v434
  %v540 = vpack.c.b16 %v437, %v436
  %v541 = vpack.c.b16 %v439, %v438
  %v542 = vpack.c.b16 %v441, %v440
  %v543 = vpack.c.b16 %v443, %v442
  %v544 = vpack.c.b16 %v445, %v444
  %v545 = vpack.c.b16 %v447, %v446
  %v546 = vpack.c.b16 %v449, %v448
  %v547 = vpack.c.b16 %v451, %v450
  %v548 = vpack.c.b16 %v453, %v452
  %v549 = vpack.c.b16 %v455, %v454
  %v550 = vpack.c.b16 %v457, %v456
  %v551 = vpack.c.b16 %v459, %v458
  %v552 = vpack.c.b16 %v461, %v460
  %v553 = vpack.c.b16 %v463, %v462
  %v554 = vpack.c.b16 %v465, %v464
  %v555 = vpack.c.b16 %v467, %v466
  %v556 = vpack.c.b16 %v469, %v468
  %v557 = vpack.c.b16 %v471, %v470
  %v558 = vpack.c.b16 %v473, %v472
  %v559 = vpack.c.b16 %v475, %v474
  %v560 = vpack.c.b16 %v477, %v476
  %v561 = vpack.c.b16 %v479, %v478
  %v562 = vpack.c.b16 %v481, %v480
  %v563 = vpack.c.b16 %v483, %v482
  %v564 = vpack.c.b16 %v485, %v484
  %v565 = vpack.c.b16 %v487, %v486
  %v566 = vpack.c.b16 %v489, %v488
  %v567 = vpack.c.b16 %v491, %v490
  %v568 = vpack.c.b16 %v493, %v492
  %v569 = vpack.c.b16 %v495, %v494
  %v570 = vpack.c.b16 %v497, %v496
  %v571 = vpack.c.b16 %v499, %v498
  %v572 = vpack.c.b16 %v501, %v500
  %v573 = vpack.c.b16 %v503, %v502
  %v574 = vpack.c.b16 %v505, %v504
  %v575 = vpack.c.b16 %v507, %v506
  %v576 = vpack.c.b16 %v509, %v508
  %v577 = vpack.c.b16 %v511, %v510
  %v578 = vpack.c.b16 %v513, %v512
  %v579 = vpack.c.b16 %v515, %v514
  %644 = vmatpush.bf16.msra.mxu0 %v523
  %645 = vmatpush.bf16.msra.mxu0 %v522
  %646 = vmatpush.bf16.msra.mxu0 %v521
  %647 = vmatpush.bf16.msra.mxu0 %v520
  %648 = vmatpush.bf16.msra.mxu0 %v519
  %649 = vmatpush.bf16.msra.mxu0 %v518
  %650 = vmatpush.bf16.msra.mxu0 %v517
  %651 = vmatpush.bf16.msra.mxu0 %v516
  %652 = vmatmul.bf16.gmra.mxu0 %v228
  %v653 = vpop.f32.mrf.mxu0
  %v654 = vadd.f32 0.0, %v653
  %v655 = vpop.f32.mrf.mxu0
  %v656 = vadd.f32 0.0, %v655
  %657 = vmatmul.bf16.gmra.mxu0 %v236
  %v658 = vpop.f32.mrf.mxu0
  %v659 = vadd.f32 0.0, %v658
  %v660 = vpop.f32.mrf.mxu0
  %v661 = vadd.f32 0.0, %v660
  %662 = vdwg.mxu0
  %663 = vmatpush.bf16.msra.mxu0 %v531
  %664 = vmatpush.bf16.msra.mxu0 %v530
  %665 = vmatpush.bf16.msra.mxu0 %v529
  %666 = vmatpush.bf16.msra.mxu0 %v528
  %667 = vmatpush.bf16.msra.mxu0 %v527
  %668 = vmatpush.bf16.msra.mxu0 %v526
  %669 = vmatpush.bf16.msra.mxu0 %v525
  %670 = vmatpush.bf16.msra.mxu0 %v524
  %671 = vmatmul.bf16.gmra.mxu0 %v229
  %v672 = vpop.f32.mrf.mxu0
  %v673 = vadd.f32 %v654, %v672
  %v674 = vpop.f32.mrf.mxu0
  %v675 = vadd.f32 %v656, %v674
  %676 = vmatmul.bf16.gmra.mxu0 %v237
  %v677 = vpop.f32.mrf.mxu0
  %v678 = vadd.f32 %v659, %v677
  %v679 = vpop.f32.mrf.mxu0
  %v680 = vadd.f32 %v661, %v679
  %681 = vdwg.mxu0
  %682 = vmatpush.bf16.msra.mxu0 %v539
  %683 = vmatpush.bf16.msra.mxu0 %v538
  %684 = vmatpush.bf16.msra.mxu0 %v537
  %685 = vmatpush.bf16.msra.mxu0 %v536
  %686 = vmatpush.bf16.msra.mxu0 %v535
  %687 = vmatpush.bf16.msra.mxu0 %v534
  %688 = vmatpush.bf16.msra.mxu0 %v533
  %689 = vmatpush.bf16.msra.mxu0 %v532
  %690 = vmatmul.bf16.gmra.mxu0 %v230
  %v691 = vpop.f32.mrf.mxu0
  %v692 = vadd.f32 %v673, %v691
  %v693 = vpop.f32.mrf.mxu0
  %v694 = vadd.f32 %v675, %v693
  %695 = vmatmul.bf16.gmra.mxu0 %v238
  %v696 = vpop.f32.mrf.mxu0
  %v697 = vadd.f32 %v678, %v696
  %v698 = vpop.f32.mrf.mxu0
  %v699 = vadd.f32 %v680, %v698
  %700 = vdwg.mxu0
  %701 = vmatpush.bf16.msra.mxu0 %v547
  %702 = vmatpush.bf16.msra.mxu0 %v546
  %703 = vmatpush.bf16.msra.mxu0 %v545
  %704 = vmatpush.bf16.msra.mxu0 %v544
  %705 = vmatpush.bf16.msra.mxu0 %v543
  %706 = vmatpush.bf16.msra.mxu0 %v542
  %707 = vmatpush.bf16.msra.mxu0 %v541
  %708 = vmatpush.bf16.msra.mxu0 %v540
  %709 = vmatmul.bf16.gmra.mxu0 %v231
  %v710 = vpop.f32.mrf.mxu0
  %v711 = vadd.f32 %v692, %v710
  %v712 = vpop.f32.mrf.mxu0
  %v713 = vadd.f32 %v694, %v712
  %714 = vmatmul.bf16.gmra.mxu0 %v239
  %v715 = vpop.f32.mrf.mxu0
  %v716 = vadd.f32 %v697, %v715
  %v717 = vpop.f32.mrf.mxu0
  %v718 = vadd.f32 %v699, %v717
  %719 = vdwg.mxu0
  %720 = vmatpush.bf16.msra.mxu0 %v555
  %721 = vmatpush.bf16.msra.mxu0 %v554
  %722 = vmatpush.bf16.msra.mxu0 %v553
  %723 = vmatpush.bf16.msra.mxu0 %v552
  %724 = vmatpush.bf16.msra.mxu0 %v551
  %725 = vmatpush.bf16.msra.mxu0 %v550
  %726 = vmatpush.bf16.msra.mxu0 %v549
  %727 = vmatpush.bf16.msra.mxu0 %v548
  %728 = vmatmul.bf16.gmra.mxu0 %v232
  %v729 = vpop.f32.mrf.mxu0
  %v730 = vadd.f32 %v711, %v729
  %v731 = vpop.f32.mrf.mxu0
  %v732 = vadd.f32 %v713, %v731
  %733 = vmatmul.bf16.gmra.mxu0 %v240
  %v734 = vpop.f32.mrf.mxu0
  %v735 = vadd.f32 %v716, %v734
  %v736 = vpop.f32.mrf.mxu0
  %v737 = vadd.f32 %v718, %v736
  %738 = vdwg.mxu0
  %739 = vmatpush.bf16.msra.mxu0 %v563
  %740 = vmatpush.bf16.msra.mxu0 %v562
  %741 = vmatpush.bf16.msra.mxu0 %v561
  %742 = vmatpush.bf16.msra.mxu0 %v560
  %743 = vmatpush.bf16.msra.mxu0 %v559
  %744 = vmatpush.bf16.msra.mxu0 %v558
  %745 = vmatpush.bf16.msra.mxu0 %v557
  %746 = vmatpush.bf16.msra.mxu0 %v556
  %747 = vmatmul.bf16.gmra.mxu0 %v233
  %v748 = vpop.f32.mrf.mxu0
  %v749 = vadd.f32 %v730, %v748
  %v750 = vpop.f32.mrf.mxu0
  %v751 = vadd.f32 %v732, %v750
  %752 = vmatmul.bf16.gmra.mxu0 %v241
  %v753 = vpop.f32.mrf.mxu0
  %v754 = vadd.f32 %v735, %v753
  %v755 = vpop.f32.mrf.mxu0
  %v756 = vadd.f32 %v737, %v755
  %757 = vdwg.mxu0
  %758 = vmatpush.bf16.msra.mxu0 %v571
  %759 = vmatpush.bf16.msra.mxu0 %v570
  %760 = vmatpush.bf16.msra.mxu0 %v569
  %761 = vmatpush.bf16.msra.mxu0 %v568
  %762 = vmatpush.bf16.msra.mxu0 %v567
  %763 = vmatpush.bf16.msra.mxu0 %v566
  %764 = vmatpush.bf16.msra.mxu0 %v565
  %765 = vmatpush.bf16.msra.mxu0 %v564
  %766 = vmatmul.bf16.gmra.mxu0 %v234
  %v767 = vpop.f32.mrf.mxu0
  %v768 = vadd.f32 %v749, %v767
  %v769 = vpop.f32.mrf.mxu0
  %v770 = vadd.f32 %v751, %v769
  %771 = vmatmul.bf16.gmra.mxu0 %v242
  %v772 = vpop.f32.mrf.mxu0
  %v773 = vadd.f32 %v754, %v772
  %v774 = vpop.f32.mrf.mxu0
  %v775 = vadd.f32 %v756, %v774
  %776 = vdwg.mxu0
  %777 = vmatpush.bf16.msra.mxu0 %v579
  %778 = vmatpush.bf16.msra.mxu0 %v578
  %779 = vmatpush.bf16.msra.mxu0 %v577
  %780 = vmatpush.bf16.msra.mxu0 %v576
  %781 = vmatpush.bf16.msra.mxu0 %v575
  %782 = vmatpush.bf16.msra.mxu0 %v574
  %783 = vmatpush.bf16.msra.mxu0 %v573
  %784 = vmatpush.bf16.msra.mxu0 %v572
  %785 = vmatmul.bf16.gmra.mxu0 %v235
  %v786 = vpop.f32.mrf.mxu0
  %v787 = vadd.f32 %v768, %v786
  %v788 = vpop.f32.mrf.mxu0
  %v789 = vadd.f32 %v770, %v788
  %790 = vmatmul.bf16.gmra.mxu0 %v243
  %v791 = vpop.f32.mrf.mxu0
  %v792 = vadd.f32 %v773, %v791
  %v793 = vpop.f32.mrf.mxu0
  %v794 = vadd.f32 %v775, %v793
  %795 = vdwg.mxu0
  %v796 = vadd.f32 %v32, %v787
  %v797 = vadd.f32 %v33, %v789
  %v798 = vadd.f32 %v34, %v792
  %v799 = vadd.f32 %v35, %v794
  %800 = vst [vmem:[#allocation2] sm:$0xff] %v796
  %801 = vst [vmem:[#allocation2 + $0x8] sm:$0xff] %v797
  %802 = vst [vmem:[#allocation2 + $0x10] sm:$0xff] %v798
  %803 = vst [vmem:[#allocation2 + $0x18] sm:$0xff] %v799
  // Predicated region
  $region22: #{unet_generator_forward.6} parent=0 // pred_check
    %p804 = pneg %p17
  $region23: #{unet_generator_forward.6} parent=0 // pred_check_branch
    %806 = sbr.rel (%p804) target = $region25
  $region24: #{unet_generator_forward.6} parent=0 // pred_region
    %v807 = vld [vmem:[#allocation2] sm:$0xff]
    %v808 = vld [vmem:[#allocation2 + $0x8] sm:$0xff]
    %v809 = vld [vmem:[#allocation2 + $0x10] sm:$0xff]
    %v810 = vld [vmem:[#allocation2 + $0x18] sm:$0xff]
    %v811 = vld [vmem:[%s2] sm:$0x1]
    %v813 = vperm.slane %v811, 0
    %v815 = vadd.f32 %v807, %v813
    %v816 = vadd.f32 %v808, %v813
    %v817 = vadd.f32 %v809, %v813
    %v818 = vadd.f32 %v810, %v813
    %v819 = vpack.c.bf16 %v815, %v815
    %v820 = vpack.c.bf16 %v816, %v816
    %v821 = vpack.c.bf16 %v817, %v817
    %v822 = vpack.c.bf16 %v818, %v818
    %823 = vst [vmem:[%s3] sm:$0xf] %v819
    %824 = vst [vmem:[%s3 + $0x4] sm:$0xf] %v820
    %825 = vst [vmem:[%s3 + $0x8] sm:$0xf] %v821
    %826 = vst [vmem:[%s3 + $0xc] sm:$0xf] %v822
    %v827 = vld [vmem:[%s4] sm:$0x1]
    %v828 = vadd.f32 %v815, %v816
    %v829 = vadd.f32 %v828, %v817
    %v830 = vadd.f32 %v829, %v818
    %v831 = vrot.slane %v830, 4
    %v832 = vadd.f32 %v830, %v831
    %v833 = vrot.slane %v832, 2
    %v834 = vadd.f32 %v832, %v833
    %v835 = vrot.slane %v834, 1
    %v836 = vadd.f32 %v834, %v835
    %v837 = vadd.f32 %v827, %v836
    %838 = vst [vmem:[%s4] sm:$0x1] %v837
    %v839 = vld [vmem:[%s5] sm:$0x1]
    %v840 = vmul.f32 %v815, %v815
    %v841 = vmul.f32 %v816, %v816
    %v842 = vmul.f32 %v817, %v817
    %v843 = vmul.f32 %v818, %v818
    %v844 = vadd.f32 %v840, %v841
    %v845 = vadd.f32 %v844, %v842
    %v846 = vadd.f32 %v845, %v843
    %v847 = vrot.slane %v846, 4
    %v848 = vadd.f32 %v846, %v847
    %v849 = vrot.slane %v848, 2
    %v850 = vadd.f32 %v848, %v849
    %v851 = vrot.slane %v850, 1
    %v852 = vadd.f32 %v850, %v851
    %v853 = vadd.f32 %v839, %v852
    %854 = vst [vmem:[%s5] sm:$0x1] %v853
  $region25: #{unet_generator_forward.6} parent=0 // pred_fallthru
    _
  // Predicated region
  $region26: #{unet_generator_forward.6} parent=0 // pred_check
    _
  $region27: #{unet_generator_forward.6} parent=0 // pred_check_branch
    %856 = sbr.rel (0) target = $region29
  $region28: #{unet_generator_forward.6} parent=0 // pred_region
    _
  $region29: #{unet_generator_forward.6} parent=0 // pred_fallthru
    _
  // Predicated region
  $region30: #{unet_generator_forward.6} parent=0 // pred_check
    _
  $region31: #{unet_generator_forward.6} parent=0 // pred_check_branch
    %858 = sbr.rel (0) target = $region33
  $region32: #{unet_generator_forward.6} parent=0 // pred_region
    _
  $region33: #{unet_generator_forward.6} parent=0 // pred_fallthru
    _
  // Predicated region
  $region34: #{unet_generator_forward.6} parent=0 // pred_check
    _
  $region35: #{unet_generator_forward.6} parent=0 // pred_check_branch
    %860 = sbr.rel (0) target = $region37
  $region36: #{unet_generator_forward.6} parent=0 // pred_region
    _
  $region37: #{unet_generator_forward.6} parent=0 // pred_fallthru
    _
  // Predicated region
  $region38: #{unet_generator_forward.6} parent=0 // pred_check
    _
  $region39: #{unet_generator_forward.6} parent=0 // pred_check_branch
    %862 = sbr.rel (0) target = $region41
  $region40: #{unet_generator_forward.6} parent=0 // pred_region
    _
  $region41: #{unet_generator_forward.6} parent=0 // pred_fallthru
    _
  // Predicated region
  $region42: #{unet_generator_forward.6} parent=0 // pred_check
    _
  $region43: #{unet_generator_forward.6} parent=0 // pred_check_branch
    %864 = sbr.rel (0) target = $region45
  $region44: #{unet_generator_forward.6} parent=0 // pred_region
    _
  $region45: #{unet_generator_forward.6} parent=0 // pred_fallthru
    _
  // Predicated region
  $region46: #{unet_generator_forward.6} parent=0 // pred_check
    _
  $region47: #{unet_generator_forward.6} parent=0 // pred_check_branch
    %866 = sbr.rel (0) target = $region49
  $region48: #{unet_generator_forward.6} parent=0 // pred_region
    _
  $region49: #{unet_generator_forward.6} parent=0 // pred_fallthru
    _

// kernel: unet_generator_forward.8
$region0: #{unet_generator_forward.8}
  #allocation0 [shape = 'u32[]', space=smem, size = 0x4, offset = 0x4, fixed_abs, tag = 'smem constant byte address 0x4 - core index']
  #allocation1 [shape = 'u32[72,128]{1,0:T(1,128)}', space=vmem, size = 0x9000, scoped, tag = 'internal scratch']
  %s0 = inlined_call_operand.vmem [shape: bf16[2,42,128], index: 0, kind: input, shape index: {}]
  %s1 = inlined_call_operand.vmem [shape: bf16[1152,256], index: 1, kind: input, shape index: {}]
  %s2 = inlined_call_operand.vmem [shape: f32[1,256], index: 2, kind: input, shape index: {}]
  %s3 = inlined_call_operand.vmem [shape: bf16[2,24,256], index: 3, kind: output, shape index: {}]
  %s4 = sld [smem:[#allocation0]]
  $region45: #{unet_generator_forward.8} parent=0
    _
  %s6 = ssub.s32 1, %s4
  %s7 = scalar_select 0, %s6, %s4
  loop: start=0, step=1, limit=4
  $region2: #{unet_generator_forward.8} parent=0 // loop_pre_header
    _
  $region3: #{unet_generator_forward.8} parent=0 // loop_header
    %s9 = sphi 0, %s13
    %p10 = scmp.ge.s32.totalorder %s9, 4
    %s19 = sphi 0, %s21
    %s22 = sphi 0, %s19
    %s23 = sphi 0, %s22
    %s39 = sphi 0, %s23
    %s43 = sphi 0, %s43
    %s45 = sphi 0, %s43
    %s46 = sphi 0, %s45
    %s60 = sphi 0, %s46
    %s64 = sphi 0, %s64
    %s66 = sphi 0, %s64
    %s67 = sphi 0, %s66
    %s81 = sphi 0, %s67
    %s87 = sphi 0, %s89
    %s90 = sphi 0, %s87
    %s91 = sphi 0, %s90
    %s107 = sphi 0, %s91
  $region4: #{unet_generator_forward.8} parent=0 // loop_header_branch
    %12 = sbr.rel (%p10) target = $region8
  $region5: #{unet_generator_forward.8} parent=0 // loop_body
    %s14 = ssub.s32 %s9, 1
    %s15 = ssub.s32 %s9, 2
    %s16 = sadd.s32 %s9, 1
    %s17 = ssub.s32 %s9, %s16
    %p18 = scmp.eq.s32.totalorder %s17, 0
    %s20 = sadd.s32 %s19, 1
    %s21 = scalar_select %p18, %s19, %s20
    %p24 = pneg %p18
    %p25 = scmp.eq.s32.totalorder %s9, 1
    %p26 = por %p24, %p25
    %p27 = scmp.ne.s32.totalorder %s19, %s22
    %p28 = scmp.eq.s32.totalorder %s9, 0
    %p29 = por %p27, %p28
    %p30 = scmp.ne.s32.totalorder %s19, %s22
    %p31 = scmp.eq.s32.totalorder %s14, 1
    %p32 = por %p30, %p31
    %p33 = scmp.ne.s32.totalorder %s22, %s23
    %p34 = scmp.eq.s32.totalorder %s14, 0
    %p35 = por %p33, %p34
    %p36 = scmp.ne.s32.totalorder %s22, %s23
    %p37 = scmp.eq.s32.totalorder %s15, 1
    %p38 = por %p36, %p37
    %p40 = scmp.ne.s32.totalorder %s23, %s39
    %p41 = scmp.eq.s32.totalorder %s15, 0
    %p42 = por %p40, %p41
    %s44 = sadd.s32 %s43, 1
    %p47 = scmp.eq.s32.totalorder %s9, 1
    %p48 = scmp.ne.s32.totalorder %s43, %s45
    %p49 = scmp.eq.s32.totalorder %s9, 0
    %p50 = por %p48, %p49
    %p51 = scmp.ne.s32.totalorder %s43, %s45
    %p52 = scmp.eq.s32.totalorder %s14, 1
    %p53 = por %p51, %p52
    %p54 = scmp.ne.s32.totalorder %s45, %s46
    %p55 = scmp.eq.s32.totalorder %s14, 0
    %p56 = por %p54, %p55
    %p57 = scmp.ne.s32.totalorder %s45, %s46
    %p58 = scmp.eq.s32.totalorder %s15, 1
    %p59 = por %p57, %p58
    %p61 = scmp.ne.s32.totalorder %s46, %s60
    %p62 = scmp.eq.s32.totalorder %s15, 0
    %p63 = por %p61, %p62
    %s65 = sadd.s32 %s64, 1
    %p68 = scmp.eq.s32.totalorder %s9, 1
    %p69 = scmp.ne.s32.totalorder %s64, %s66
    %p70 = scmp.eq.s32.totalorder %s9, 0
    %p71 = por %p69, %p70
    %p72 = scmp.ne.s32.totalorder %s64, %s66
    %p73 = scmp.eq.s32.totalorder %s14, 1
    %p74 = por %p72, %p73
    %p75 = scmp.ne.s32.totalorder %s66, %s67
    %p76 = scmp.eq.s32.totalorder %s14, 0
    %p77 = por %p75, %p76
    %p78 = scmp.ne.s32.totalorder %s66, %s67
    %p79 = scmp.eq.s32.totalorder %s15, 1
    %p80 = por %p78, %p79
    %p82 = scmp.ne.s32.totalorder %s67, %s81
    %p83 = scmp.eq.s32.totalorder %s15, 0
    %p84 = por %p82, %p83
    %s85 = ssub.s32 %s9, %s16
    %p86 = scmp.eq.s32.totalorder %s85, 0
    %s88 = sadd.s32 %s87, 1
    %s89 = scalar_select %p86, %s87, %s88
    %p92 = pneg %p86
    %p93 = scmp.eq.s32.totalorder %s9, 1
    %p94 = por %p92, %p93
    %p95 = scmp.ne.s32.totalorder %s87, %s90
    %p96 = scmp.eq.s32.totalorder %s9, 0
    %p97 = por %p95, %p96
    %p98 = scmp.ne.s32.totalorder %s87, %s90
    %p99 = scmp.eq.s32.totalorder %s14, 1
    %p100 = por %p98, %p99
    %p101 = scmp.ne.s32.totalorder %s90, %s91
    %p102 = scmp.eq.s32.totalorder %s14, 0
    %p103 = por %p101, %p102
    %p104 = scmp.ne.s32.totalorder %s90, %s91
    %p105 = scmp.eq.s32.totalorder %s15, 1
    %p106 = por %p104, %p105
    %p108 = scmp.ne.s32.totalorder %s91, %s107
    %p109 = scmp.eq.s32.totalorder %s15, 0
    %p110 = por %p108, %p109
    %p111 = scmp.le.s32.totalorder 1, %s9
    %p112 = scmp.lt.s32.totalorder %s9, 3
    %p113 = pnand %p111, %p112
    %p114 = pneg %p113
    // Predicated region
    $region9: #{unet_generator_forward.8} parent=5 // pred_check
      _
    $region10: #{unet_generator_forward.8} parent=5 // pred_check_branch
      %116 = sbr.rel (%p113) target = $region12
    $region11: #{unet_generator_forward.8} parent=5 // pred_region
      %s117 = ssub.s32 %s9, 1
      // Predicated region
      $region13: #{unet_generator_forward.8} parent=11 // pred_check
        %p118 = pneg %p56
      $region14: #{unet_generator_forward.8} parent=11 // pred_check_branch
        %120 = sbr.rel (%p118) target = $region16
      $region15: #{unet_generator_forward.8} parent=11 // pred_region
        _
      $region16: #{unet_generator_forward.8} parent=11 // pred_fallthru
        _
      // Predicated region
      $region17: #{unet_generator_forward.8} parent=11 // pred_check
        %p121 = pneg %p77
      $region18: #{unet_generator_forward.8} parent=11 // pred_check_branch
        %123 = sbr.rel (%p121) target = $region20
      $region19: #{unet_generator_forward.8} parent=11 // pred_region
        _
      $region20: #{unet_generator_forward.8} parent=11 // pred_fallthru
        _
    $region12: #{unet_generator_forward.8} parent=5 // pred_fallthru
      _
    %p124 = scmp.lt.s32.totalorder %s9, 2
    // Predicated region
    $region21: #{unet_generator_forward.8} parent=5 // pred_check
      %p125 = pneg %p124
    $region22: #{unet_generator_forward.8} parent=5 // pred_check_branch
      %127 = sbr.rel (%p125) target = $region24
    $region23: #{unet_generator_forward.8} parent=5 // pred_region
      // Predicated region
      $region25: #{unet_generator_forward.8} parent=23 // pred_check
        %p128 = pneg %p29
      $region26: #{unet_generator_forward.8} parent=23 // pred_check_branch
        %130 = sbr.rel (%p128) target = $region28
      $region27: #{unet_generator_forward.8} parent=23 // pred_region
        %p131 = scmp.lt.s32.totalorder %s9, 1
        %s132 = scalar_select %p131, %s9, 1
        %s133 = smul.addr %s132, 6
        %s134 = smul.addr %s133, 4
        %s135 = scalar_lea.vmem %s0, %s134
      $region28: #{unet_generator_forward.8} parent=23 // pred_fallthru
        _
    $region24: #{unet_generator_forward.8} parent=5 // pred_fallthru
      _
    %p136 = scmp.le.s32.totalorder 1, %s9
    %p137 = scmp.lt.s32.totalorder %s9, 3
    %p138 = pnand %p136, %p137
    %p139 = pneg %p138
    // Predicated region
    $region29: #{unet_generator_forward.8} parent=5 // pred_check
      _
    $region30: #{unet_generator_forward.8} parent=5 // pred_check_branch
      %141 = sbr.rel (%p138) target = $region32
    $region31: #{unet_generator_forward.8} parent=5 // pred_region
      %s142 = ssub.s32 %s9, 1
      %p143 = scmp.lt.s32.totalorder %s14, 1
      %s144 = scalar_select %p143, %s14, 1
      %s145 = smul.addr %s144, 6
      %s146 = smul.addr %s145, 4
      %s147 = scalar_lea.vmem %s0, %s146
      %p148 = pneg %p35
      %p149 = pneg %p32
      %p150 = pneg %p56
      %p151 = pneg %p53
      %p152 = pneg %p77
      %p153 = pneg %p74
      %p154 = pneg %p103
      %p155 = pneg %p100
      %p156 = scmp.lt.s32.totalorder %s14, 1
      %s157 = scalar_select %p156, %s14, 1
      %s158 = smul.addr %s157, 6
      %s159 = smul.addr %s158, 4
      %s160 = scalar_lea.vmem %s3, %s159
      %p161 = scmp.lt.s32.totalorder %s14, 1
      %s162 = scalar_select %p161, %s14, 1
      %s163 = smul.addr %s162, 6
      %s164 = smul.addr %s163, 4
      %s165 = scalar_lea.vmem %s0, %s164
      %p166 = scmp.lt.s32.totalorder %s14, 1
      %s167 = scalar_select %p166, %s14, 1
      %s168 = smul.addr %s167, 6
      %s169 = smul.addr %s168, 4
      %s170 = scalar_lea.vmem %s3, %s169
      %v171 = vld [vmem:[%s165] sm:$0xf]
      %v172 = vld [vmem:[%s165 + $0x4] sm:$0xf]
      %v173 = vld [vmem:[%s165 + $0x8] sm:$0xf]
      %v174 = vld [vmem:[%s1] sm:$0xff]
      %v175 = vld [vmem:[%s1 + $0x8] sm:$0xff]
      %v176 = vld [vmem:[%s1 + $0x10] sm:$0xff]
      %v177 = vld [vmem:[%s1 + $0x18] sm:$0xff]
      %v178 = vld [vmem:[%s1 + $0x20] sm:$0xff]
      %v179 = vld [vmem:[%s1 + $0x28] sm:$0xff]
      %v180 = vld [vmem:[%s1 + $0x30] sm:$0xff]
      %v181 = vld [vmem:[%s1 + $0x38] sm:$0xff]
      %v182 = vld [vmem:[%s1 + $0x40] sm:$0xff]
      %v183 = vld [vmem:[%s1 + $0x48] sm:$0xff]
      %v184 = vld [vmem:[%s1 + $0x50] sm:$0xff]
      %v185 = vld [vmem:[%s1 + $0x58] sm:$0xff]
      %v186 = vld [vmem:[%s1 + $0x60] sm:$0xff]
      %v187 = vld [vmem:[%s1 + $0x68] sm:$0xff]
      %v188 = vld [vmem:[%s1 + $0x70] sm:$0xff]
      %v189 = vld [vmem:[%s1 + $0x78] sm:$0xff]
      %v190 = vld [vmem:[%s165 + $0xc] sm:$0x1]
      %v191 = vld [vmem:[%s1 + $0x80] sm:$0xff]
      %v192 = vld [vmem:[%s1 + $0x88] sm:$0xff]
      %v193 = vld [vmem:[%s1 + $0x90] sm:$0xff]
      %v194 = vld [vmem:[%s1 + $0x98] sm:$0xff]
      %v195 = vld [vmem:[%s1 + $0xa0] sm:$0xff]
      %v196 = vld [vmem:[%s1 + $0xa8] sm:$0xff]
      %v197 = vld [vmem:[%s1 + $0xb0] sm:$0xff]
      %v198 = vld [vmem:[%s1 + $0xb8] sm:$0xff]
      %v199 = vld [vmem:[%s1 + $0xc0] sm:$0xff]
      %v200 = vld [vmem:[%s1 + $0xc8] sm:$0xff]
      %v201 = vld [vmem:[%s1 + $0xd0] sm:$0xff]
      %v202 = vld [vmem:[%s1 + $0xd8] sm:$0xff]
      %v203 = vld [vmem:[%s1 + $0xe0] sm:$0xff]
      %v204 = vld [vmem:[%s1 + $0xe8] sm:$0xff]
      %v205 = vld [vmem:[%s1 + $0xf0] sm:$0xff]
      %v206 = vld [vmem:[%s1 + $0xf8] sm:$0xff]
      %v211 = vunpack.c.l.b16 %v171
      %v212 = vunpack.c.l.b16 %v172
      %v213 = vunpack.c.l.b16 %v173
      %v214 = vunpack.c.l.b16 %v190
      %v215 = vpack.c.b16 %v212, %v211
      %v216 = vpack.c.b16 %v214, %v213
      %vm217 = vsmask.f32 7424
      %v219 = vshrl.u32 %v215, 16
      %v221 = vshll.u32 %v215, 16
      %v223 = vrot.slane %v221, 1
      %v224 = vor.u32 %v219, %v223
      %v226 = vshll.u32 %v216, 16
      %v228 = vrot.slane %v226, 1
      %v229 = vsel %vm217, %v224, %v228
      %v230 = vshrl.u32 %v216, 16
      %v232 = vor.u32 %v230, %v228
      %v251 = vunpack.c.l.b16 %v191
      %v252 = vunpack.c.h.b16 %v191
      %v253 = vunpack.c.l.b16 %v192
      %v254 = vunpack.c.h.b16 %v192
      %v255 = vunpack.c.l.b16 %v193
      %v256 = vunpack.c.h.b16 %v193
      %v257 = vunpack.c.l.b16 %v194
      %v258 = vunpack.c.h.b16 %v194
      %v259 = vunpack.c.l.b16 %v195
      %v260 = vunpack.c.h.b16 %v195
      %v261 = vunpack.c.l.b16 %v196
      %v262 = vunpack.c.h.b16 %v196
      %v263 = vunpack.c.l.b16 %v197
      %v264 = vunpack.c.h.b16 %v197
      %v265 = vunpack.c.l.b16 %v198
      %v266 = vunpack.c.h.b16 %v198
      %v267 = vunpack.c.l.b16 %v199
      %v268 = vunpack.c.h.b16 %v199
      %v269 = vunpack.c.l.b16 %v200
      %v270 = vunpack.c.h.b16 %v200
      %v271 = vunpack.c.l.b16 %v201
      %v272 = vunpack.c.h.b16 %v201
      %v273 = vunpack.c.l.b16 %v202
      %v274 = vunpack.c.h.b16 %v202
      %v275 = vunpack.c.l.b16 %v203
      %v276 = vunpack.c.h.b16 %v203
      %v277 = vunpack.c.l.b16 %v204
      %v278 = vunpack.c.h.b16 %v204
      %v279 = vunpack.c.l.b16 %v205
      %v280 = vunpack.c.h.b16 %v205
      %v281 = vunpack.c.l.b16 %v206
      %v282 = vunpack.c.h.b16 %v206
      %v283 = vpack.c.b16 %v253, %v251
      %v284 = vpack.c.b16 %v254, %v252
      %v285 = vpack.c.b16 %v257, %v255
      %v286 = vpack.c.b16 %v258, %v256
      %v287 = vpack.c.b16 %v261, %v259
      %v288 = vpack.c.b16 %v262, %v260
      %v289 = vpack.c.b16 %v265, %v263
      %v290 = vpack.c.b16 %v266, %v264
      %v291 = vpack.c.b16 %v269, %v267
      %v292 = vpack.c.b16 %v270, %v268
      %v293 = vpack.c.b16 %v273, %v271
      %v294 = vpack.c.b16 %v274, %v272
      %v295 = vpack.c.b16 %v277, %v275
      %v296 = vpack.c.b16 %v278, %v276
      %v297 = vpack.c.b16 %v281, %v279
      %v298 = vpack.c.b16 %v282, %v280
      %315 = vmatpush.bf16.msra.mxu0 %v297
      %316 = vmatpush.bf16.msra.mxu0 %v295
      %317 = vmatpush.bf16.msra.mxu0 %v293
      %318 = vmatpush.bf16.msra.mxu0 %v291
      %319 = vmatpush.bf16.msra.mxu0 %v289
      %320 = vmatpush.bf16.msra.mxu0 %v287
      %321 = vmatpush.bf16.msra.mxu0 %v285
      %322 = vmatpush.bf16.msra.mxu0 %v283
      %323 = vmatmul.bf16.gmra.mxu0 %v229
      %v324 = vpop.f32.mrf.mxu0
      %v325 = vadd.f32 0.0, %v324
      %v326 = vpop.f32.mrf.mxu0
      %v327 = vadd.f32 0.0, %v326
      %328 = vmatmul.bf16.gmra.mxu0 %v232
      %v329 = vpop.f32.mrf.mxu0
      %v330 = vadd.f32 0.0, %v329
      %v331 = vpop.f32.mrf.mxu0
      %332 = vdwg.mxu0
      %333 = vmatpush.bf16.msra.mxu0 %v298
      %334 = vmatpush.bf16.msra.mxu0 %v296
      %335 = vmatpush.bf16.msra.mxu0 %v294
      %336 = vmatpush.bf16.msra.mxu0 %v292
      %337 = vmatpush.bf16.msra.mxu0 %v290
      %338 = vmatpush.bf16.msra.mxu0 %v288
      %339 = vmatpush.bf16.msra.mxu0 %v286
      %340 = vmatpush.bf16.msra.mxu0 %v284
      %341 = vmatmul.bf16.gmra.mxu0 %v229
      %v342 = vpop.f32.mrf.mxu0
      %v343 = vadd.f32 0.0, %v342
      %v344 = vpop.f32.mrf.mxu0
      %v345 = vadd.f32 0.0, %v344
      %346 = vmatmul.bf16.gmra.mxu0 %v232
      %v347 = vpop.f32.mrf.mxu0
      %v348 = vadd.f32 0.0, %v347
      %v349 = vpop.f32.mrf.mxu0
      %350 = vdwg.mxu0
      %v351 = vpack.c.b16 %v213, %v213
      %v370 = vunpack.c.l.b16 %v174
      %v371 = vunpack.c.h.b16 %v174
      %v372 = vunpack.c.l.b16 %v175
      %v373 = vunpack.c.h.b16 %v175
      %v374 = vunpack.c.l.b16 %v176
      %v375 = vunpack.c.h.b16 %v176
      %v376 = vunpack.c.l.b16 %v177
      %v377 = vunpack.c.h.b16 %v177
      %v378 = vunpack.c.l.b16 %v178
      %v379 = vunpack.c.h.b16 %v178
      %v380 = vunpack.c.l.b16 %v179
      %v381 = vunpack.c.h.b16 %v179
      %v382 = vunpack.c.l.b16 %v180
      %v383 = vunpack.c.h.b16 %v180
      %v384 = vunpack.c.l.b16 %v181
      %v385 = vunpack.c.h.b16 %v181
      %v386 = vunpack.c.l.b16 %v182
      %v387 = vunpack.c.h.b16 %v182
      %v388 = vunpack.c.l.b16 %v183
      %v389 = vunpack.c.h.b16 %v183
      %v390 = vunpack.c.l.b16 %v184
      %v391 = vunpack.c.h.b16 %v184
      %v392 = vunpack.c.l.b16 %v185
      %v393 = vunpack.c.h.b16 %v185
      %v394 = vunpack.c.l.b16 %v186
      %v395 = vunpack.c.h.b16 %v186
      %v396 = vunpack.c.l.b16 %v187
      %v397 = vunpack.c.h.b16 %v187
      %v398 = vunpack.c.l.b16 %v188
      %v399 = vunpack.c.h.b16 %v188
      %v400 = vunpack.c.l.b16 %v189
      %v401 = vunpack.c.h.b16 %v189
      %v402 = vpack.c.b16 %v372, %v370
      %v403 = vpack.c.b16 %v373, %v371
      %v404 = vpack.c.b16 %v376, %v374
      %v405 = vpack.c.b16 %v377, %v375
      %v406 = vpack.c.b16 %v380, %v378
      %v407 = vpack.c.b16 %v381, %v379
      %v408 = vpack.c.b16 %v384, %v382
      %v409 = vpack.c.b16 %v385, %v383
      %v410 = vpack.c.b16 %v388, %v386
      %v411 = vpack.c.b16 %v389, %v387
      %v412 = vpack.c.b16 %v392, %v390
      %v413 = vpack.c.b16 %v393, %v391
      %v414 = vpack.c.b16 %v396, %v394
      %v415 = vpack.c.b16 %v397, %v395
      %v416 = vpack.c.b16 %v400, %v398
      %v417 = vpack.c.b16 %v401, %v399
      %434 = vmatpush.bf16.msra.mxu0 %v416
      %435 = vmatpush.bf16.msra.mxu0 %v414
      %436 = vmatpush.bf16.msra.mxu0 %v412
      %437 = vmatpush.bf16.msra.mxu0 %v410
      %438 = vmatpush.bf16.msra.mxu0 %v408
      %439 = vmatpush.bf16.msra.mxu0 %v406
      %440 = vmatpush.bf16.msra.mxu0 %v404
      %441 = vmatpush.bf16.msra.mxu0 %v402
      %442 = vmatmul.bf16.gmra.mxu0 %v215
      %v443 = vpop.f32.mrf.mxu0
      %v444 = vadd.f32 %v325, %v443
      %v445 = vpop.f32.mrf.mxu0
      %v446 = vadd.f32 %v327, %v445
      %447 = vmatmul.bf16.gmra.mxu0 %v351
      %v448 = vpop.f32.mrf.mxu0
      %v449 = vadd.f32 %v330, %v448
      %v450 = vpop.f32.mrf.mxu0
      %451 = vdwg.mxu0
      %452 = vmatpush.bf16.msra.mxu0 %v417
      %453 = vmatpush.bf16.msra.mxu0 %v415
      %454 = vmatpush.bf16.msra.mxu0 %v413
      %455 = vmatpush.bf16.msra.mxu0 %v411
      %456 = vmatpush.bf16.msra.mxu0 %v409
      %457 = vmatpush.bf16.msra.mxu0 %v407
      %458 = vmatpush.bf16.msra.mxu0 %v405
      %459 = vmatpush.bf16.msra.mxu0 %v403
      %460 = vmatmul.bf16.gmra.mxu0 %v215
      %v461 = vpop.f32.mrf.mxu0
      %v462 = vadd.f32 %v343, %v461
      %v463 = vpop.f32.mrf.mxu0
      %v464 = vadd.f32 %v345, %v463
      %465 = vmatmul.bf16.gmra.mxu0 %v351
      %v466 = vpop.f32.mrf.mxu0
      %v467 = vadd.f32 %v348, %v466
      %v468 = vpop.f32.mrf.mxu0
      %469 = vdwg.mxu0
      %v470 = vld [vmem:[%s165] sm:$0xe]
      %v471 = vld [vmem:[%s1 + $0x100] sm:$0xff]
      %v472 = vld [vmem:[%s1 + $0x108] sm:$0xff]
      %v473 = vld [vmem:[%s1 + $0x110] sm:$0xff]
      %v474 = vld [vmem:[%s1 + $0x118] sm:$0xff]
      %v475 = vld [vmem:[%s1 + $0x120] sm:$0xff]
      %v476 = vld [vmem:[%s1 + $0x128] sm:$0xff]
      %v477 = vld [vmem:[%s1 + $0x130] sm:$0xff]
      %v478 = vld [vmem:[%s1 + $0x138] sm:$0xff]
      %v479 = vld [vmem:[%s1 + $0x140] sm:$0xff]
      %v480 = vld [vmem:[%s1 + $0x148] sm:$0xff]
      %v481 = vld [vmem:[%s1 + $0x150] sm:$0xff]
      %v482 = vld [vmem:[%s1 + $0x158] sm:$0xff]
      %v483 = vld [vmem:[%s1 + $0x160] sm:$0xff]
      %v484 = vld [vmem:[%s1 + $0x168] sm:$0xff]
      %v485 = vld [vmem:[%s1 + $0x170] sm:$0xff]
      %v486 = vld [vmem:[%s1 + $0x178] sm:$0xff]
      %v488 = vunpack.c.l.b16 %v470
      %v489 = vpack.c.b16 %v212, %v488
      %vm490 = vcmask 1046528
      %v491 = vrot.slane %v489, 1
      %v492 = vrot.slane %v216, 1
      %v493 = vsel %vm490, %v491, %v492
      %v512 = vunpack.c.l.b16 %v471
      %v513 = vunpack.c.h.b16 %v471
      %v514 = vunpack.c.l.b16 %v472
      %v515 = vunpack.c.h.b16 %v472
      %v516 = vunpack.c.l.b16 %v473
      %v517 = vunpack.c.h.b16 %v473
      %v518 = vunpack.c.l.b16 %v474
      %v519 = vunpack.c.h.b16 %v474
      %v520 = vunpack.c.l.b16 %v475
      %v521 = vunpack.c.h.b16 %v475
      %v522 = vunpack.c.l.b16 %v476
      %v523 = vunpack.c.h.b16 %v476
      %v524 = vunpack.c.l.b16 %v477
      %v525 = vunpack.c.h.b16 %v477
      %v526 = vunpack.c.l.b16 %v478
      %v527 = vunpack.c.h.b16 %v478
      %v528 = vunpack.c.l.b16 %v479
      %v529 = vunpack.c.h.b16 %v479
      %v530 = vunpack.c.l.b16 %v480
      %v531 = vunpack.c.h.b16 %v480
      %v532 = vunpack.c.l.b16 %v481
      %v533 = vunpack.c.h.b16 %v481
      %v534 = vunpack.c.l.b16 %v482
      %v535 = vunpack.c.h.b16 %v482
      %v536 = vunpack.c.l.b16 %v483
      %v537 = vunpack.c.h.b16 %v483
      %v538 = vunpack.c.l.b16 %v484
      %v539 = vunpack.c.h.b16 %v484
      %v540 = vunpack.c.l.b16 %v485
      %v541 = vunpack.c.h.b16 %v485
      %v542 = vunpack.c.l.b16 %v486
      %v543 = vunpack.c.h.b16 %v486
      %v544 = vpack.c.b16 %v514, %v512
      %v545 = vpack.c.b16 %v515, %v513
      %v546 = vpack.c.b16 %v518, %v516
      %v547 = vpack.c.b16 %v519, %v517
      %v548 = vpack.c.b16 %v522, %v520
      %v549 = vpack.c.b16 %v523, %v521
      %v550 = vpack.c.b16 %v526, %v524
      %v551 = vpack.c.b16 %v527, %v525
      %v552 = vpack.c.b16 %v530, %v528
      %v553 = vpack.c.b16 %v531, %v529
      %v554 = vpack.c.b16 %v534, %v532
      %v555 = vpack.c.b16 %v535, %v533
      %v556 = vpack.c.b16 %v538, %v536
      %v557 = vpack.c.b16 %v539, %v537
      %v558 = vpack.c.b16 %v542, %v540
      %v559 = vpack.c.b16 %v543, %v541
      %576 = vmatpush.bf16.msra.mxu0 %v558
      %577 = vmatpush.bf16.msra.mxu0 %v556
      %578 = vmatpush.bf16.msra.mxu0 %v554
      %579 = vmatpush.bf16.msra.mxu0 %v552
      %580 = vmatpush.bf16.msra.mxu0 %v550
      %581 = vmatpush.bf16.msra.mxu0 %v548
      %582 = vmatpush.bf16.msra.mxu0 %v546
      %583 = vmatpush.bf16.msra.mxu0 %v544
      %584 = vmatmul.bf16.gmra.mxu0 %v493
      %v585 = vpop.f32.mrf.mxu0
      %v586 = vadd.f32 0.0, %v585
      %v587 = vpop.f32.mrf.mxu0
      %v588 = vadd.f32 0.0, %v587
      %589 = vmatmul.bf16.gmra.mxu0 %v492
      %v590 = vpop.f32.mrf.mxu0
      %v591 = vadd.f32 0.0, %v590
      %v592 = vpop.f32.mrf.mxu0
      %593 = vdwg.mxu0
      %594 = vmatpush.bf16.msra.mxu0 %v559
      %595 = vmatpush.bf16.msra.mxu0 %v557
      %596 = vmatpush.bf16.msra.mxu0 %v555
      %597 = vmatpush.bf16.msra.mxu0 %v553
      %598 = vmatpush.bf16.msra.mxu0 %v551
      %599 = vmatpush.bf16.msra.mxu0 %v549
      %600 = vmatpush.bf16.msra.mxu0 %v547
      %601 = vmatpush.bf16.msra.mxu0 %v545
      %602 = vmatmul.bf16.gmra.mxu0 %v493
      %v603 = vpop.f32.mrf.mxu0
      %v604 = vadd.f32 0.0, %v603
      %v605 = vpop.f32.mrf.mxu0
      %v606 = vadd.f32 0.0, %v605
      %607 = vmatmul.bf16.gmra.mxu0 %v492
      %v608 = vpop.f32.mrf.mxu0
      %v609 = vadd.f32 0.0, %v608
      %v610 = vpop.f32.mrf.mxu0
      %611 = vdwg.mxu0
      %v612 = vadd.f32 %v444, %v586
      %v613 = vadd.f32 %v462, %v604
      %v614 = vadd.f32 %v446, %v588
      %v615 = vadd.f32 %v464, %v606
      %v616 = vadd.f32 %v449, %v591
      %v617 = vadd.f32 %v467, %v609
      %v618 = vld [vmem:[%s165] sm:$0x8]
      %v619 = vld [vmem:[%s165 + $0xc] sm:$0x7]
      %v620 = vld [vmem:[%s1 + $0x180] sm:$0xff]
      %v621 = vld [vmem:[%s1 + $0x188] sm:$0xff]
      %v622 = vld [vmem:[%s1 + $0x190] sm:$0xff]
      %v623 = vld [vmem:[%s1 + $0x198] sm:$0xff]
      %v624 = vld [vmem:[%s1 + $0x1a0] sm:$0xff]
      %v625 = vld [vmem:[%s1 + $0x1a8] sm:$0xff]
      %v626 = vld [vmem:[%s1 + $0x1b0] sm:$0xff]
      %v627 = vld [vmem:[%s1 + $0x1b8] sm:$0xff]
      %v628 = vld [vmem:[%s1 + $0x1c0] sm:$0xff]
      %v629 = vld [vmem:[%s1 + $0x1c8] sm:$0xff]
      %v630 = vld [vmem:[%s1 + $0x1d0] sm:$0xff]
      %v631 = vld [vmem:[%s1 + $0x1d8] sm:$0xff]
      %v632 = vld [vmem:[%s1 + $0x1e0] sm:$0xff]
      %v633 = vld [vmem:[%s1 + $0x1e8] sm:$0xff]
      %v634 = vld [vmem:[%s1 + $0x1f0] sm:$0xff]
      %v635 = vld [vmem:[%s1 + $0x1f8] sm:$0xff]
      %v638 = vunpack.c.l.b16 %v618
      %v639 = vunpack.c.l.b16 %v619
      %v640 = vpack.c.b16 %v212, %v638
      %v641 = vpack.c.b16 %v639, %v213
      %vm642 = vcmask 1044480
      %v643 = vrot.slane %v640, 3
      %v644 = vrot.slane %v641, 3
      %v645 = vsel %vm642, %v643, %v644
      %v664 = vunpack.c.l.b16 %v620
      %v665 = vunpack.c.h.b16 %v620
      %v666 = vunpack.c.l.b16 %v621
      %v667 = vunpack.c.h.b16 %v621
      %v668 = vunpack.c.l.b16 %v622
      %v669 = vunpack.c.h.b16 %v622
      %v670 = vunpack.c.l.b16 %v623
      %v671 = vunpack.c.h.b16 %v623
      %v672 = vunpack.c.l.b16 %v624
      %v673 = vunpack.c.h.b16 %v624
      %v674 = vunpack.c.l.b16 %v625
      %v675 = vunpack.c.h.b16 %v625
      %v676 = vunpack.c.l.b16 %v626
      %v677 = vunpack.c.h.b16 %v626
      %v678 = vunpack.c.l.b16 %v627
      %v679 = vunpack.c.h.b16 %v627
      %v680 = vunpack.c.l.b16 %v628
      %v681 = vunpack.c.h.b16 %v628
      %v682 = vunpack.c.l.b16 %v629
      %v683 = vunpack.c.h.b16 %v629
      %v684 = vunpack.c.l.b16 %v630
      %v685 = vunpack.c.h.b16 %v630
      %v686 = vunpack.c.l.b16 %v631
      %v687 = vunpack.c.h.b16 %v631
      %v688 = vunpack.c.l.b16 %v632
      %v689 = vunpack.c.h.b16 %v632
      %v690 = vunpack.c.l.b16 %v633
      %v691 = vunpack.c.h.b16 %v633
      %v692 = vunpack.c.l.b16 %v634
      %v693 = vunpack.c.h.b16 %v634
      %v694 = vunpack.c.l.b16 %v635
      %v695 = vunpack.c.h.b16 %v635
      %v696 = vpack.c.b16 %v666, %v664
      %v697 = vpack.c.b16 %v667, %v665
      %v698 = vpack.c.b16 %v670, %v668
      %v699 = vpack.c.b16 %v671, %v669
      %v700 = vpack.c.b16 %v674, %v672
      %v701 = vpack.c.b16 %v675, %v673
      %v702 = vpack.c.b16 %v678, %v676
      %v703 = vpack.c.b16 %v679, %v677
      %v704 = vpack.c.b16 %v682, %v680
      %v705 = vpack.c.b16 %v683, %v681
      %v706 = vpack.c.b16 %v686, %v684
      %v707 = vpack.c.b16 %v687, %v685
      %v708 = vpack.c.b16 %v690, %v688
      %v709 = vpack.c.b16 %v691, %v689
      %v710 = vpack.c.b16 %v694, %v692
      %v711 = vpack.c.b16 %v695, %v693
      %728 = vmatpush.bf16.msra.mxu0 %v710
      %729 = vmatpush.bf16.msra.mxu0 %v708
      %730 = vmatpush.bf16.msra.mxu0 %v706
      %731 = vmatpush.bf16.msra.mxu0 %v704
      %732 = vmatpush.bf16.msra.mxu0 %v702
      %733 = vmatpush.bf16.msra.mxu0 %v700
      %734 = vmatpush.bf16.msra.mxu0 %v698
      %735 = vmatpush.bf16.msra.mxu0 %v696
      %736 = vmatmul.bf16.gmra.mxu0 %v645
      %v737 = vpop.f32.mrf.mxu0
      %v738 = vadd.f32 0.0, %v737
      %v739 = vpop.f32.mrf.mxu0
      %v740 = vadd.f32 0.0, %v739
      %741 = vmatmul.bf16.gmra.mxu0 %v644
      %v742 = vpop.f32.mrf.mxu0
      %v743 = vadd.f32 0.0, %v742
      %v744 = vpop.f32.mrf.mxu0
      %745 = vdwg.mxu0
      %746 = vmatpush.bf16.msra.mxu0 %v711
      %747 = vmatpush.bf16.msra.mxu0 %v709
      %748 = vmatpush.bf16.msra.mxu0 %v707
      %749 = vmatpush.bf16.msra.mxu0 %v705
      %750 = vmatpush.bf16.msra.mxu0 %v703
      %751 = vmatpush.bf16.msra.mxu0 %v701
      %752 = vmatpush.bf16.msra.mxu0 %v699
      %753 = vmatpush.bf16.msra.mxu0 %v697
      %754 = vmatmul.bf16.gmra.mxu0 %v645
      %v755 = vpop.f32.mrf.mxu0
      %v756 = vadd.f32 0.0, %v755
      %v757 = vpop.f32.mrf.mxu0
      %v758 = vadd.f32 0.0, %v757
      %759 = vmatmul.bf16.gmra.mxu0 %v644
      %v760 = vpop.f32.mrf.mxu0
      %v761 = vadd.f32 0.0, %v760
      %v762 = vpop.f32.mrf.mxu0
      %763 = vdwg.mxu0
      %v764 = vadd.f32 %v612, %v738
      %v765 = vadd.f32 %v613, %v756
      %v766 = vadd.f32 %v614, %v740
      %v767 = vadd.f32 %v615, %v758
      %v768 = vadd.f32 %v616, %v743
      %v769 = vadd.f32 %v617, %v761
      %v770 = vld [vmem:[%s165 + $0xc] sm:$0xf]
      %v771 = vld [vmem:[%s1 + $0x200] sm:$0xff]
      %v772 = vld [vmem:[%s1 + $0x208] sm:$0xff]
      %v773 = vld [vmem:[%s1 + $0x210] sm:$0xff]
      %v774 = vld [vmem:[%s1 + $0x218] sm:$0xff]
      %v775 = vld [vmem:[%s1 + $0x220] sm:$0xff]
      %v776 = vld [vmem:[%s1 + $0x228] sm:$0xff]
      %v777 = vld [vmem:[%s1 + $0x230] sm:$0xff]
      %v778 = vld [vmem:[%s1 + $0x238] sm:$0xff]
      %v779 = vld [vmem:[%s1 + $0x240] sm:$0xff]
      %v780 = vld [vmem:[%s1 + $0x248] sm:$0xff]
      %v781 = vld [vmem:[%s1 + $0x250] sm:$0xff]
      %v782 = vld [vmem:[%s1 + $0x258] sm:$0xff]
      %v783 = vld [vmem:[%s1 + $0x260] sm:$0xff]
      %v784 = vld [vmem:[%s1 + $0x268] sm:$0xff]
      %v785 = vld [vmem:[%s1 + $0x270] sm:$0xff]
      %v786 = vld [vmem:[%s1 + $0x278] sm:$0xff]
      %v788 = vunpack.c.l.b16 %v770
      %v789 = vpack.c.b16 %v788, %v213
      %vm790 = vsmask.f32 4352
      %v792 = vshrl.u32 %v640, 16
      %v794 = vrot.slane %v792, 3
      %v795 = vshll.u32 %v640, 16
      %v797 = vrot.slane %v795, 4
      %v798 = vor.u32 %v794, %v797
      %v800 = vshrl.u32 %v789, 16
      %v802 = vrot.slane %v800, 3
      %v803 = vshll.u32 %v789, 16
      %v805 = vrot.slane %v803, 4
      %v806 = vor.u32 %v802, %v805
      %v807 = vsel %vm790, %v798, %v806
      %v826 = vunpack.c.l.b16 %v771
      %v827 = vunpack.c.h.b16 %v771
      %v828 = vunpack.c.l.b16 %v772
      %v829 = vunpack.c.h.b16 %v772
      %v830 = vunpack.c.l.b16 %v773
      %v831 = vunpack.c.h.b16 %v773
      %v832 = vunpack.c.l.b16 %v774
      %v833 = vunpack.c.h.b16 %v774
      %v834 = vunpack.c.l.b16 %v775
      %v835 = vunpack.c.h.b16 %v775
      %v836 = vunpack.c.l.b16 %v776
      %v837 = vunpack.c.h.b16 %v776
      %v838 = vunpack.c.l.b16 %v777
      %v839 = vunpack.c.h.b16 %v777
      %v840 = vunpack.c.l.b16 %v778
      %v841 = vunpack.c.h.b16 %v778
      %v842 = vunpack.c.l.b16 %v779
      %v843 = vunpack.c.h.b16 %v779
      %v844 = vunpack.c.l.b16 %v780
      %v845 = vunpack.c.h.b16 %v780
      %v846 = vunpack.c.l.b16 %v781
      %v847 = vunpack.c.h.b16 %v781
      %v848 = vunpack.c.l.b16 %v782
      %v849 = vunpack.c.h.b16 %v782
      %v850 = vunpack.c.l.b16 %v783
      %v851 = vunpack.c.h.b16 %v783
      %v852 = vunpack.c.l.b16 %v784
      %v853 = vunpack.c.h.b16 %v784
      %v854 = vunpack.c.l.b16 %v785
      %v855 = vunpack.c.h.b16 %v785
      %v856 = vunpack.c.l.b16 %v786
      %v857 = vunpack.c.h.b16 %v786
      %v858 = vpack.c.b16 %v828, %v826
      %v859 = vpack.c.b16 %v829, %v827
      %v860 = vpack.c.b16 %v832, %v830
      %v861 = vpack.c.b16 %v833, %v831
      %v862 = vpack.c.b16 %v836, %v834
      %v863 = vpack.c.b16 %v837, %v835
      %v864 = vpack.c.b16 %v840, %v838
      %v865 = vpack.c.b16 %v841, %v839
      %v866 = vpack.c.b16 %v844, %v842
      %v867 = vpack.c.b16 %v845, %v843
      %v868 = vpack.c.b16 %v848, %v846
      %v869 = vpack.c.b16 %v849, %v847
      %v870 = vpack.c.b16 %v852, %v850
      %v871 = vpack.c.b16 %v853, %v851
      %v872 = vpack.c.b16 %v856, %v854
      %v873 = vpack.c.b16 %v857, %v855
      %890 = vmatpush.bf16.msra.mxu0 %v872
      %891 = vmatpush.bf16.msra.mxu0 %v870
      %892 = vmatpush.bf16.msra.mxu0 %v868
      %893 = vmatpush.bf16.msra.mxu0 %v866
      %894 = vmatpush.bf16.msra.mxu0 %v864
      %895 = vmatpush.bf16.msra.mxu0 %v862
      %896 = vmatpush.bf16.msra.mxu0 %v860
      %897 = vmatpush.bf16.msra.mxu0 %v858
      %898 = vmatmul.bf16.gmra.mxu0 %v807
      %v899 = vpop.f32.mrf.mxu0
      %v900 = vadd.f32 0.0, %v899
      %v901 = vpop.f32.mrf.mxu0
      %v902 = vadd.f32 0.0, %v901
      %903 = vmatmul.bf16.gmra.mxu0 %v806
      %v904 = vpop.f32.mrf.mxu0
      %v905 = vadd.f32 0.0, %v904
      %v906 = vpop.f32.mrf.mxu0
      %907 = vdwg.mxu0
      %908 = vmatpush.bf16.msra.mxu0 %v873
      %909 = vmatpush.bf16.msra.mxu0 %v871
      %910 = vmatpush.bf16.msra.mxu0 %v869
      %911 = vmatpush.bf16.msra.mxu0 %v867
      %912 = vmatpush.bf16.msra.mxu0 %v865
      %913 = vmatpush.bf16.msra.mxu0 %v863
      %914 = vmatpush.bf16.msra.mxu0 %v861
      %915 = vmatpush.bf16.msra.mxu0 %v859
      %916 = vmatmul.bf16.gmra.mxu0 %v807
      %v917 = vpop.f32.mrf.mxu0
      %v918 = vadd.f32 0.0, %v917
      %v919 = vpop.f32.mrf.mxu0
      %v920 = vadd.f32 0.0, %v919
      %921 = vmatmul.bf16.gmra.mxu0 %v806
      %v922 = vpop.f32.mrf.mxu0
      %v923 = vadd.f32 0.0, %v922
      %v924 = vpop.f32.mrf.mxu0
      %925 = vdwg.mxu0
      %v926 = vadd.f32 %v764, %v900
      %v927 = vadd.f32 %v765, %v918
      %v928 = vadd.f32 %v766, %v902
      %v929 = vadd.f32 %v767, %v920
      %v930 = vadd.f32 %v768, %v905
      %v931 = vadd.f32 %v769, %v923
      %v932 = vld [vmem:[%s1 + $0x280] sm:$0xff]
      %v933 = vld [vmem:[%s1 + $0x288] sm:$0xff]
      %v934 = vld [vmem:[%s1 + $0x290] sm:$0xff]
      %v935 = vld [vmem:[%s1 + $0x298] sm:$0xff]
      %v936 = vld [vmem:[%s1 + $0x2a0] sm:$0xff]
      %v937 = vld [vmem:[%s1 + $0x2a8] sm:$0xff]
      %v938 = vld [vmem:[%s1 + $0x2b0] sm:$0xff]
      %v939 = vld [vmem:[%s1 + $0x2b8] sm:$0xff]
      %v940 = vld [vmem:[%s1 + $0x2c0] sm:$0xff]
      %v941 = vld [vmem:[%s1 + $0x2c8] sm:$0xff]
      %v942 = vld [vmem:[%s1 + $0x2d0] sm:$0xff]
      %v943 = vld [vmem:[%s1 + $0x2d8] sm:$0xff]
      %v944 = vld [vmem:[%s1 + $0x2e0] sm:$0xff]
      %v945 = vld [vmem:[%s1 + $0x2e8] sm:$0xff]
      %v946 = vld [vmem:[%s1 + $0x2f0] sm:$0xff]
      %v947 = vld [vmem:[%s1 + $0x2f8] sm:$0xff]
      %v948 = vpack.c.b16 %v213, %v212
      %v949 = vpack.c.b16 %v788, %v788
      %v968 = vunpack.c.l.b16 %v932
      %v969 = vunpack.c.h.b16 %v932
      %v970 = vunpack.c.l.b16 %v933
      %v971 = vunpack.c.h.b16 %v933
      %v972 = vunpack.c.l.b16 %v934
      %v973 = vunpack.c.h.b16 %v934
      %v974 = vunpack.c.l.b16 %v935
      %v975 = vunpack.c.h.b16 %v935
      %v976 = vunpack.c.l.b16 %v936
      %v977 = vunpack.c.h.b16 %v936
      %v978 = vunpack.c.l.b16 %v937
      %v979 = vunpack.c.h.b16 %v937
      %v980 = vunpack.c.l.b16 %v938
      %v981 = vunpack.c.h.b16 %v938
      %v982 = vunpack.c.l.b16 %v939
      %v983 = vunpack.c.h.b16 %v939
      %v984 = vunpack.c.l.b16 %v940
      %v985 = vunpack.c.h.b16 %v940
      %v986 = vunpack.c.l.b16 %v941
      %v987 = vunpack.c.h.b16 %v941
      %v988 = vunpack.c.l.b16 %v942
      %v989 = vunpack.c.h.b16 %v942
      %v990 = vunpack.c.l.b16 %v943
      %v991 = vunpack.c.h.b16 %v943
      %v992 = vunpack.c.l.b16 %v944
      %v993 = vunpack.c.h.b16 %v944
      %v994 = vunpack.c.l.b16 %v945
      %v995 = vunpack.c.h.b16 %v945
      %v996 = vunpack.c.l.b16 %v946
      %v997 = vunpack.c.h.b16 %v946
      %v998 = vunpack.c.l.b16 %v947
      %v999 = vunpack.c.h.b16 %v947
      %v1000 = vpack.c.b16 %v970, %v968
      %v1001 = vpack.c.b16 %v971, %v969
      %v1002 = vpack.c.b16 %v974, %v972
      %v1003 = vpack.c.b16 %v975, %v973
      %v1004 = vpack.c.b16 %v978, %v976
      %v1005 = vpack.c.b16 %v979, %v977
      %v1006 = vpack.c.b16 %v982, %v980
      %v1007 = vpack.c.b16 %v983, %v981
      %v1008 = vpack.c.b16 %v986, %v984
      %v1009 = vpack.c.b16 %v987, %v985
      %v1010 = vpack.c.b16 %v990, %v988
      %v1011 = vpack.c.b16 %v991, %v989
      %v1012 = vpack.c.b16 %v994, %v992
      %v1013 = vpack.c.b16 %v995, %v993
      %v1014 = vpack.c.b16 %v998, %v996
      %v1015 = vpack.c.b16 %v999, %v997
      %1032 = vmatpush.bf16.msra.mxu0 %v1014
      %1033 = vmatpush.bf16.msra.mxu0 %v1012
      %1034 = vmatpush.bf16.msra.mxu0 %v1010
      %1035 = vmatpush.bf16.msra.mxu0 %v1008
      %1036 = vmatpush.bf16.msra.mxu0 %v1006
      %1037 = vmatpush.bf16.msra.mxu0 %v1004
      %1038 = vmatpush.bf16.msra.mxu0 %v1002
      %1039 = vmatpush.bf16.msra.mxu0 %v1000
      %1040 = vmatmul.bf16.gmra.mxu0 %v948
      %v1041 = vpop.f32.mrf.mxu0
      %v1042 = vadd.f32 0.0, %v1041
      %v1043 = vpop.f32.mrf.mxu0
      %v1044 = vadd.f32 0.0, %v1043
      %1045 = vmatmul.bf16.gmra.mxu0 %v949
      %v1046 = vpop.f32.mrf.mxu0
      %v1047 = vadd.f32 0.0, %v1046
      %v1048 = vpop.f32.mrf.mxu0
      %1049 = vdwg.mxu0
      %1050 = vmatpush.bf16.msra.mxu0 %v1015
      %1051 = vmatpush.bf16.msra.mxu0 %v1013
      %1052 = vmatpush.bf16.msra.mxu0 %v1011
      %1053 = vmatpush.bf16.msra.mxu0 %v1009
      %1054 = vmatpush.bf16.msra.mxu0 %v1007
      %1055 = vmatpush.bf16.msra.mxu0 %v1005
      %1056 = vmatpush.bf16.msra.mxu0 %v1003
      %1057 = vmatpush.bf16.msra.mxu0 %v1001
      %1058 = vmatmul.bf16.gmra.mxu0 %v948
      %v1059 = vpop.f32.mrf.mxu0
      %v1060 = vadd.f32 0.0, %v1059
      %v1061 = vpop.f32.mrf.mxu0
      %v1062 = vadd.f32 0.0, %v1061
      %1063 = vmatmul.bf16.gmra.mxu0 %v949
      %v1064 = vpop.f32.mrf.mxu0
      %v1065 = vadd.f32 0.0, %v1064
      %v1066 = vpop.f32.mrf.mxu0
      %1067 = vdwg.mxu0
      %v1068 = vadd.f32 %v926, %v1042
      %v1069 = vadd.f32 %v927, %v1060
      %v1070 = vadd.f32 %v928, %v1044
      %v1071 = vadd.f32 %v929, %v1062
      %v1072 = vadd.f32 %v930, %v1047
      %v1073 = vadd.f32 %v931, %v1065
      %v1074 = vld [vmem:[%s165 + $0x4] sm:$0xc]
      %v1075 = vld [vmem:[%s165 + $0x8] sm:$0xf]
      %v1076 = vld [vmem:[%s165 + $0xc] sm:$0xf]
      %v1077 = vld [vmem:[%s165 + $0x10] sm:$0x3]
      %v1078 = vld [vmem:[%s1 + $0x300] sm:$0xff]
      %v1079 = vld [vmem:[%s1 + $0x308] sm:$0xff]
      %v1080 = vld [vmem:[%s1 + $0x310] sm:$0xff]
      %v1081 = vld [vmem:[%s1 + $0x318] sm:$0xff]
      %v1082 = vld [vmem:[%s1 + $0x320] sm:$0xff]
      %v1083 = vld [vmem:[%s1 + $0x328] sm:$0xff]
      %v1084 = vld [vmem:[%s1 + $0x330] sm:$0xff]
      %v1085 = vld [vmem:[%s1 + $0x338] sm:$0xff]
      %v1086 = vld [vmem:[%s1 + $0x340] sm:$0xff]
      %v1087 = vld [vmem:[%s1 + $0x348] sm:$0xff]
      %v1088 = vld [vmem:[%s1 + $0x350] sm:$0xff]
      %v1089 = vld [vmem:[%s1 + $0x358] sm:$0xff]
      %v1090 = vld [vmem:[%s1 + $0x360] sm:$0xff]
      %v1091 = vld [vmem:[%s1 + $0x368] sm:$0xff]
      %v1092 = vld [vmem:[%s1 + $0x370] sm:$0xff]
      %v1093 = vld [vmem:[%s1 + $0x378] sm:$0xff]
      %v1098 = vunpack.c.l.b16 %v1074
      %v1099 = vunpack.c.l.b16 %v1075
      %v1100 = vunpack.c.l.b16 %v1076
      %v1101 = vunpack.c.l.b16 %v1077
      %v1102 = vpack.c.b16 %v1099, %v1098
      %v1103 = vpack.c.b16 %v1101, %v1100
      %vm1104 = vcmask 1045504
      %v1105 = vrot.slane %v1102, 2
      %v1106 = vrot.slane %v1103, 2
      %v1107 = vsel %vm1104, %v1105, %v1106
      %v1126 = vunpack.c.l.b16 %v1078
      %v1127 = vunpack.c.h.b16 %v1078
      %v1128 = vunpack.c.l.b16 %v1079
      %v1129 = vunpack.c.h.b16 %v1079
      %v1130 = vunpack.c.l.b16 %v1080
      %v1131 = vunpack.c.h.b16 %v1080
      %v1132 = vunpack.c.l.b16 %v1081
      %v1133 = vunpack.c.h.b16 %v1081
      %v1134 = vunpack.c.l.b16 %v1082
      %v1135 = vunpack.c.h.b16 %v1082
      %v1136 = vunpack.c.l.b16 %v1083
      %v1137 = vunpack.c.h.b16 %v1083
      %v1138 = vunpack.c.l.b16 %v1084
      %v1139 = vunpack.c.h.b16 %v1084
      %v1140 = vunpack.c.l.b16 %v1085
      %v1141 = vunpack.c.h.b16 %v1085
      %v1142 = vunpack.c.l.b16 %v1086
      %v1143 = vunpack.c.h.b16 %v1086
      %v1144 = vunpack.c.l.b16 %v1087
      %v1145 = vunpack.c.h.b16 %v1087
      %v1146 = vunpack.c.l.b16 %v1088
      %v1147 = vunpack.c.h.b16 %v1088
      %v1148 = vunpack.c.l.b16 %v1089
      %v1149 = vunpack.c.h.b16 %v1089
      %v1150 = vunpack.c.l.b16 %v1090
      %v1151 = vunpack.c.h.b16 %v1090
      %v1152 = vunpack.c.l.b16 %v1091
      %v1153 = vunpack.c.h.b16 %v1091
      %v1154 = vunpack.c.l.b16 %v1092
      %v1155 = vunpack.c.h.b16 %v1092
      %v1156 = vunpack.c.l.b16 %v1093
      %v1157 = vunpack.c.h.b16 %v1093
      %v1158 = vpack.c.b16 %v1128, %v1126
      %v1159 = vpack.c.b16 %v1129, %v1127
      %v1160 = vpack.c.b16 %v1132, %v1130
      %v1161 = vpack.c.b16 %v1133, %v1131
      %v1162 = vpack.c.b16 %v1136, %v1134
      %v1163 = vpack.c.b16 %v1137, %v1135
      %v1164 = vpack.c.b16 %v1140, %v1138
      %v1165 = vpack.c.b16 %v1141, %v1139
      %v1166 = vpack.c.b16 %v1144, %v1142
      %v1167 = vpack.c.b16 %v1145, %v1143
      %v1168 = vpack.c.b16 %v1148, %v1146
      %v1169 = vpack.c.b16 %v1149, %v1147
      %v1170 = vpack.c.b16 %v1152, %v1150
      %v1171 = vpack.c.b16 %v1153, %v1151
      %v1172 = vpack.c.b16 %v1156, %v1154
      %v1173 = vpack.c.b16 %v1157, %v1155
      %1190 = vmatpush.bf16.msra.mxu0 %v1172
      %1191 = vmatpush.bf16.msra.mxu0 %v1170
      %1192 = vmatpush.bf16.msra.mxu0 %v1168
      %1193 = vmatpush.bf16.msra.mxu0 %v1166
      %1194 = vmatpush.bf16.msra.mxu0 %v1164
      %1195 = vmatpush.bf16.msra.mxu0 %v1162
      %1196 = vmatpush.bf16.msra.mxu0 %v1160
      %1197 = vmatpush.bf16.msra.mxu0 %v1158
      %1198 = vmatmul.bf16.gmra.mxu0 %v1107
      %v1199 = vpop.f32.mrf.mxu0
      %v1200 = vadd.f32 0.0, %v1199
      %v1201 = vpop.f32.mrf.mxu0
      %v1202 = vadd.f32 0.0, %v1201
      %1203 = vmatmul.bf16.gmra.mxu0 %v1106
      %v1204 = vpop.f32.mrf.mxu0
      %v1205 = vadd.f32 0.0, %v1204
      %v1206 = vpop.f32.mrf.mxu0
      %1207 = vdwg.mxu0
      %1208 = vmatpush.bf16.msra.mxu0 %v1173
      %1209 = vmatpush.bf16.msra.mxu0 %v1171
      %1210 = vmatpush.bf16.msra.mxu0 %v1169
      %1211 = vmatpush.bf16.msra.mxu0 %v1167
      %1212 = vmatpush.bf16.msra.mxu0 %v1165
      %1213 = vmatpush.bf16.msra.mxu0 %v1163
      %1214 = vmatpush.bf16.msra.mxu0 %v1161
      %1215 = vmatpush.bf16.msra.mxu0 %v1159
      %1216 = vmatmul.bf16.gmra.mxu0 %v1107
      %v1217 = vpop.f32.mrf.mxu0
      %v1218 = vadd.f32 0.0, %v1217
      %v1219 = vpop.f32.mrf.mxu0
      %v1220 = vadd.f32 0.0, %v1219
      %1221 = vmatmul.bf16.gmra.mxu0 %v1106
      %v1222 = vpop.f32.mrf.mxu0
      %v1223 = vadd.f32 0.0, %v1222
      %v1224 = vpop.f32.mrf.mxu0
      %1225 = vdwg.mxu0
      %v1226 = vadd.f32 %v1068, %v1200
      %v1227 = vadd.f32 %v1069, %v1218
      %v1228 = vadd.f32 %v1070, %v1202
      %v1229 = vadd.f32 %v1071, %v1220
      %v1230 = vadd.f32 %v1072, %v1205
      %v1231 = vadd.f32 %v1073, %v1223
      %v1232 = vld [vmem:[%s165 + $0x10] sm:$0x7]
      %v1233 = vld [vmem:[%s1 + $0x380] sm:$0xff]
      %v1234 = vld [vmem:[%s1 + $0x388] sm:$0xff]
      %v1235 = vld [vmem:[%s1 + $0x390] sm:$0xff]
      %v1236 = vld [vmem:[%s1 + $0x398] sm:$0xff]
      %v1237 = vld [vmem:[%s1 + $0x3a0] sm:$0xff]
      %v1238 = vld [vmem:[%s1 + $0x3a8] sm:$0xff]
      %v1239 = vld [vmem:[%s1 + $0x3b0] sm:$0xff]
      %v1240 = vld [vmem:[%s1 + $0x3b8] sm:$0xff]
      %v1241 = vld [vmem:[%s1 + $0x3c0] sm:$0xff]
      %v1242 = vld [vmem:[%s1 + $0x3c8] sm:$0xff]
      %v1243 = vld [vmem:[%s1 + $0x3d0] sm:$0xff]
      %v1244 = vld [vmem:[%s1 + $0x3d8] sm:$0xff]
      %v1245 = vld [vmem:[%s1 + $0x3e0] sm:$0xff]
      %v1246 = vld [vmem:[%s1 + $0x3e8] sm:$0xff]
      %v1247 = vld [vmem:[%s1 + $0x3f0] sm:$0xff]
      %v1248 = vld [vmem:[%s1 + $0x3f8] sm:$0xff]
      %v1250 = vunpack.c.l.b16 %v1232
      %v1251 = vpack.c.b16 %v1250, %v1100
      %vm1252 = vsmask.f32 5376
      %v1254 = vshrl.u32 %v1102, 16
      %v1256 = vrot.slane %v1254, 2
      %v1257 = vshll.u32 %v1102, 16
      %v1259 = vrot.slane %v1257, 3
      %v1260 = vor.u32 %v1256, %v1259
      %v1262 = vshrl.u32 %v1251, 16
      %v1264 = vrot.slane %v1262, 2
      %v1265 = vshll.u32 %v1251, 16
      %v1267 = vrot.slane %v1265, 3
      %v1268 = vor.u32 %v1264, %v1267
      %v1269 = vsel %vm1252, %v1260, %v1268
      %v1288 = vunpack.c.l.b16 %v1233
      %v1289 = vunpack.c.h.b16 %v1233
      %v1290 = vunpack.c.l.b16 %v1234
      %v1291 = vunpack.c.h.b16 %v1234
      %v1292 = vunpack.c.l.b16 %v1235
      %v1293 = vunpack.c.h.b16 %v1235
      %v1294 = vunpack.c.l.b16 %v1236
      %v1295 = vunpack.c.h.b16 %v1236
      %v1296 = vunpack.c.l.b16 %v1237
      %v1297 = vunpack.c.h.b16 %v1237
      %v1298 = vunpack.c.l.b16 %v1238
      %v1299 = vunpack.c.h.b16 %v1238
      %v1300 = vunpack.c.l.b16 %v1239
      %v1301 = vunpack.c.h.b16 %v1239
      %v1302 = vunpack.c.l.b16 %v1240
      %v1303 = vunpack.c.h.b16 %v1240
      %v1304 = vunpack.c.l.b16 %v1241
      %v1305 = vunpack.c.h.b16 %v1241
      %v1306 = vunpack.c.l.b16 %v1242
      %v1307 = vunpack.c.h.b16 %v1242
      %v1308 = vunpack.c.l.b16 %v1243
      %v1309 = vunpack.c.h.b16 %v1243
      %v1310 = vunpack.c.l.b16 %v1244
      %v1311 = vunpack.c.h.b16 %v1244
      %v1312 = vunpack.c.l.b16 %v1245
      %v1313 = vunpack.c.h.b16 %v1245
      %v1314 = vunpack.c.l.b16 %v1246
      %v1315 = vunpack.c.h.b16 %v1246
      %v1316 = vunpack.c.l.b16 %v1247
      %v1317 = vunpack.c.h.b16 %v1247
      %v1318 = vunpack.c.l.b16 %v1248
      %v1319 = vunpack.c.h.b16 %v1248
      %v1320 = vpack.c.b16 %v1290, %v1288
      %v1321 = vpack.c.b16 %v1291, %v1289
      %v1322 = vpack.c.b16 %v1294, %v1292
      %v1323 = vpack.c.b16 %v1295, %v1293
      %v1324 = vpack.c.b16 %v1298, %v1296
      %v1325 = vpack.c.b16 %v1299, %v1297
      %v1326 = vpack.c.b16 %v1302, %v1300
      %v1327 = vpack.c.b16 %v1303, %v1301
      %v1328 = vpack.c.b16 %v1306, %v1304
      %v1329 = vpack.c.b16 %v1307, %v1305
      %v1330 = vpack.c.b16 %v1310, %v1308
      %v1331 = vpack.c.b16 %v1311, %v1309
      %v1332 = vpack.c.b16 %v1314, %v1312
      %v1333 = vpack.c.b16 %v1315, %v1313
      %v1334 = vpack.c.b16 %v1318, %v1316
      %v1335 = vpack.c.b16 %v1319, %v1317
      %1352 = vmatpush.bf16.msra.mxu0 %v1334
      %1353 = vmatpush.bf16.msra.mxu0 %v1332
      %1354 = vmatpush.bf16.msra.mxu0 %v1330
      %1355 = vmatpush.bf16.msra.mxu0 %v1328
      %1356 = vmatpush.bf16.msra.mxu0 %v1326
      %1357 = vmatpush.bf16.msra.mxu0 %v1324
      %1358 = vmatpush.bf16.msra.mxu0 %v1322
      %1359 = vmatpush.bf16.msra.mxu0 %v1320
      %1360 = vmatmul.bf16.gmra.mxu0 %v1269
      %v1361 = vpop.f32.mrf.mxu0
      %v1362 = vadd.f32 0.0, %v1361
      %v1363 = vpop.f32.mrf.mxu0
      %v1364 = vadd.f32 0.0, %v1363
      %1365 = vmatmul.bf16.gmra.mxu0 %v1268
      %v1366 = vpop.f32.mrf.mxu0
      %v1367 = vadd.f32 0.0, %v1366
      %v1368 = vpop.f32.mrf.mxu0
      %1369 = vdwg.mxu0
      %1370 = vmatpush.bf16.msra.mxu0 %v1335
      %1371 = vmatpush.bf16.msra.mxu0 %v1333
      %1372 = vmatpush.bf16.msra.mxu0 %v1331
      %1373 = vmatpush.bf16.msra.mxu0 %v1329
      %1374 = vmatpush.bf16.msra.mxu0 %v1327
      %1375 = vmatpush.bf16.msra.mxu0 %v1325
      %1376 = vmatpush.bf16.msra.mxu0 %v1323
      %1377 = vmatpush.bf16.msra.mxu0 %v1321
      %1378 = vmatmul.bf16.gmra.mxu0 %v1269
      %v1379 = vpop.f32.mrf.mxu0
      %v1380 = vadd.f32 0.0, %v1379
      %v1381 = vpop.f32.mrf.mxu0
      %v1382 = vadd.f32 0.0, %v1381
      %1383 = vmatmul.bf16.gmra.mxu0 %v1268
      %v1384 = vpop.f32.mrf.mxu0
      %v1385 = vadd.f32 0.0, %v1384
      %v1386 = vpop.f32.mrf.mxu0
      %1387 = vdwg.mxu0
      %v1388 = vadd.f32 %v1226, %v1362
      %v1389 = vadd.f32 %v1227, %v1380
      %v1390 = vadd.f32 %v1228, %v1364
      %v1391 = vadd.f32 %v1229, %v1382
      %v1392 = vadd.f32 %v1230, %v1367
      %v1393 = vadd.f32 %v1231, %v1385
      %v1394 = vld [vmem:[%s165 + $0x4] sm:$0x8]
      %v1395 = vld [vmem:[%s1 + $0x400] sm:$0xff]
      %v1396 = vld [vmem:[%s1 + $0x408] sm:$0xff]
      %v1397 = vld [vmem:[%s1 + $0x410] sm:$0xff]
      %v1398 = vld [vmem:[%s1 + $0x418] sm:$0xff]
      %v1399 = vld [vmem:[%s1 + $0x420] sm:$0xff]
      %v1400 = vld [vmem:[%s1 + $0x428] sm:$0xff]
      %v1401 = vld [vmem:[%s1 + $0x430] sm:$0xff]
      %v1402 = vld [vmem:[%s1 + $0x438] sm:$0xff]
      %v1403 = vld [vmem:[%s1 + $0x440] sm:$0xff]
      %v1404 = vld [vmem:[%s1 + $0x448] sm:$0xff]
      %v1405 = vld [vmem:[%s1 + $0x450] sm:$0xff]
      %v1406 = vld [vmem:[%s1 + $0x458] sm:$0xff]
      %v1407 = vld [vmem:[%s1 + $0x460] sm:$0xff]
      %v1408 = vld [vmem:[%s1 + $0x468] sm:$0xff]
      %v1409 = vld [vmem:[%s1 + $0x470] sm:$0xff]
      %v1410 = vld [vmem:[%s1 + $0x478] sm:$0xff]
      %v1412 = vunpack.c.l.b16 %v1394
      %v1413 = vpack.c.b16 %v1099, %v1412
      %v1414 = vrot.slane %v1413, 3
      %v1415 = vrot.slane %v1251, 3
      %v1416 = vsel %vm642, %v1414, %v1415
      %v1435 = vunpack.c.l.b16 %v1395
      %v1436 = vunpack.c.h.b16 %v1395
      %v1437 = vunpack.c.l.b16 %v1396
      %v1438 = vunpack.c.h.b16 %v1396
      %v1439 = vunpack.c.l.b16 %v1397
      %v1440 = vunpack.c.h.b16 %v1397
      %v1441 = vunpack.c.l.b16 %v1398
      %v1442 = vunpack.c.h.b16 %v1398
      %v1443 = vunpack.c.l.b16 %v1399
      %v1444 = vunpack.c.h.b16 %v1399
      %v1445 = vunpack.c.l.b16 %v1400
      %v1446 = vunpack.c.h.b16 %v1400
      %v1447 = vunpack.c.l.b16 %v1401
      %v1448 = vunpack.c.h.b16 %v1401
      %v1449 = vunpack.c.l.b16 %v1402
      %v1450 = vunpack.c.h.b16 %v1402
      %v1451 = vunpack.c.l.b16 %v1403
      %v1452 = vunpack.c.h.b16 %v1403
      %v1453 = vunpack.c.l.b16 %v1404
      %v1454 = vunpack.c.h.b16 %v1404
      %v1455 = vunpack.c.l.b16 %v1405
      %v1456 = vunpack.c.h.b16 %v1405
      %v1457 = vunpack.c.l.b16 %v1406
      %v1458 = vunpack.c.h.b16 %v1406
      %v1459 = vunpack.c.l.b16 %v1407
      %v1460 = vunpack.c.h.b16 %v1407
      %v1461 = vunpack.c.l.b16 %v1408
      %v1462 = vunpack.c.h.b16 %v1408
      %v1463 = vunpack.c.l.b16 %v1409
      %v1464 = vunpack.c.h.b16 %v1409
      %v1465 = vunpack.c.l.b16 %v1410
      %v1466 = vunpack.c.h.b16 %v1410
      %v1467 = vpack.c.b16 %v1437, %v1435
      %v1468 = vpack.c.b16 %v1438, %v1436
      %v1469 = vpack.c.b16 %v1441, %v1439
      %v1470 = vpack.c.b16 %v1442, %v1440
      %v1471 = vpack.c.b16 %v1445, %v1443
      %v1472 = vpack.c.b16 %v1446, %v1444
      %v1473 = vpack.c.b16 %v1449, %v1447
      %v1474 = vpack.c.b16 %v1450, %v1448
      %v1475 = vpack.c.b16 %v1453, %v1451
      %v1476 = vpack.c.b16 %v1454, %v1452
      %v1477 = vpack.c.b16 %v1457, %v1455
      %v1478 = vpack.c.b16 %v1458, %v1456
      %v1479 = vpack.c.b16 %v1461, %v1459
      %v1480 = vpack.c.b16 %v1462, %v1460
      %v1481 = vpack.c.b16 %v1465, %v1463
      %v1482 = vpack.c.b16 %v1466, %v1464
      %1499 = vmatpush.bf16.msra.mxu0 %v1481
      %1500 = vmatpush.bf16.msra.mxu0 %v1479
      %1501 = vmatpush.bf16.msra.mxu0 %v1477
      %1502 = vmatpush.bf16.msra.mxu0 %v1475
      %1503 = vmatpush.bf16.msra.mxu0 %v1473
      %1504 = vmatpush.bf16.msra.mxu0 %v1471
      %1505 = vmatpush.bf16.msra.mxu0 %v1469
      %1506 = vmatpush.bf16.msra.mxu0 %v1467
      %1507 = vmatmul.bf16.gmra.mxu0 %v1416
      %v1508 = vpop.f32.mrf.mxu0
      %v1509 = vadd.f32 0.0, %v1508
      %v1510 = vpop.f32.mrf.mxu0
      %v1511 = vadd.f32 0.0, %v1510
      %1512 = vmatmul.bf16.gmra.mxu0 %v1415
      %v1513 = vpop.f32.mrf.mxu0
      %v1514 = vadd.f32 0.0, %v1513
      %v1515 = vpop.f32.mrf.mxu0
      %1516 = vdwg.mxu0
      %1517 = vmatpush.bf16.msra.mxu0 %v1482
      %1518 = vmatpush.bf16.msra.mxu0 %v1480
      %1519 = vmatpush.bf16.msra.mxu0 %v1478
      %1520 = vmatpush.bf16.msra.mxu0 %v1476
      %1521 = vmatpush.bf16.msra.mxu0 %v1474
      %1522 = vmatpush.bf16.msra.mxu0 %v1472
      %1523 = vmatpush.bf16.msra.mxu0 %v1470
      %1524 = vmatpush.bf16.msra.mxu0 %v1468
      %1525 = vmatmul.bf16.gmra.mxu0 %v1416
      %v1526 = vpop.f32.mrf.mxu0
      %v1527 = vadd.f32 0.0, %v1526
      %v1528 = vpop.f32.mrf.mxu0
      %v1529 = vadd.f32 0.0, %v1528
      %1530 = vmatmul.bf16.gmra.mxu0 %v1415
      %v1531 = vpop.f32.mrf.mxu0
      %v1532 = vadd.f32 0.0, %v1531
      %v1533 = vpop.f32.mrf.mxu0
      %1534 = vdwg.mxu0
      %v1535 = vadd.f32 %v1388, %v1509
      %v1536 = vadd.f32 %v1389, %v1527
      %v1537 = vadd.f32 %v1390, %v1511
      %v1538 = vadd.f32 %v1391, %v1529
      %v1539 = vadd.f32 %v1392, %v1514
      %v1540 = vadd.f32 %v1393, %v1532
      %v1541 = vld [vmem:[%s2] sm:$0x3]
      %v1543 = vperm.slane %v1541, 0
      %v1544 = vperm.slane %v1541, 1
      %v1547 = vadd.f32 %v1535, %v1543
      %v1548 = vadd.f32 %v1536, %v1544
      %v1549 = vadd.f32 %v1537, %v1543
      %v1550 = vadd.f32 %v1538, %v1544
      %v1551 = vadd.f32 %v1539, %v1543
      %v1552 = vadd.f32 %v1540, %v1544
      %v1553 = vmax.f32 %v1547, 0.0
      %v1554 = vmax.f32 %v1548, 0.0
      %v1555 = vmax.f32 %v1549, 0.0
      %v1556 = vmax.f32 %v1550, 0.0
      %v1557 = vmax.f32 %v1551, 0.0
      %v1558 = vmax.f32 %v1552, 0.0
      %v1559 = vpack.c.bf16 %v1554, %v1553
      %v1560 = vpack.c.bf16 %v1556, %v1555
      %v1561 = vpack.c.bf16 %v1558, %v1557
      %1562 = vst [vmem:[%s170] sm:$0xff] %v1559
      %1563 = vst [vmem:[%s170 + $0x8] sm:$0xff] %v1560
      %1564 = vst [vmem:[%s170 + $0x10] sm:$0xff] %v1561
      %p1565 = scmp.lt.s32.totalorder %s14, 1
      %s1566 = scalar_select %p1565, %s14, 1
      %s1567 = smul.addr %s1566, 6
      %s1568 = smul.addr %s1567, 4
      %s1569 = scalar_lea.vmem %s3, %s1568
      // Predicated region
      $region33: #{unet_generator_forward.8} parent=31 // pred_check
        %p1570 = pneg %p100
      $region34: #{unet_generator_forward.8} parent=31 // pred_check_branch
        %1572 = sbr.rel (%p1570) target = $region36
      $region35: #{unet_generator_forward.8} parent=31 // pred_region
        _
      $region36: #{unet_generator_forward.8} parent=31 // pred_fallthru
        _
    $region32: #{unet_generator_forward.8} parent=5 // pred_fallthru
      _
    %p1573 = scmp.le.s32.totalorder 2, %s9
    // Predicated region
    $region37: #{unet_generator_forward.8} parent=5 // pred_check
      %p1574 = pneg %p1573
    $region38: #{unet_generator_forward.8} parent=5 // pred_check_branch
      %1576 = sbr.rel (%p1574) target = $region40
    $region39: #{unet_generator_forward.8} parent=5 // pred_region
      %s1577 = ssub.s32 %s9, 2
      // Predicated region
      $region41: #{unet_generator_forward.8} parent=39 // pred_check
        %p1578 = pneg %p106
      $region42: #{unet_generator_forward.8} parent=39 // pred_check_branch
        %1580 = sbr.rel (%p1578) target = $region44
      $region43: #{unet_generator_forward.8} parent=39 // pred_region
        %p1581 = scmp.lt.s32.totalorder %s15, 1
        %s1582 = scalar_select %p1581, %s15, 1
        %s1583 = smul.addr %s1582, 6
        %s1584 = smul.addr %s1583, 4
        %s1585 = scalar_lea.vmem %s3, %s1584
      $region44: #{unet_generator_forward.8} parent=39 // pred_fallthru
        _
    $region40: #{unet_generator_forward.8} parent=5 // pred_fallthru
      _
  $region6: #{unet_generator_forward.8} parent=0 // loop_footer
    %s13 = sadd.s32 1, %s9
  $region7: #{unet_generator_forward.8} parent=0 // loop_footer_branch
    %8 = sbr.rel target = $region3
  $region8: #{unet_generator_forward.8} parent=0 // loop_exit
    _

// kernel: unet_generator_forward.9
$region0: #{unet_generator_forward.9}
  #allocation0 [shape = 'u32[]', space=smem, size = 0x4, offset = 0x4, fixed_abs, tag = 'smem constant byte address 0x4 - core index']
  #allocation1 [shape = 'u32[72,128]{1,0:T(1,128)}', space=vmem, size = 0x9000, scoped, tag = 'internal scratch']
  %s0 = inlined_call_operand.vmem [shape: bf16[2,110,64], index: 0, kind: input, shape index: {}]
  %s1 = inlined_call_operand.vmem [shape: bf16[576,128], index: 1, kind: input, shape index: {}]
  %s2 = inlined_call_operand.vmem [shape: f32[1,128], index: 2, kind: input, shape index: {}]
  %s3 = inlined_call_operand.vmem [shape: bf16[2,80,128], index: 3, kind: output, shape index: {}]
  %s4 = sld [smem:[#allocation0]]
  $region45: #{unet_generator_forward.9} parent=0
    _
  %s6 = ssub.s32 1, %s4
  %s7 = scalar_select 0, %s6, %s4
  loop: start=0, step=1, limit=4
  $region2: #{unet_generator_forward.9} parent=0 // loop_pre_header
    _
  $region3: #{unet_generator_forward.9} parent=0 // loop_header
    %s9 = sphi 0, %s13
    %p10 = scmp.ge.s32.totalorder %s9, 4
    %s19 = sphi 0, %s21
    %s22 = sphi 0, %s19
    %s23 = sphi 0, %s22
    %s39 = sphi 0, %s23
    %s43 = sphi 0, %s43
    %s45 = sphi 0, %s43
    %s46 = sphi 0, %s45
    %s60 = sphi 0, %s46
    %s64 = sphi 0, %s64
    %s66 = sphi 0, %s64
    %s67 = sphi 0, %s66
    %s81 = sphi 0, %s67
    %s87 = sphi 0, %s89
    %s90 = sphi 0, %s87
    %s91 = sphi 0, %s90
    %s107 = sphi 0, %s91
  $region4: #{unet_generator_forward.9} parent=0 // loop_header_branch
    %12 = sbr.rel (%p10) target = $region8
  $region5: #{unet_generator_forward.9} parent=0 // loop_body
    %s14 = ssub.s32 %s9, 1
    %s15 = ssub.s32 %s9, 2
    %s16 = sadd.s32 %s9, 1
    %s17 = ssub.s32 %s9, %s16
    %p18 = scmp.eq.s32.totalorder %s17, 0
    %s20 = sadd.s32 %s19, 1
    %s21 = scalar_select %p18, %s19, %s20
    %p24 = pneg %p18
    %p25 = scmp.eq.s32.totalorder %s9, 1
    %p26 = por %p24, %p25
    %p27 = scmp.ne.s32.totalorder %s19, %s22
    %p28 = scmp.eq.s32.totalorder %s9, 0
    %p29 = por %p27, %p28
    %p30 = scmp.ne.s32.totalorder %s19, %s22
    %p31 = scmp.eq.s32.totalorder %s14, 1
    %p32 = por %p30, %p31
    %p33 = scmp.ne.s32.totalorder %s22, %s23
    %p34 = scmp.eq.s32.totalorder %s14, 0
    %p35 = por %p33, %p34
    %p36 = scmp.ne.s32.totalorder %s22, %s23
    %p37 = scmp.eq.s32.totalorder %s15, 1
    %p38 = por %p36, %p37
    %p40 = scmp.ne.s32.totalorder %s23, %s39
    %p41 = scmp.eq.s32.totalorder %s15, 0
    %p42 = por %p40, %p41
    %s44 = sadd.s32 %s43, 1
    %p47 = scmp.eq.s32.totalorder %s9, 1
    %p48 = scmp.ne.s32.totalorder %s43, %s45
    %p49 = scmp.eq.s32.totalorder %s9, 0
    %p50 = por %p48, %p49
    %p51 = scmp.ne.s32.totalorder %s43, %s45
    %p52 = scmp.eq.s32.totalorder %s14, 1
    %p53 = por %p51, %p52
    %p54 = scmp.ne.s32.totalorder %s45, %s46
    %p55 = scmp.eq.s32.totalorder %s14, 0
    %p56 = por %p54, %p55
    %p57 = scmp.ne.s32.totalorder %s45, %s46
    %p58 = scmp.eq.s32.totalorder %s15, 1
    %p59 = por %p57, %p58
    %p61 = scmp.ne.s32.totalorder %s46, %s60
    %p62 = scmp.eq.s32.totalorder %s15, 0
    %p63 = por %p61, %p62
    %s65 = sadd.s32 %s64, 1
    %p68 = scmp.eq.s32.totalorder %s9, 1
    %p69 = scmp.ne.s32.totalorder %s64, %s66
    %p70 = scmp.eq.s32.totalorder %s9, 0
    %p71 = por %p69, %p70
    %p72 = scmp.ne.s32.totalorder %s64, %s66
    %p73 = scmp.eq.s32.totalorder %s14, 1
    %p74 = por %p72, %p73
    %p75 = scmp.ne.s32.totalorder %s66, %s67
    %p76 = scmp.eq.s32.totalorder %s14, 0
    %p77 = por %p75, %p76
    %p78 = scmp.ne.s32.totalorder %s66, %s67
    %p79 = scmp.eq.s32.totalorder %s15, 1
    %p80 = por %p78, %p79
    %p82 = scmp.ne.s32.totalorder %s67, %s81
    %p83 = scmp.eq.s32.totalorder %s15, 0
    %p84 = por %p82, %p83
    %s85 = ssub.s32 %s9, %s16
    %p86 = scmp.eq.s32.totalorder %s85, 0
    %s88 = sadd.s32 %s87, 1
    %s89 = scalar_select %p86, %s87, %s88
    %p92 = pneg %p86
    %p93 = scmp.eq.s32.totalorder %s9, 1
    %p94 = por %p92, %p93
    %p95 = scmp.ne.s32.totalorder %s87, %s90
    %p96 = scmp.eq.s32.totalorder %s9, 0
    %p97 = por %p95, %p96
    %p98 = scmp.ne.s32.totalorder %s87, %s90
    %p99 = scmp.eq.s32.totalorder %s14, 1
    %p100 = por %p98, %p99
    %p101 = scmp.ne.s32.totalorder %s90, %s91
    %p102 = scmp.eq.s32.totalorder %s14, 0
    %p103 = por %p101, %p102
    %p104 = scmp.ne.s32.totalorder %s90, %s91
    %p105 = scmp.eq.s32.totalorder %s15, 1
    %p106 = por %p104, %p105
    %p108 = scmp.ne.s32.totalorder %s91, %s107
    %p109 = scmp.eq.s32.totalorder %s15, 0
    %p110 = por %p108, %p109
    %p111 = scmp.le.s32.totalorder 1, %s9
    %p112 = scmp.lt.s32.totalorder %s9, 3
    %p113 = pnand %p111, %p112
    %p114 = pneg %p113
    // Predicated region
    $region9: #{unet_generator_forward.9} parent=5 // pred_check
      _
    $region10: #{unet_generator_forward.9} parent=5 // pred_check_branch
      %116 = sbr.rel (%p113) target = $region12
    $region11: #{unet_generator_forward.9} parent=5 // pred_region
      %s117 = ssub.s32 %s9, 1
      // Predicated region
      $region13: #{unet_generator_forward.9} parent=11 // pred_check
        %p118 = pneg %p56
      $region14: #{unet_generator_forward.9} parent=11 // pred_check_branch
        %120 = sbr.rel (%p118) target = $region16
      $region15: #{unet_generator_forward.9} parent=11 // pred_region
        _
      $region16: #{unet_generator_forward.9} parent=11 // pred_fallthru
        _
      // Predicated region
      $region17: #{unet_generator_forward.9} parent=11 // pred_check
        %p121 = pneg %p77
      $region18: #{unet_generator_forward.9} parent=11 // pred_check_branch
        %123 = sbr.rel (%p121) target = $region20
      $region19: #{unet_generator_forward.9} parent=11 // pred_region
        _
      $region20: #{unet_generator_forward.9} parent=11 // pred_fallthru
        _
    $region12: #{unet_generator_forward.9} parent=5 // pred_fallthru
      _
    %p124 = scmp.lt.s32.totalorder %s9, 2
    // Predicated region
    $region21: #{unet_generator_forward.9} parent=5 // pred_check
      %p125 = pneg %p124
    $region22: #{unet_generator_forward.9} parent=5 // pred_check_branch
      %127 = sbr.rel (%p125) target = $region24
    $region23: #{unet_generator_forward.9} parent=5 // pred_region
      // Predicated region
      $region25: #{unet_generator_forward.9} parent=23 // pred_check
        %p128 = pneg %p29
      $region26: #{unet_generator_forward.9} parent=23 // pred_check_branch
        %130 = sbr.rel (%p128) target = $region28
      $region27: #{unet_generator_forward.9} parent=23 // pred_region
        %p131 = scmp.lt.s32.totalorder %s9, 1
        %s132 = scalar_select %p131, %s9, 1
        %s133 = smul.addr %s132, 14
        %s134 = smul.addr %s133, 4
        %s135 = scalar_lea.vmem %s0, %s134
      $region28: #{unet_generator_forward.9} parent=23 // pred_fallthru
        _
    $region24: #{unet_generator_forward.9} parent=5 // pred_fallthru
      _
    %p136 = scmp.le.s32.totalorder 1, %s9
    %p137 = scmp.lt.s32.totalorder %s9, 3
    %p138 = pnand %p136, %p137
    %p139 = pneg %p138
    // Predicated region
    $region29: #{unet_generator_forward.9} parent=5 // pred_check
      _
    $region30: #{unet_generator_forward.9} parent=5 // pred_check_branch
      %141 = sbr.rel (%p138) target = $region32
    $region31: #{unet_generator_forward.9} parent=5 // pred_region
      %s142 = ssub.s32 %s9, 1
      %p143 = scmp.lt.s32.totalorder %s14, 1
      %s144 = scalar_select %p143, %s14, 1
      %s145 = smul.addr %s144, 14
      %s146 = smul.addr %s145, 4
      %s147 = scalar_lea.vmem %s0, %s146
      %p148 = pneg %p35
      %p149 = pneg %p32
      %p150 = pneg %p56
      %p151 = pneg %p53
      %p152 = pneg %p77
      %p153 = pneg %p74
      %p154 = pneg %p103
      %p155 = pneg %p100
      %p156 = scmp.lt.s32.totalorder %s14, 1
      %s157 = scalar_select %p156, %s14, 1
      %s158 = smul.addr %s157, 10
      %s159 = smul.addr %s158, 4
      %s160 = scalar_lea.vmem %s3, %s159
      %p161 = scmp.lt.s32.totalorder %s14, 1
      %s162 = scalar_select %p161, %s14, 1
      %s163 = smul.addr %s162, 14
      %s164 = smul.addr %s163, 4
      %s165 = scalar_lea.vmem %s0, %s164
      %p166 = scmp.lt.s32.totalorder %s14, 1
      %s167 = scalar_select %p166, %s14, 1
      %s168 = smul.addr %s167, 10
      %s169 = smul.addr %s168, 4
      %s170 = scalar_lea.vmem %s3, %s169
      %v172 = vld [vmem:[%s165] sm:$0xf]
      %v173 = vld [vmem:[%s165 + $0x4] sm:$0xf]
      %v174 = vld [vmem:[%s165 + $0x8] sm:$0xf]
      %v175 = vld [vmem:[%s165 + $0xc] sm:$0xf]
      %v176 = vld [vmem:[%s165 + $0x10] sm:$0xf]
      %v177 = vld [vmem:[%s165 + $0x14] sm:$0xf]
      %v178 = vld [vmem:[%s165 + $0x18] sm:$0xf]
      %v179 = vld [vmem:[%s165 + $0x1c] sm:$0xf]
      %v180 = vld [vmem:[%s165 + $0x20] sm:$0xf]
      %v181 = vld [vmem:[%s165 + $0x24] sm:$0xf]
      %v182 = vld [vmem:[%s1] sm:$0xf]
      %v183 = vld [vmem:[%s1 + $0x4] sm:$0xf]
      %v184 = vld [vmem:[%s1 + $0x8] sm:$0xf]
      %v185 = vld [vmem:[%s1 + $0xc] sm:$0xf]
      %v186 = vld [vmem:[%s1 + $0x10] sm:$0xf]
      %v187 = vld [vmem:[%s1 + $0x14] sm:$0xf]
      %v188 = vld [vmem:[%s1 + $0x18] sm:$0xf]
      %v189 = vld [vmem:[%s1 + $0x1c] sm:$0xf]
      %v190 = vld [vmem:[%s165 + $0x28] sm:$0x1]
      %v191 = vld [vmem:[%s1 + $0x20] sm:$0xf]
      %v192 = vld [vmem:[%s1 + $0x24] sm:$0xf]
      %v193 = vld [vmem:[%s1 + $0x28] sm:$0xf]
      %v194 = vld [vmem:[%s1 + $0x2c] sm:$0xf]
      %v195 = vld [vmem:[%s1 + $0x30] sm:$0xf]
      %v196 = vld [vmem:[%s1 + $0x34] sm:$0xf]
      %v197 = vld [vmem:[%s1 + $0x38] sm:$0xf]
      %v198 = vld [vmem:[%s1 + $0x3c] sm:$0xf]
      %v210 = vunpack.c.l.b16 %v172
      %v211 = vunpack.c.l.b16 %v173
      %v212 = vunpack.c.l.b16 %v174
      %v213 = vunpack.c.l.b16 %v175
      %v214 = vunpack.c.l.b16 %v176
      %v215 = vunpack.c.l.b16 %v177
      %v216 = vunpack.c.l.b16 %v178
      %v217 = vunpack.c.l.b16 %v179
      %v218 = vunpack.c.l.b16 %v180
      %v219 = vunpack.c.l.b16 %v181
      %v220 = vunpack.c.l.b16 %v190
      %v221 = vpack.c.b16 %v211, %v210
      %v222 = vpack.c.b16 %v213, %v212
      %v223 = vpack.c.b16 %v215, %v214
      %v224 = vpack.c.b16 %v217, %v216
      %v225 = vpack.c.b16 %v219, %v218
      %v226 = vpack.c.b16 %v220, %v220
      %vm227 = vsmask.f32 7424
      %v229 = vshrl.u32 %v221, 16
      %v231 = vshll.u32 %v221, 16
      %v233 = vrot.slane %v231, 1
      %v234 = vor.u32 %v229, %v233
      %v236 = vshll.u32 %v222, 16
      %v238 = vrot.slane %v236, 1
      %v239 = vsel %vm227, %v234, %v238
      %v240 = vshrl.u32 %v222, 16
      %v242 = vor.u32 %v240, %v238
      %v244 = vshll.u32 %v223, 16
      %v246 = vrot.slane %v244, 1
      %v247 = vsel %vm227, %v242, %v246
      %v248 = vshrl.u32 %v223, 16
      %v250 = vor.u32 %v248, %v246
      %v252 = vshll.u32 %v224, 16
      %v254 = vrot.slane %v252, 1
      %v255 = vsel %vm227, %v250, %v254
      %v256 = vshrl.u32 %v224, 16
      %v258 = vor.u32 %v256, %v254
      %v260 = vshll.u32 %v225, 16
      %v262 = vrot.slane %v260, 1
      %v263 = vsel %vm227, %v258, %v262
      %v264 = vshrl.u32 %v225, 16
      %v266 = vor.u32 %v264, %v262
      %v268 = vshll.u32 %v226, 16
      %v270 = vrot.slane %v268, 1
      %v271 = vsel %vm227, %v266, %v270
      %v280 = vunpack.c.l.b16 %v191
      %v281 = vunpack.c.l.b16 %v192
      %v282 = vunpack.c.l.b16 %v193
      %v283 = vunpack.c.l.b16 %v194
      %v284 = vunpack.c.l.b16 %v195
      %v285 = vunpack.c.l.b16 %v196
      %v286 = vunpack.c.l.b16 %v197
      %v287 = vunpack.c.l.b16 %v198
      %v288 = vpack.c.b16 %v281, %v280
      %v289 = vpack.c.b16 %v283, %v282
      %v290 = vpack.c.b16 %v285, %v284
      %v291 = vpack.c.b16 %v287, %v286
      %vm296 = vcmask 523264
      %v298 = vsel %vm296, %v239, 0
      %v301 = vsel %vm296, %v247, 0
      %v304 = vsel %vm296, %v255, 0
      %v307 = vsel %vm296, %v263, 0
      %v310 = vsel %vm296, %v271, 0
      %312 = vmatpush.bf16.msra.mxu0 0
      %313 = vmatpush.bf16.msra.mxu0 0
      %314 = vmatpush.bf16.msra.mxu0 0
      %315 = vmatpush.bf16.msra.mxu0 0
      %316 = vmatpush.bf16.msra.mxu0 %v291
      %317 = vmatpush.bf16.msra.mxu0 %v290
      %318 = vmatpush.bf16.msra.mxu0 %v289
      %319 = vmatpush.bf16.msra.mxu0 %v288
      %320 = vmatmul.bf16.gmra.mxu0 %v298
      %v321 = vpop.f32.mrf.mxu0
      %v322 = vadd.f32 0.0, %v321
      %v323 = vpop.f32.mrf.mxu0
      %v324 = vadd.f32 0.0, %v323
      %325 = vmatmul.bf16.gmra.mxu0 %v301
      %v326 = vpop.f32.mrf.mxu0
      %v327 = vadd.f32 0.0, %v326
      %v328 = vpop.f32.mrf.mxu0
      %v329 = vadd.f32 0.0, %v328
      %330 = vmatmul.bf16.gmra.mxu0 %v304
      %v331 = vpop.f32.mrf.mxu0
      %v332 = vadd.f32 0.0, %v331
      %v333 = vpop.f32.mrf.mxu0
      %v334 = vadd.f32 0.0, %v333
      %335 = vmatmul.bf16.gmra.mxu0 %v307
      %v336 = vpop.f32.mrf.mxu0
      %v337 = vadd.f32 0.0, %v336
      %v338 = vpop.f32.mrf.mxu0
      %v339 = vadd.f32 0.0, %v338
      %340 = vmatmul.bf16.gmra.mxu0 %v310
      %v341 = vpop.f32.mrf.mxu0
      %v342 = vadd.f32 0.0, %v341
      %v343 = vpop.f32.mrf.mxu0
      %v344 = vadd.f32 0.0, %v343
      %345 = vdwg.mxu0
      %v354 = vunpack.c.l.b16 %v182
      %v355 = vunpack.c.l.b16 %v183
      %v356 = vunpack.c.l.b16 %v184
      %v357 = vunpack.c.l.b16 %v185
      %v358 = vunpack.c.l.b16 %v186
      %v359 = vunpack.c.l.b16 %v187
      %v360 = vunpack.c.l.b16 %v188
      %v361 = vunpack.c.l.b16 %v189
      %v362 = vpack.c.b16 %v355, %v354
      %v363 = vpack.c.b16 %v357, %v356
      %v364 = vpack.c.b16 %v359, %v358
      %v365 = vpack.c.b16 %v361, %v360
      %v370 = vsel %vm296, %v221, 0
      %v372 = vsel %vm296, %v222, 0
      %v374 = vsel %vm296, %v223, 0
      %v376 = vsel %vm296, %v224, 0
      %v378 = vsel %vm296, %v225, 0
      %380 = vmatpush.bf16.msra.mxu0 0
      %381 = vmatpush.bf16.msra.mxu0 0
      %382 = vmatpush.bf16.msra.mxu0 0
      %383 = vmatpush.bf16.msra.mxu0 0
      %384 = vmatpush.bf16.msra.mxu0 %v365
      %385 = vmatpush.bf16.msra.mxu0 %v364
      %386 = vmatpush.bf16.msra.mxu0 %v363
      %387 = vmatpush.bf16.msra.mxu0 %v362
      %388 = vmatmul.bf16.gmra.mxu0 %v370
      %v389 = vpop.f32.mrf.mxu0
      %v390 = vadd.f32 %v322, %v389
      %v391 = vpop.f32.mrf.mxu0
      %v392 = vadd.f32 %v324, %v391
      %393 = vmatmul.bf16.gmra.mxu0 %v372
      %v394 = vpop.f32.mrf.mxu0
      %v395 = vadd.f32 %v327, %v394
      %v396 = vpop.f32.mrf.mxu0
      %v397 = vadd.f32 %v329, %v396
      %398 = vmatmul.bf16.gmra.mxu0 %v374
      %v399 = vpop.f32.mrf.mxu0
      %v400 = vadd.f32 %v332, %v399
      %v401 = vpop.f32.mrf.mxu0
      %v402 = vadd.f32 %v334, %v401
      %403 = vmatmul.bf16.gmra.mxu0 %v376
      %v404 = vpop.f32.mrf.mxu0
      %v405 = vadd.f32 %v337, %v404
      %v406 = vpop.f32.mrf.mxu0
      %v407 = vadd.f32 %v339, %v406
      %408 = vmatmul.bf16.gmra.mxu0 %v378
      %v409 = vpop.f32.mrf.mxu0
      %v410 = vadd.f32 %v342, %v409
      %v411 = vpop.f32.mrf.mxu0
      %v412 = vadd.f32 %v344, %v411
      %413 = vdwg.mxu0
      %v414 = vld [vmem:[%s165] sm:$0xe]
      %v415 = vld [vmem:[%s1 + $0x40] sm:$0xf]
      %v416 = vld [vmem:[%s1 + $0x44] sm:$0xf]
      %v417 = vld [vmem:[%s1 + $0x48] sm:$0xf]
      %v418 = vld [vmem:[%s1 + $0x4c] sm:$0xf]
      %v419 = vld [vmem:[%s1 + $0x50] sm:$0xf]
      %v420 = vld [vmem:[%s1 + $0x54] sm:$0xf]
      %v421 = vld [vmem:[%s1 + $0x58] sm:$0xf]
      %v422 = vld [vmem:[%s1 + $0x5c] sm:$0xf]
      %v424 = vunpack.c.l.b16 %v414
      %v425 = vpack.c.b16 %v211, %v424
      %vm426 = vcmask 1046528
      %v427 = vrot.slane %v425, 1
      %v428 = vrot.slane %v222, 1
      %v429 = vsel %vm426, %v427, %v428
      %v430 = vrot.slane %v223, 1
      %v431 = vsel %vm426, %v428, %v430
      %v432 = vrot.slane %v224, 1
      %v433 = vsel %vm426, %v430, %v432
      %v434 = vrot.slane %v225, 1
      %v435 = vsel %vm426, %v432, %v434
      %v436 = vrot.slane %v226, 1
      %v437 = vsel %vm426, %v434, %v436
      %v446 = vunpack.c.l.b16 %v415
      %v447 = vunpack.c.l.b16 %v416
      %v448 = vunpack.c.l.b16 %v417
      %v449 = vunpack.c.l.b16 %v418
      %v450 = vunpack.c.l.b16 %v419
      %v451 = vunpack.c.l.b16 %v420
      %v452 = vunpack.c.l.b16 %v421
      %v453 = vunpack.c.l.b16 %v422
      %v454 = vpack.c.b16 %v447, %v446
      %v455 = vpack.c.b16 %v449, %v448
      %v456 = vpack.c.b16 %v451, %v450
      %v457 = vpack.c.b16 %v453, %v452
      %v463 = vsel %vm296, %v429, 0
      %v466 = vsel %vm296, %v431, 0
      %v469 = vsel %vm296, %v433, 0
      %v472 = vsel %vm296, %v435, 0
      %v475 = vsel %vm296, %v437, 0
      %477 = vmatpush.bf16.msra.mxu0 0
      %478 = vmatpush.bf16.msra.mxu0 0
      %479 = vmatpush.bf16.msra.mxu0 0
      %480 = vmatpush.bf16.msra.mxu0 0
      %481 = vmatpush.bf16.msra.mxu0 %v457
      %482 = vmatpush.bf16.msra.mxu0 %v456
      %483 = vmatpush.bf16.msra.mxu0 %v455
      %484 = vmatpush.bf16.msra.mxu0 %v454
      %485 = vmatmul.bf16.gmra.mxu0 %v463
      %v486 = vpop.f32.mrf.mxu0
      %v487 = vadd.f32 0.0, %v486
      %v488 = vpop.f32.mrf.mxu0
      %v489 = vadd.f32 0.0, %v488
      %490 = vmatmul.bf16.gmra.mxu0 %v466
      %v491 = vpop.f32.mrf.mxu0
      %v492 = vadd.f32 0.0, %v491
      %v493 = vpop.f32.mrf.mxu0
      %v494 = vadd.f32 0.0, %v493
      %495 = vmatmul.bf16.gmra.mxu0 %v469
      %v496 = vpop.f32.mrf.mxu0
      %v497 = vadd.f32 0.0, %v496
      %v498 = vpop.f32.mrf.mxu0
      %v499 = vadd.f32 0.0, %v498
      %500 = vmatmul.bf16.gmra.mxu0 %v472
      %v501 = vpop.f32.mrf.mxu0
      %v502 = vadd.f32 0.0, %v501
      %v503 = vpop.f32.mrf.mxu0
      %v504 = vadd.f32 0.0, %v503
      %505 = vmatmul.bf16.gmra.mxu0 %v475
      %v506 = vpop.f32.mrf.mxu0
      %v507 = vadd.f32 0.0, %v506
      %v508 = vpop.f32.mrf.mxu0
      %v509 = vadd.f32 0.0, %v508
      %510 = vdwg.mxu0
      %v511 = vadd.f32 %v390, %v487
      %v512 = vadd.f32 %v392, %v489
      %v513 = vadd.f32 %v395, %v492
      %v514 = vadd.f32 %v397, %v494
      %v515 = vadd.f32 %v400, %v497
      %v516 = vadd.f32 %v402, %v499
      %v517 = vadd.f32 %v405, %v502
      %v518 = vadd.f32 %v407, %v504
      %v519 = vadd.f32 %v410, %v507
      %v520 = vadd.f32 %v412, %v509
      %v521 = vld [vmem:[%s165 + $0x4] sm:$0xe]
      %v522 = vld [vmem:[%s165 + $0x8] sm:$0xf]
      %v523 = vld [vmem:[%s165 + $0xc] sm:$0xf]
      %v524 = vld [vmem:[%s165 + $0x10] sm:$0xf]
      %v525 = vld [vmem:[%s165 + $0x14] sm:$0xf]
      %v526 = vld [vmem:[%s165 + $0x18] sm:$0xf]
      %v527 = vld [vmem:[%s165 + $0x1c] sm:$0xf]
      %v528 = vld [vmem:[%s165 + $0x20] sm:$0xf]
      %v529 = vld [vmem:[%s165 + $0x24] sm:$0xf]
      %v530 = vld [vmem:[%s165 + $0x28] sm:$0xf]
      %v531 = vld [vmem:[%s165 + $0x2c] sm:$0x1]
      %v532 = vld [vmem:[%s1 + $0x60] sm:$0xf]
      %v533 = vld [vmem:[%s1 + $0x64] sm:$0xf]
      %v534 = vld [vmem:[%s1 + $0x68] sm:$0xf]
      %v535 = vld [vmem:[%s1 + $0x6c] sm:$0xf]
      %v536 = vld [vmem:[%s1 + $0x70] sm:$0xf]
      %v537 = vld [vmem:[%s1 + $0x74] sm:$0xf]
      %v538 = vld [vmem:[%s1 + $0x78] sm:$0xf]
      %v539 = vld [vmem:[%s1 + $0x7c] sm:$0xf]
      %v551 = vunpack.c.l.b16 %v521
      %v552 = vunpack.c.l.b16 %v522
      %v553 = vunpack.c.l.b16 %v523
      %v554 = vunpack.c.l.b16 %v524
      %v555 = vunpack.c.l.b16 %v525
      %v556 = vunpack.c.l.b16 %v526
      %v557 = vunpack.c.l.b16 %v527
      %v558 = vunpack.c.l.b16 %v528
      %v559 = vunpack.c.l.b16 %v529
      %v560 = vunpack.c.l.b16 %v530
      %v561 = vunpack.c.l.b16 %v531
      %v562 = vpack.c.b16 %v552, %v551
      %v563 = vpack.c.b16 %v554, %v553
      %v564 = vpack.c.b16 %v556, %v555
      %v565 = vpack.c.b16 %v558, %v557
      %v566 = vpack.c.b16 %v560, %v559
      %v567 = vpack.c.b16 %v561, %v561
      %v568 = vrot.slane %v562, 1
      %v569 = vrot.slane %v563, 1
      %v570 = vsel %vm426, %v568, %v569
      %v571 = vrot.slane %v564, 1
      %v572 = vsel %vm426, %v569, %v571
      %v573 = vrot.slane %v565, 1
      %v574 = vsel %vm426, %v571, %v573
      %v575 = vrot.slane %v566, 1
      %v576 = vsel %vm426, %v573, %v575
      %v577 = vrot.slane %v567, 1
      %v578 = vsel %vm426, %v575, %v577
      %v587 = vunpack.c.l.b16 %v532
      %v588 = vunpack.c.l.b16 %v533
      %v589 = vunpack.c.l.b16 %v534
      %v590 = vunpack.c.l.b16 %v535
      %v591 = vunpack.c.l.b16 %v536
      %v592 = vunpack.c.l.b16 %v537
      %v593 = vunpack.c.l.b16 %v538
      %v594 = vunpack.c.l.b16 %v539
      %v595 = vpack.c.b16 %v588, %v587
      %v596 = vpack.c.b16 %v590, %v589
      %v597 = vpack.c.b16 %v592, %v591
      %v598 = vpack.c.b16 %v594, %v593
      %v604 = vsel %vm296, %v570, 0
      %v607 = vsel %vm296, %v572, 0
      %v610 = vsel %vm296, %v574, 0
      %v613 = vsel %vm296, %v576, 0
      %v616 = vsel %vm296, %v578, 0
      %618 = vmatpush.bf16.msra.mxu0 0
      %619 = vmatpush.bf16.msra.mxu0 0
      %620 = vmatpush.bf16.msra.mxu0 0
      %621 = vmatpush.bf16.msra.mxu0 0
      %622 = vmatpush.bf16.msra.mxu0 %v598
      %623 = vmatpush.bf16.msra.mxu0 %v597
      %624 = vmatpush.bf16.msra.mxu0 %v596
      %625 = vmatpush.bf16.msra.mxu0 %v595
      %626 = vmatmul.bf16.gmra.mxu0 %v604
      %v627 = vpop.f32.mrf.mxu0
      %v628 = vadd.f32 0.0, %v627
      %v629 = vpop.f32.mrf.mxu0
      %v630 = vadd.f32 0.0, %v629
      %631 = vmatmul.bf16.gmra.mxu0 %v607
      %v632 = vpop.f32.mrf.mxu0
      %v633 = vadd.f32 0.0, %v632
      %v634 = vpop.f32.mrf.mxu0
      %v635 = vadd.f32 0.0, %v634
      %636 = vmatmul.bf16.gmra.mxu0 %v610
      %v637 = vpop.f32.mrf.mxu0
      %v638 = vadd.f32 0.0, %v637
      %v639 = vpop.f32.mrf.mxu0
      %v640 = vadd.f32 0.0, %v639
      %641 = vmatmul.bf16.gmra.mxu0 %v613
      %v642 = vpop.f32.mrf.mxu0
      %v643 = vadd.f32 0.0, %v642
      %v644 = vpop.f32.mrf.mxu0
      %v645 = vadd.f32 0.0, %v644
      %646 = vmatmul.bf16.gmra.mxu0 %v616
      %v647 = vpop.f32.mrf.mxu0
      %v648 = vadd.f32 0.0, %v647
      %v649 = vpop.f32.mrf.mxu0
      %v650 = vadd.f32 0.0, %v649
      %651 = vdwg.mxu0
      %v652 = vadd.f32 %v511, %v628
      %v653 = vadd.f32 %v512, %v630
      %v654 = vadd.f32 %v513, %v633
      %v655 = vadd.f32 %v514, %v635
      %v656 = vadd.f32 %v515, %v638
      %v657 = vadd.f32 %v516, %v640
      %v658 = vadd.f32 %v517, %v643
      %v659 = vadd.f32 %v518, %v645
      %v660 = vadd.f32 %v519, %v648
      %v661 = vadd.f32 %v520, %v650
      %v662 = vld [vmem:[%s165 + $0x2c] sm:$0x3]
      %v663 = vld [vmem:[%s1 + $0x80] sm:$0xf]
      %v664 = vld [vmem:[%s1 + $0x84] sm:$0xf]
      %v665 = vld [vmem:[%s1 + $0x88] sm:$0xf]
      %v666 = vld [vmem:[%s1 + $0x8c] sm:$0xf]
      %v667 = vld [vmem:[%s1 + $0x90] sm:$0xf]
      %v668 = vld [vmem:[%s1 + $0x94] sm:$0xf]
      %v669 = vld [vmem:[%s1 + $0x98] sm:$0xf]
      %v670 = vld [vmem:[%s1 + $0x9c] sm:$0xf]
      %v672 = vunpack.c.l.b16 %v662
      %v673 = vpack.c.b16 %v672, %v672
      %vm674 = vsmask.f32 6400
      %v676 = vshrl.u32 %v562, 16
      %v678 = vrot.slane %v676, 1
      %v679 = vshll.u32 %v562, 16
      %v681 = vrot.slane %v679, 2
      %v682 = vor.u32 %v678, %v681
      %v684 = vshrl.u32 %v563, 16
      %v686 = vrot.slane %v684, 1
      %v687 = vshll.u32 %v563, 16
      %v689 = vrot.slane %v687, 2
      %v690 = vor.u32 %v686, %v689
      %v691 = vsel %vm674, %v682, %v690
      %v693 = vshrl.u32 %v564, 16
      %v695 = vrot.slane %v693, 1
      %v696 = vshll.u32 %v564, 16
      %v698 = vrot.slane %v696, 2
      %v699 = vor.u32 %v695, %v698
      %v700 = vsel %vm674, %v690, %v699
      %v702 = vshrl.u32 %v565, 16
      %v704 = vrot.slane %v702, 1
      %v705 = vshll.u32 %v565, 16
      %v707 = vrot.slane %v705, 2
      %v708 = vor.u32 %v704, %v707
      %v709 = vsel %vm674, %v699, %v708
      %v711 = vshrl.u32 %v566, 16
      %v713 = vrot.slane %v711, 1
      %v714 = vshll.u32 %v566, 16
      %v716 = vrot.slane %v714, 2
      %v717 = vor.u32 %v713, %v716
      %v718 = vsel %vm674, %v708, %v717
      %v720 = vshrl.u32 %v673, 16
      %v722 = vrot.slane %v720, 1
      %v723 = vshll.u32 %v673, 16
      %v725 = vrot.slane %v723, 2
      %v726 = vor.u32 %v722, %v725
      %v727 = vsel %vm674, %v717, %v726
      %v736 = vunpack.c.l.b16 %v663
      %v737 = vunpack.c.l.b16 %v664
      %v738 = vunpack.c.l.b16 %v665
      %v739 = vunpack.c.l.b16 %v666
      %v740 = vunpack.c.l.b16 %v667
      %v741 = vunpack.c.l.b16 %v668
      %v742 = vunpack.c.l.b16 %v669
      %v743 = vunpack.c.l.b16 %v670
      %v744 = vpack.c.b16 %v737, %v736
      %v745 = vpack.c.b16 %v739, %v738
      %v746 = vpack.c.b16 %v741, %v740
      %v747 = vpack.c.b16 %v743, %v742
      %v753 = vsel %vm296, %v691, 0
      %v756 = vsel %vm296, %v700, 0
      %v759 = vsel %vm296, %v709, 0
      %v762 = vsel %vm296, %v718, 0
      %v765 = vsel %vm296, %v727, 0
      %767 = vmatpush.bf16.msra.mxu0 0
      %768 = vmatpush.bf16.msra.mxu0 0
      %769 = vmatpush.bf16.msra.mxu0 0
      %770 = vmatpush.bf16.msra.mxu0 0
      %771 = vmatpush.bf16.msra.mxu0 %v747
      %772 = vmatpush.bf16.msra.mxu0 %v746
      %773 = vmatpush.bf16.msra.mxu0 %v745
      %774 = vmatpush.bf16.msra.mxu0 %v744
      %775 = vmatmul.bf16.gmra.mxu0 %v753
      %v776 = vpop.f32.mrf.mxu0
      %v777 = vadd.f32 0.0, %v776
      %v778 = vpop.f32.mrf.mxu0
      %v779 = vadd.f32 0.0, %v778
      %780 = vmatmul.bf16.gmra.mxu0 %v756
      %v781 = vpop.f32.mrf.mxu0
      %v782 = vadd.f32 0.0, %v781
      %v783 = vpop.f32.mrf.mxu0
      %v784 = vadd.f32 0.0, %v783
      %785 = vmatmul.bf16.gmra.mxu0 %v759
      %v786 = vpop.f32.mrf.mxu0
      %v787 = vadd.f32 0.0, %v786
      %v788 = vpop.f32.mrf.mxu0
      %v789 = vadd.f32 0.0, %v788
      %790 = vmatmul.bf16.gmra.mxu0 %v762
      %v791 = vpop.f32.mrf.mxu0
      %v792 = vadd.f32 0.0, %v791
      %v793 = vpop.f32.mrf.mxu0
      %v794 = vadd.f32 0.0, %v793
      %795 = vmatmul.bf16.gmra.mxu0 %v765
      %v796 = vpop.f32.mrf.mxu0
      %v797 = vadd.f32 0.0, %v796
      %v798 = vpop.f32.mrf.mxu0
      %v799 = vadd.f32 0.0, %v798
      %800 = vdwg.mxu0
      %v801 = vadd.f32 %v652, %v777
      %v802 = vadd.f32 %v653, %v779
      %v803 = vadd.f32 %v654, %v782
      %v804 = vadd.f32 %v655, %v784
      %v805 = vadd.f32 %v656, %v787
      %v806 = vadd.f32 %v657, %v789
      %v807 = vadd.f32 %v658, %v792
      %v808 = vadd.f32 %v659, %v794
      %v809 = vadd.f32 %v660, %v797
      %v810 = vadd.f32 %v661, %v799
      %v811 = vld [vmem:[%s165 + $0x4] sm:$0xc]
      %v812 = vld [vmem:[%s1 + $0xa0] sm:$0xf]
      %v813 = vld [vmem:[%s1 + $0xa4] sm:$0xf]
      %v814 = vld [vmem:[%s1 + $0xa8] sm:$0xf]
      %v815 = vld [vmem:[%s1 + $0xac] sm:$0xf]
      %v816 = vld [vmem:[%s1 + $0xb0] sm:$0xf]
      %v817 = vld [vmem:[%s1 + $0xb4] sm:$0xf]
      %v818 = vld [vmem:[%s1 + $0xb8] sm:$0xf]
      %v819 = vld [vmem:[%s1 + $0xbc] sm:$0xf]
      %v821 = vunpack.c.l.b16 %v811
      %v822 = vpack.c.b16 %v552, %v821
      %vm823 = vcmask 1045504
      %v824 = vrot.slane %v822, 2
      %v825 = vrot.slane %v563, 2
      %v826 = vsel %vm823, %v824, %v825
      %v827 = vrot.slane %v564, 2
      %v828 = vsel %vm823, %v825, %v827
      %v829 = vrot.slane %v565, 2
      %v830 = vsel %vm823, %v827, %v829
      %v831 = vrot.slane %v566, 2
      %v832 = vsel %vm823, %v829, %v831
      %v833 = vrot.slane %v673, 2
      %v834 = vsel %vm823, %v831, %v833
      %v843 = vunpack.c.l.b16 %v812
      %v844 = vunpack.c.l.b16 %v813
      %v845 = vunpack.c.l.b16 %v814
      %v846 = vunpack.c.l.b16 %v815
      %v847 = vunpack.c.l.b16 %v816
      %v848 = vunpack.c.l.b16 %v817
      %v849 = vunpack.c.l.b16 %v818
      %v850 = vunpack.c.l.b16 %v819
      %v851 = vpack.c.b16 %v844, %v843
      %v852 = vpack.c.b16 %v846, %v845
      %v853 = vpack.c.b16 %v848, %v847
      %v854 = vpack.c.b16 %v850, %v849
      %v860 = vsel %vm296, %v826, 0
      %v863 = vsel %vm296, %v828, 0
      %v866 = vsel %vm296, %v830, 0
      %v869 = vsel %vm296, %v832, 0
      %v872 = vsel %vm296, %v834, 0
      %874 = vmatpush.bf16.msra.mxu0 0
      %875 = vmatpush.bf16.msra.mxu0 0
      %876 = vmatpush.bf16.msra.mxu0 0
      %877 = vmatpush.bf16.msra.mxu0 0
      %878 = vmatpush.bf16.msra.mxu0 %v854
      %879 = vmatpush.bf16.msra.mxu0 %v853
      %880 = vmatpush.bf16.msra.mxu0 %v852
      %881 = vmatpush.bf16.msra.mxu0 %v851
      %882 = vmatmul.bf16.gmra.mxu0 %v860
      %v883 = vpop.f32.mrf.mxu0
      %v884 = vadd.f32 0.0, %v883
      %v885 = vpop.f32.mrf.mxu0
      %v886 = vadd.f32 0.0, %v885
      %887 = vmatmul.bf16.gmra.mxu0 %v863
      %v888 = vpop.f32.mrf.mxu0
      %v889 = vadd.f32 0.0, %v888
      %v890 = vpop.f32.mrf.mxu0
      %v891 = vadd.f32 0.0, %v890
      %892 = vmatmul.bf16.gmra.mxu0 %v866
      %v893 = vpop.f32.mrf.mxu0
      %v894 = vadd.f32 0.0, %v893
      %v895 = vpop.f32.mrf.mxu0
      %v896 = vadd.f32 0.0, %v895
      %897 = vmatmul.bf16.gmra.mxu0 %v869
      %v898 = vpop.f32.mrf.mxu0
      %v899 = vadd.f32 0.0, %v898
      %v900 = vpop.f32.mrf.mxu0
      %v901 = vadd.f32 0.0, %v900
      %902 = vmatmul.bf16.gmra.mxu0 %v872
      %v903 = vpop.f32.mrf.mxu0
      %v904 = vadd.f32 0.0, %v903
      %v905 = vpop.f32.mrf.mxu0
      %v906 = vadd.f32 0.0, %v905
      %907 = vdwg.mxu0
      %v908 = vadd.f32 %v801, %v884
      %v909 = vadd.f32 %v802, %v886
      %v910 = vadd.f32 %v803, %v889
      %v911 = vadd.f32 %v804, %v891
      %v912 = vadd.f32 %v805, %v894
      %v913 = vadd.f32 %v806, %v896
      %v914 = vadd.f32 %v807, %v899
      %v915 = vadd.f32 %v808, %v901
      %v916 = vadd.f32 %v809, %v904
      %v917 = vadd.f32 %v810, %v906
      %v918 = vld [vmem:[%s165 + $0x8] sm:$0xc]
      %v919 = vld [vmem:[%s165 + $0xc] sm:$0xf]
      %v920 = vld [vmem:[%s165 + $0x10] sm:$0xf]
      %v921 = vld [vmem:[%s165 + $0x14] sm:$0xf]
      %v922 = vld [vmem:[%s165 + $0x18] sm:$0xf]
      %v923 = vld [vmem:[%s165 + $0x1c] sm:$0xf]
      %v924 = vld [vmem:[%s165 + $0x20] sm:$0xf]
      %v925 = vld [vmem:[%s165 + $0x24] sm:$0xf]
      %v926 = vld [vmem:[%s165 + $0x28] sm:$0xf]
      %v927 = vld [vmem:[%s165 + $0x2c] sm:$0xf]
      %v928 = vld [vmem:[%s165 + $0x30] sm:$0x3]
      %v929 = vld [vmem:[%s1 + $0xc0] sm:$0xf]
      %v930 = vld [vmem:[%s1 + $0xc4] sm:$0xf]
      %v931 = vld [vmem:[%s1 + $0xc8] sm:$0xf]
      %v932 = vld [vmem:[%s1 + $0xcc] sm:$0xf]
      %v933 = vld [vmem:[%s1 + $0xd0] sm:$0xf]
      %v934 = vld [vmem:[%s1 + $0xd4] sm:$0xf]
      %v935 = vld [vmem:[%s1 + $0xd8] sm:$0xf]
      %v936 = vld [vmem:[%s1 + $0xdc] sm:$0xf]
      %v948 = vunpack.c.l.b16 %v918
      %v949 = vunpack.c.l.b16 %v919
      %v950 = vunpack.c.l.b16 %v920
      %v951 = vunpack.c.l.b16 %v921
      %v952 = vunpack.c.l.b16 %v922
      %v953 = vunpack.c.l.b16 %v923
      %v954 = vunpack.c.l.b16 %v924
      %v955 = vunpack.c.l.b16 %v925
      %v956 = vunpack.c.l.b16 %v926
      %v957 = vunpack.c.l.b16 %v927
      %v958 = vunpack.c.l.b16 %v928
      %v959 = vpack.c.b16 %v949, %v948
      %v960 = vpack.c.b16 %v951, %v950
      %v961 = vpack.c.b16 %v953, %v952
      %v962 = vpack.c.b16 %v955, %v954
      %v963 = vpack.c.b16 %v957, %v956
      %v964 = vpack.c.b16 %v958, %v958
      %v965 = vrot.slane %v959, 2
      %v966 = vrot.slane %v960, 2
      %v967 = vsel %vm823, %v965, %v966
      %v968 = vrot.slane %v961, 2
      %v969 = vsel %vm823, %v966, %v968
      %v970 = vrot.slane %v962, 2
      %v971 = vsel %vm823, %v968, %v970
      %v972 = vrot.slane %v963, 2
      %v973 = vsel %vm823, %v970, %v972
      %v974 = vrot.slane %v964, 2
      %v975 = vsel %vm823, %v972, %v974
      %v984 = vunpack.c.l.b16 %v929
      %v985 = vunpack.c.l.b16 %v930
      %v986 = vunpack.c.l.b16 %v931
      %v987 = vunpack.c.l.b16 %v932
      %v988 = vunpack.c.l.b16 %v933
      %v989 = vunpack.c.l.b16 %v934
      %v990 = vunpack.c.l.b16 %v935
      %v991 = vunpack.c.l.b16 %v936
      %v992 = vpack.c.b16 %v985, %v984
      %v993 = vpack.c.b16 %v987, %v986
      %v994 = vpack.c.b16 %v989, %v988
      %v995 = vpack.c.b16 %v991, %v990
      %v1001 = vsel %vm296, %v967, 0
      %v1004 = vsel %vm296, %v969, 0
      %v1007 = vsel %vm296, %v971, 0
      %v1010 = vsel %vm296, %v973, 0
      %v1013 = vsel %vm296, %v975, 0
      %1015 = vmatpush.bf16.msra.mxu0 0
      %1016 = vmatpush.bf16.msra.mxu0 0
      %1017 = vmatpush.bf16.msra.mxu0 0
      %1018 = vmatpush.bf16.msra.mxu0 0
      %1019 = vmatpush.bf16.msra.mxu0 %v995
      %1020 = vmatpush.bf16.msra.mxu0 %v994
      %1021 = vmatpush.bf16.msra.mxu0 %v993
      %1022 = vmatpush.bf16.msra.mxu0 %v992
      %1023 = vmatmul.bf16.gmra.mxu0 %v1001
      %v1024 = vpop.f32.mrf.mxu0
      %v1025 = vadd.f32 0.0, %v1024
      %v1026 = vpop.f32.mrf.mxu0
      %v1027 = vadd.f32 0.0, %v1026
      %1028 = vmatmul.bf16.gmra.mxu0 %v1004
      %v1029 = vpop.f32.mrf.mxu0
      %v1030 = vadd.f32 0.0, %v1029
      %v1031 = vpop.f32.mrf.mxu0
      %v1032 = vadd.f32 0.0, %v1031
      %1033 = vmatmul.bf16.gmra.mxu0 %v1007
      %v1034 = vpop.f32.mrf.mxu0
      %v1035 = vadd.f32 0.0, %v1034
      %v1036 = vpop.f32.mrf.mxu0
      %v1037 = vadd.f32 0.0, %v1036
      %1038 = vmatmul.bf16.gmra.mxu0 %v1010
      %v1039 = vpop.f32.mrf.mxu0
      %v1040 = vadd.f32 0.0, %v1039
      %v1041 = vpop.f32.mrf.mxu0
      %v1042 = vadd.f32 0.0, %v1041
      %1043 = vmatmul.bf16.gmra.mxu0 %v1013
      %v1044 = vpop.f32.mrf.mxu0
      %v1045 = vadd.f32 0.0, %v1044
      %v1046 = vpop.f32.mrf.mxu0
      %v1047 = vadd.f32 0.0, %v1046
      %1048 = vdwg.mxu0
      %v1049 = vadd.f32 %v908, %v1025
      %v1050 = vadd.f32 %v909, %v1027
      %v1051 = vadd.f32 %v910, %v1030
      %v1052 = vadd.f32 %v911, %v1032
      %v1053 = vadd.f32 %v912, %v1035
      %v1054 = vadd.f32 %v913, %v1037
      %v1055 = vadd.f32 %v914, %v1040
      %v1056 = vadd.f32 %v915, %v1042
      %v1057 = vadd.f32 %v916, %v1045
      %v1058 = vadd.f32 %v917, %v1047
      %v1059 = vld [vmem:[%s165 + $0x30] sm:$0x7]
      %v1060 = vld [vmem:[%s1 + $0xe0] sm:$0xf]
      %v1061 = vld [vmem:[%s1 + $0xe4] sm:$0xf]
      %v1062 = vld [vmem:[%s1 + $0xe8] sm:$0xf]
      %v1063 = vld [vmem:[%s1 + $0xec] sm:$0xf]
      %v1064 = vld [vmem:[%s1 + $0xf0] sm:$0xf]
      %v1065 = vld [vmem:[%s1 + $0xf4] sm:$0xf]
      %v1066 = vld [vmem:[%s1 + $0xf8] sm:$0xf]
      %v1067 = vld [vmem:[%s1 + $0xfc] sm:$0xf]
      %v1069 = vunpack.c.l.b16 %v1059
      %v1070 = vpack.c.b16 %v1069, %v1069
      %vm1071 = vsmask.f32 5376
      %v1073 = vshrl.u32 %v959, 16
      %v1075 = vrot.slane %v1073, 2
      %v1076 = vshll.u32 %v959, 16
      %v1078 = vrot.slane %v1076, 3
      %v1079 = vor.u32 %v1075, %v1078
      %v1081 = vshrl.u32 %v960, 16
      %v1083 = vrot.slane %v1081, 2
      %v1084 = vshll.u32 %v960, 16
      %v1086 = vrot.slane %v1084, 3
      %v1087 = vor.u32 %v1083, %v1086
      %v1088 = vsel %vm1071, %v1079, %v1087
      %v1090 = vshrl.u32 %v961, 16
      %v1092 = vrot.slane %v1090, 2
      %v1093 = vshll.u32 %v961, 16
      %v1095 = vrot.slane %v1093, 3
      %v1096 = vor.u32 %v1092, %v1095
      %v1097 = vsel %vm1071, %v1087, %v1096
      %v1099 = vshrl.u32 %v962, 16
      %v1101 = vrot.slane %v1099, 2
      %v1102 = vshll.u32 %v962, 16
      %v1104 = vrot.slane %v1102, 3
      %v1105 = vor.u32 %v1101, %v1104
      %v1106 = vsel %vm1071, %v1096, %v1105
      %v1108 = vshrl.u32 %v963, 16
      %v1110 = vrot.slane %v1108, 2
      %v1111 = vshll.u32 %v963, 16
      %v1113 = vrot.slane %v1111, 3
      %v1114 = vor.u32 %v1110, %v1113
      %v1115 = vsel %vm1071, %v1105, %v1114
      %v1117 = vshrl.u32 %v1070, 16
      %v1119 = vrot.slane %v1117, 2
      %v1120 = vshll.u32 %v1070, 16
      %v1122 = vrot.slane %v1120, 3
      %v1123 = vor.u32 %v1119, %v1122
      %v1124 = vsel %vm1071, %v1114, %v1123
      %v1133 = vunpack.c.l.b16 %v1060
      %v1134 = vunpack.c.l.b16 %v1061
      %v1135 = vunpack.c.l.b16 %v1062
      %v1136 = vunpack.c.l.b16 %v1063
      %v1137 = vunpack.c.l.b16 %v1064
      %v1138 = vunpack.c.l.b16 %v1065
      %v1139 = vunpack.c.l.b16 %v1066
      %v1140 = vunpack.c.l.b16 %v1067
      %v1141 = vpack.c.b16 %v1134, %v1133
      %v1142 = vpack.c.b16 %v1136, %v1135
      %v1143 = vpack.c.b16 %v1138, %v1137
      %v1144 = vpack.c.b16 %v1140, %v1139
      %v1150 = vsel %vm296, %v1088, 0
      %v1153 = vsel %vm296, %v1097, 0
      %v1156 = vsel %vm296, %v1106, 0
      %v1159 = vsel %vm296, %v1115, 0
      %v1162 = vsel %vm296, %v1124, 0
      %1164 = vmatpush.bf16.msra.mxu0 0
      %1165 = vmatpush.bf16.msra.mxu0 0
      %1166 = vmatpush.bf16.msra.mxu0 0
      %1167 = vmatpush.bf16.msra.mxu0 0
      %1168 = vmatpush.bf16.msra.mxu0 %v1144
      %1169 = vmatpush.bf16.msra.mxu0 %v1143
      %1170 = vmatpush.bf16.msra.mxu0 %v1142
      %1171 = vmatpush.bf16.msra.mxu0 %v1141
      %1172 = vmatmul.bf16.gmra.mxu0 %v1150
      %v1173 = vpop.f32.mrf.mxu0
      %v1174 = vadd.f32 0.0, %v1173
      %v1175 = vpop.f32.mrf.mxu0
      %v1176 = vadd.f32 0.0, %v1175
      %1177 = vmatmul.bf16.gmra.mxu0 %v1153
      %v1178 = vpop.f32.mrf.mxu0
      %v1179 = vadd.f32 0.0, %v1178
      %v1180 = vpop.f32.mrf.mxu0
      %v1181 = vadd.f32 0.0, %v1180
      %1182 = vmatmul.bf16.gmra.mxu0 %v1156
      %v1183 = vpop.f32.mrf.mxu0
      %v1184 = vadd.f32 0.0, %v1183
      %v1185 = vpop.f32.mrf.mxu0
      %v1186 = vadd.f32 0.0, %v1185
      %1187 = vmatmul.bf16.gmra.mxu0 %v1159
      %v1188 = vpop.f32.mrf.mxu0
      %v1189 = vadd.f32 0.0, %v1188
      %v1190 = vpop.f32.mrf.mxu0
      %v1191 = vadd.f32 0.0, %v1190
      %1192 = vmatmul.bf16.gmra.mxu0 %v1162
      %v1193 = vpop.f32.mrf.mxu0
      %v1194 = vadd.f32 0.0, %v1193
      %v1195 = vpop.f32.mrf.mxu0
      %v1196 = vadd.f32 0.0, %v1195
      %1197 = vdwg.mxu0
      %v1198 = vadd.f32 %v1049, %v1174
      %v1199 = vadd.f32 %v1050, %v1176
      %v1200 = vadd.f32 %v1051, %v1179
      %v1201 = vadd.f32 %v1052, %v1181
      %v1202 = vadd.f32 %v1053, %v1184
      %v1203 = vadd.f32 %v1054, %v1186
      %v1204 = vadd.f32 %v1055, %v1189
      %v1205 = vadd.f32 %v1056, %v1191
      %v1206 = vadd.f32 %v1057, %v1194
      %v1207 = vadd.f32 %v1058, %v1196
      %v1208 = vld [vmem:[%s165 + $0x8] sm:$0x8]
      %v1209 = vld [vmem:[%s1 + $0x100] sm:$0xf]
      %v1210 = vld [vmem:[%s1 + $0x104] sm:$0xf]
      %v1211 = vld [vmem:[%s1 + $0x108] sm:$0xf]
      %v1212 = vld [vmem:[%s1 + $0x10c] sm:$0xf]
      %v1213 = vld [vmem:[%s1 + $0x110] sm:$0xf]
      %v1214 = vld [vmem:[%s1 + $0x114] sm:$0xf]
      %v1215 = vld [vmem:[%s1 + $0x118] sm:$0xf]
      %v1216 = vld [vmem:[%s1 + $0x11c] sm:$0xf]
      %v1218 = vunpack.c.l.b16 %v1208
      %v1219 = vpack.c.b16 %v949, %v1218
      %vm1220 = vcmask 1044480
      %v1221 = vrot.slane %v1219, 3
      %v1222 = vrot.slane %v960, 3
      %v1223 = vsel %vm1220, %v1221, %v1222
      %v1224 = vrot.slane %v961, 3
      %v1225 = vsel %vm1220, %v1222, %v1224
      %v1226 = vrot.slane %v962, 3
      %v1227 = vsel %vm1220, %v1224, %v1226
      %v1228 = vrot.slane %v963, 3
      %v1229 = vsel %vm1220, %v1226, %v1228
      %v1230 = vrot.slane %v1070, 3
      %v1231 = vsel %vm1220, %v1228, %v1230
      %v1240 = vunpack.c.l.b16 %v1209
      %v1241 = vunpack.c.l.b16 %v1210
      %v1242 = vunpack.c.l.b16 %v1211
      %v1243 = vunpack.c.l.b16 %v1212
      %v1244 = vunpack.c.l.b16 %v1213
      %v1245 = vunpack.c.l.b16 %v1214
      %v1246 = vunpack.c.l.b16 %v1215
      %v1247 = vunpack.c.l.b16 %v1216
      %v1248 = vpack.c.b16 %v1241, %v1240
      %v1249 = vpack.c.b16 %v1243, %v1242
      %v1250 = vpack.c.b16 %v1245, %v1244
      %v1251 = vpack.c.b16 %v1247, %v1246
      %v1257 = vsel %vm296, %v1223, 0
      %v1260 = vsel %vm296, %v1225, 0
      %v1263 = vsel %vm296, %v1227, 0
      %v1266 = vsel %vm296, %v1229, 0
      %v1269 = vsel %vm296, %v1231, 0
      %1271 = vmatpush.bf16.msra.mxu0 0
      %1272 = vmatpush.bf16.msra.mxu0 0
      %1273 = vmatpush.bf16.msra.mxu0 0
      %1274 = vmatpush.bf16.msra.mxu0 0
      %1275 = vmatpush.bf16.msra.mxu0 %v1251
      %1276 = vmatpush.bf16.msra.mxu0 %v1250
      %1277 = vmatpush.bf16.msra.mxu0 %v1249
      %1278 = vmatpush.bf16.msra.mxu0 %v1248
      %1279 = vmatmul.bf16.gmra.mxu0 %v1257
      %v1280 = vpop.f32.mrf.mxu0
      %v1281 = vadd.f32 0.0, %v1280
      %v1282 = vpop.f32.mrf.mxu0
      %v1283 = vadd.f32 0.0, %v1282
      %1284 = vmatmul.bf16.gmra.mxu0 %v1260
      %v1285 = vpop.f32.mrf.mxu0
      %v1286 = vadd.f32 0.0, %v1285
      %v1287 = vpop.f32.mrf.mxu0
      %v1288 = vadd.f32 0.0, %v1287
      %1289 = vmatmul.bf16.gmra.mxu0 %v1263
      %v1290 = vpop.f32.mrf.mxu0
      %v1291 = vadd.f32 0.0, %v1290
      %v1292 = vpop.f32.mrf.mxu0
      %v1293 = vadd.f32 0.0, %v1292
      %1294 = vmatmul.bf16.gmra.mxu0 %v1266
      %v1295 = vpop.f32.mrf.mxu0
      %v1296 = vadd.f32 0.0, %v1295
      %v1297 = vpop.f32.mrf.mxu0
      %v1298 = vadd.f32 0.0, %v1297
      %1299 = vmatmul.bf16.gmra.mxu0 %v1269
      %v1300 = vpop.f32.mrf.mxu0
      %v1301 = vadd.f32 0.0, %v1300
      %v1302 = vpop.f32.mrf.mxu0
      %v1303 = vadd.f32 0.0, %v1302
      %1304 = vdwg.mxu0
      %v1305 = vadd.f32 %v1198, %v1281
      %v1306 = vadd.f32 %v1199, %v1283
      %v1307 = vadd.f32 %v1200, %v1286
      %v1308 = vadd.f32 %v1201, %v1288
      %v1309 = vadd.f32 %v1202, %v1291
      %v1310 = vadd.f32 %v1203, %v1293
      %v1311 = vadd.f32 %v1204, %v1296
      %v1312 = vadd.f32 %v1205, %v1298
      %v1313 = vadd.f32 %v1206, %v1301
      %v1314 = vadd.f32 %v1207, %v1303
      %v1315 = vld [vmem:[%s2] sm:$0x1]
      %v1317 = vperm.slane %v1315, 0
      %v1319 = vadd.f32 %v1305, %v1317
      %v1320 = vadd.f32 %v1306, %v1317
      %v1321 = vadd.f32 %v1307, %v1317
      %v1322 = vadd.f32 %v1308, %v1317
      %v1323 = vadd.f32 %v1309, %v1317
      %v1324 = vadd.f32 %v1310, %v1317
      %v1325 = vadd.f32 %v1311, %v1317
      %v1326 = vadd.f32 %v1312, %v1317
      %v1327 = vadd.f32 %v1313, %v1317
      %v1328 = vadd.f32 %v1314, %v1317
      %v1329 = vtanh.pop %v1319
      %v1330 = vtanh.pop %v1320
      %v1331 = vtanh.pop %v1321
      %v1332 = vtanh.pop %v1322
      %v1333 = vtanh.pop %v1323
      %v1334 = vtanh.pop %v1324
      %v1335 = vtanh.pop %v1325
      %v1336 = vtanh.pop %v1326
      %v1337 = vtanh.pop %v1327
      %v1338 = vtanh.pop %v1328
      %v1339 = vpack.c.bf16 %v1329, %v1329
      %v1340 = vpack.c.bf16 %v1330, %v1330
      %v1341 = vpack.c.bf16 %v1331, %v1331
      %v1342 = vpack.c.bf16 %v1332, %v1332
      %v1343 = vpack.c.bf16 %v1333, %v1333
      %v1344 = vpack.c.bf16 %v1334, %v1334
      %v1345 = vpack.c.bf16 %v1335, %v1335
      %v1346 = vpack.c.bf16 %v1336, %v1336
      %v1347 = vpack.c.bf16 %v1337, %v1337
      %v1348 = vpack.c.bf16 %v1338, %v1338
      %1349 = vst [vmem:[%s170] sm:$0xf] %v1339
      %1350 = vst [vmem:[%s170 + $0x4] sm:$0xf] %v1340
      %1351 = vst [vmem:[%s170 + $0x8] sm:$0xf] %v1341
      %1352 = vst [vmem:[%s170 + $0xc] sm:$0xf] %v1342
      %1353 = vst [vmem:[%s170 + $0x10] sm:$0xf] %v1343
      %1354 = vst [vmem:[%s170 + $0x14] sm:$0xf] %v1344
      %1355 = vst [vmem:[%s170 + $0x18] sm:$0xf] %v1345
      %1356 = vst [vmem:[%s170 + $0x1c] sm:$0xf] %v1346
      %1357 = vst [vmem:[%s170 + $0x20] sm:$0xf] %v1347
      %1358 = vst [vmem:[%s170 + $0x24] sm:$0xf] %v1348
      %p1359 = scmp.lt.s32.totalorder %s14, 1
      %s1360 = scalar_select %p1359, %s14, 1
      %s1361 = smul.addr %s1360, 10
      %s1362 = smul.addr %s1361, 4
      %s1363 = scalar_lea.vmem %s3, %s1362
      // Predicated region
      $region33: #{unet_generator_forward.9} parent=31 // pred_check
        %p1364 = pneg %p100
      $region34: #{unet_generator_forward.9} parent=31 // pred_check_branch
        %1366 = sbr.rel (%p1364) target = $region36
      $region35: #{unet_generator_forward.9} parent=31 // pred_region
        _
      $region36: #{unet_generator_forward.9} parent=31 // pred_fallthru
        _
    $region32: #{unet_generator_forward.9} parent=5 // pred_fallthru
      _
    %p1367 = scmp.le.s32.totalorder 2, %s9
    // Predicated region
    $region37: #{unet_generator_forward.9} parent=5 // pred_check
      %p1368 = pneg %p1367
    $region38: #{unet_generator_forward.9} parent=5 // pred_check_branch
      %1370 = sbr.rel (%p1368) target = $region40
    $region39: #{unet_generator_forward.9} parent=5 // pred_region
      %s1371 = ssub.s32 %s9, 2
      // Predicated region
      $region41: #{unet_generator_forward.9} parent=39 // pred_check
        %p1372 = pneg %p106
      $region42: #{unet_generator_forward.9} parent=39 // pred_check_branch
        %1374 = sbr.rel (%p1372) target = $region44
      $region43: #{unet_generator_forward.9} parent=39 // pred_region
        %p1375 = scmp.lt.s32.totalorder %s15, 1
        %s1376 = scalar_select %p1375, %s15, 1
        %s1377 = smul.addr %s1376, 10
        %s1378 = smul.addr %s1377, 4
        %s1379 = scalar_lea.vmem %s3, %s1378
      $region44: #{unet_generator_forward.9} parent=39 // pred_fallthru
        _
    $region40: #{unet_generator_forward.9} parent=5 // pred_fallthru
      _
  $region6: #{unet_generator_forward.9} parent=0 // loop_footer
    %s13 = sadd.s32 1, %s9
  $region7: #{unet_generator_forward.9} parent=0 // loop_footer_branch
    %8 = sbr.rel target = $region3
  $region8: #{unet_generator_forward.9} parent=0 // loop_exit
    _

</llo_original>
